<compile_context>
chip_gen: v7x
topology: tpu7x:2x2x1
jax: 0.10.0
libtpu: 0.0.40
codegen_flags: <defaults>
</compile_context>

<pallas_src>
import jax
import jax.numpy as jnp
from jax.experimental import pallas as pl
from jax.experimental.pallas import tpu as pltpu

# ---------------- small-config (consistent with the module's constructor) ----------------
BATCH = 2
NUM_NODES = 4
IN_STEPS = 8          # T / seq_len
OUT_STEPS = 8
STEPS_PER_DAY = 288
INPUT_DIM = 3
OUTPUT_DIM = 1
INPUT_EMB = 8
TOD_EMB = 8
DOW_EMB = 8
SPATIAL_EMB = 0
ADAPTIVE_EMB = 8
MODEL_DIM = INPUT_EMB + TOD_EMB + DOW_EMB + SPATIAL_EMB + ADAPTIVE_EMB   # 32
NUM_LAYERS = 2
STATE_SIZE = 128      # hard-coded in TFMamba.__init__
RMS_EPS = 1e-5

MD2 = 2 * MODEL_DIM                    # 64  (MambaBlock inner dim)
OUT_FEAT = OUT_STEPS * OUTPUT_DIM      # 8
BN = BATCH * NUM_NODES                 # 8   batch elements seen by the Mamba layers
ROWS = BN * IN_STEPS                   # 64  rows = (batch_elem, time)

_N_LAYER_PARAMS = 15                   # refs per MambaBlock layer


# ---------------- in-kernel helpers ----------------
def _silu(x):
    return x * jax.nn.sigmoid(x)


def _softplus(x):
    # matches torch.nn.functional.softplus (threshold=20); exp arg clamped so
    # the discarded branch never produces inf (NaN-safe if ever differentiated)
    return jnp.where(x > 20.0, x, jnp.log1p(jnp.exp(jnp.minimum(x, 20.0))))


def _layer_body(x, mask_m1, mask_p1, refs):
    """One MambaBlock on batched rows x: (ROWS, MODEL_DIM) -> (ROWS, MODEL_DIM)."""
    (rms, inw, inb, dw, db, bd0, bd1, bd2, convb,
     clw, clb, fcw, fcb, outw, outb) = refs
    bf = jnp.bfloat16

    # RMSNorm (f32)
    ms = jnp.mean(x * x, axis=-1, keepdims=True)
    xn = x * jax.lax.rsqrt(ms + RMS_EPS) * rms[...]
    xn_h = xn.astype(bf)

    # in_proj and the D (residual gate) branch
    xp = jnp.dot(xn_h, inw[...], preferred_element_type=jnp.float32) + inb[...]      # (R, 2Dm)
    x_res = _silu(jnp.dot(xn_h, dw[...], preferred_element_type=jnp.float32) + db[...])

    # Conv1d(in_ch=seq_len, out_ch=seq_len, k=3, pad=1) over the feature ("length")
    # axis, batched over BN batch elements:
    #   neighbour taps  -> pltpu.roll (XLU) + 0/1 boundary masks (VPU)
    #   channel mixing  -> precomputed block-diagonal per-tap matrices (MXU)
    x_m1 = (pltpu.roll(xp, 1, axis=1) * mask_m1)          # x[:, j-1], col 0 zeroed
    x_p1 = (pltpu.roll(xp, MD2 - 1, axis=1) * mask_p1)    # x[:, j+1], last col zeroed
    xc = (jnp.dot(bd0[...], x_m1.astype(bf), preferred_element_type=jnp.float32)
          + jnp.dot(bd1[...], xp.astype(bf), preferred_element_type=jnp.float32)
          + jnp.dot(bd2[...], x_p1.astype(bf), preferred_element_type=jnp.float32)
          + convb[...])
    xca = _silu(xc)
    xco = jnp.dot(xca.astype(bf), clw[...], preferred_element_type=jnp.float32) + clb[...]

    # S6: in the reference forward, h is freshly zeroed, so
    #   h = dA*0 + x*dB  and  y[l,d] = x[l,d] * delta[l,d] * sum_n B[l,n]*C[l,n]
    # (A drops out exactly; there is no recurrence across l in the reference).
    # fc2 || fc3 || fc1 fused into one lane-dense matmul; slices on 128-lane tiles.
    f = jnp.dot(xco.astype(bf), fcw[...], preferred_element_type=jnp.float32) + fcb[...]   # (R, 2S+M)
    Bm = f[:, :STATE_SIZE]
    Cm = f[:, STATE_SIZE:2 * STATE_SIZE]
    delta = _softplus(f[:, 2 * STATE_SIZE:])
    bc = jnp.sum(Bm * Cm, axis=-1, keepdims=True)                  # (R, 1)
    y = xco * delta * bc

    comb = _silu(y) * x_res
    return jnp.dot(comb.astype(bf), outw[...], preferred_element_type=jnp.float32) + outb[...]


def _fused_kernel(*refs):
    """feats + all weights -> final (use_mixed_proj=True) output, single invocation."""
    feats_ref = refs[0]
    o_ref = refs[-1]
    bf = jnp.bfloat16

    layer_refs = []
    idx = 1
    for _ in range(NUM_LAYERS):
        layer_refs.append(refs[idx:idx + _N_LAYER_PARAMS])
        idx += _N_LAYER_PARAMS
    (m1_ref, p1_ref, opwh_ref, opmask_ref,
     opgsel_ref, opfold_ref, opb_ref) = refs[idx:idx + 7]

    mask_m1 = m1_ref[...]
    mask_p1 = p1_ref[...]

    x = feats_ref[...]                                             # (ROWS, MODEL_DIM)
    for lrefs in layer_refs:
        x = _layer_body(x, mask_m1, mask_p1, lrefs)

    # Mixed output projection: out[b, o] = sum_{t,d} x[b*L+t, d] * W[t*Dm+d, o].
    # Implemented as matmuls with precomputed selection/fold constants so no
    # in-kernel (ROWS, Dm) -> (BN, L*Dm) relayout reshape is needed.
    tmp = jnp.dot(x.astype(bf), opwh_ref[...],
                  preferred_element_type=jnp.float32) * opmask_ref[...]      # (ROWS, L*O)
    g = jnp.dot(opgsel_ref[...], tmp.astype(bf),
                preferred_element_type=jnp.float32)                          # (BN, L*O)
    out = jnp.dot(g.astype(bf), opfold_ref[...],
                  preferred_element_type=jnp.float32) + opb_ref[...]         # (BN, O)
    o_ref[...] = out


def fused_tfmamba(feats_rows, fp):
    """feats_rows: (BN*T, MODEL_DIM), rows ordered (batch, node, time) -> (BN, OUT_FEAT)."""
    weights = []
    for lp in fp["layers"]:
        weights += [lp["rms_w"], lp["in_w"], lp["in_b"], lp["d_w"], lp["d_b"],
                    lp["bd0"], lp["bd1"], lp["bd2"], lp["conv_b_rows"],
                    lp["cl_w"], lp["cl_b"], lp["fc_w"], lp["fc_b"],
                    lp["out_w"], lp["out_b"]]
    weights += [fp["mask_m1"], fp["mask_p1"],
                fp["op_wh"], fp["op_mask"], fp["op_gsel"], fp["op_fold"], fp["op_b"]]

    # No grid: one kernel invocation; every array is a full-size VMEM block.
    return pl.pallas_call(
        _fused_kernel,
        out_shape=jax.ShapeDtypeStruct((BN, OUT_FEAT), jnp.float32),
    )(feats_rows, *weights)


# ---------------- parameter init (deterministic, synthetic) ----------------
def init_params(key):
    def nxt():
        nonlocal key
        key, sub = jax.random.split(key)
        return sub

    def dense(in_d, out_d):
        w = jax.random.normal(nxt(), (in_d, out_d), jnp.float32) * 0.1
        b = jax.random.normal(nxt(), (out_d,), jnp.float32) * 0.1
        return w, b

    params = {}
    params["input_proj_w"], params["input_proj_b"] = dense(INPUT_DIM, INPUT_EMB)
    params["tod_table"] = jax.random.normal(nxt(), (STEPS_PER_DAY, TOD_EMB), jnp.float32) * 0.1
    params["dow_table"] = jax.random.normal(nxt(), (7, DOW_EMB), jnp.float32) * 0.1
    params["adaptive"] = jax.random.normal(nxt(), (IN_STEPS, NUM_NODES, ADAPTIVE_EMB), jnp.float32) * 0.1
    params["output_proj_w"], params["output_proj_b"] = dense(
        IN_STEPS * MODEL_DIM, OUT_STEPS * OUTPUT_DIM
    )

    layers = []
    Dm, M, L, S = MODEL_DIM, MD2, IN_STEPS, STATE_SIZE
    for _ in range(NUM_LAYERS):
        lp = {}
        lp["rms_w"] = jnp.ones((Dm,), jnp.float32)                      # RMSNorm init
        lp["in_w"], lp["in_b"] = dense(Dm, M)
        # torch Conv1d weight is (out_ch=L, in_ch=L, k=3); store as (k, out, in)
        lp["conv_w"] = jax.random.normal(nxt(), (3, L, L), jnp.float32) * 0.1
        lp["conv_b"] = jax.random.normal(nxt(), (L,), jnp.float32) * 0.1
        lp["cl_w"], lp["cl_b"] = dense(M, M)
        lp["fc1_w"], lp["fc1_b"] = dense(M, M)
        lp["fc2_w"], lp["fc2_b"] = dense(M, S)
        lp["fc3_w"], lp["fc3_b"] = dense(M, S)
        lp["d_w"], lp["d_b"] = dense(Dm, M)
        ow, _ = dense(M, Dm)
        lp["out_w"], lp["out_b"] = ow, jnp.ones((Dm,), jnp.float32)     # out_proj bias init = 1.0
        layers.append(lp)
    params["layers"] = layers
    return params


def prepare_params(params):
    """Derive kernel-ready constants (merged / block-diag / mask / selection matrices) host-side."""
    Dm, M, L, S = MODEL_DIM, MD2, IN_STEPS, STATE_SIZE
    O = OUT_FEAT
    bf = jnp.bfloat16

    fp = {k: params[k] for k in
          ["input_proj_w", "input_proj_b", "tod_table", "dow_table"]}
    # adaptive embedding pre-transposed to (N, T, E) so the prologue emits rows
    # already in (batch, node, time) kernel order (no feats relayout afterwards)
    fp["adaptive_nt"] = params["adaptive"].transpose(1, 0, 2)

    # boundary masks for the pltpu.roll-based feature shifts (zero the wrapped lane)
    lane = jnp.arange(M)
    fp["mask_m1"] = (lane != 0).astype(jnp.float32).reshape(1, M)
    fp["mask_p1"] = (lane != M - 1).astype(jnp.float32).reshape(1, M)

    eye_bn = jnp.eye(BN, dtype=jnp.float32)
    layers = []
    for lp in params["layers"]:
        d = {}
        d["rms_w"] = lp["rms_w"].reshape(1, Dm)
        d["in_w"] = lp["in_w"].astype(bf)
        d["in_b"] = lp["in_b"].reshape(1, M)
        d["d_w"] = lp["d_w"].astype(bf)
        d["d_b"] = lp["d_b"].reshape(1, M)
        # block-diagonal (per batch element) channel-mix matrices, one per tap: (ROWS, ROWS)
        d["bd0"] = jnp.kron(eye_bn, lp["conv_w"][0]).astype(bf)
        d["bd1"] = jnp.kron(eye_bn, lp["conv_w"][1]).astype(bf)
        d["bd2"] = jnp.kron(eye_bn, lp["conv_w"][2]).astype(bf)
        d["conv_b_rows"] = jnp.tile(lp["conv_b"], (BN,)).reshape(ROWS, 1)
        d["cl_w"] = lp["cl_w"].astype(bf)
        d["cl_b"] = lp["cl_b"].reshape(1, M)
        # fc2 || fc3 || fc1 merged: (M, 2S+M); slices start at lanes 0 / 128 / 256
        d["fc_w"] = jnp.concatenate([lp["fc2_w"], lp["fc3_w"], lp["fc1_w"]], axis=1).astype(bf)
        d["fc_b"] = jnp.concatenate([lp["fc2_b"], lp["fc3_b"], lp["fc1_b"]]).reshape(1, 2 * S + M)
        d["out_w"] = lp["out_w"].astype(bf)
        d["out_b"] = lp["out_b"].reshape(1, Dm)
        layers.append(d)
    fp["layers"] = layers

    # mixed output projection constants:
    #   op_wh[d, t*O+o] = W[t*Dm+d, o];  mask/gsel/fold implement the (b,t)-row
    #   -> per-batch-element (T*Dm) flatten purely with matmuls.
    opw = params["output_proj_w"]                                   # (L*Dm, O)
    fp["op_wh"] = (opw.reshape(L, Dm, O).transpose(1, 0, 2).reshape(Dm, L * O)).astype(bf)
    rows = jnp.arange(ROWS)[:, None]
    cols = jnp.arange(L * O)[None, :]
    fp["op_mask"] = ((cols // O) == (rows % L)).astype(jnp.float32)                      # (ROWS, L*O)
    fp["op_gsel"] = (jnp.arange(BN)[:, None] ==
                     (jnp.arange(ROWS)[None, :] // L)).astype(bf)                        # (BN, ROWS)
    fp["op_fold"] = ((jnp.arange(L * O)[:, None] % O) ==
                     jnp.arange(O)[None, :]).astype(bf)                                  # (L*O, O)
    fp["op_b"] = params["output_proj_b"].reshape(1, O)
    return fp


# ---------------- full forward ----------------
def tfmamba_forward(x, fp):
    """x: (B, T, N, 3) with features [value, tod in [0,1), dow in {0..6}] -> (B, OUT_STEPS, N, 1)."""
    B, T, N, D = x.shape
    # TODO(synk): `tod`, `dow`, `batch_size`, `mamba` are undefined globals in the reference
    # forward; we follow STAEformer convention: tod = x[...,1], dow = x[...,2], mamba = each layer.
    # Build the features directly in (batch, node, time)-major order (kernel row order).
    xt = x.transpose(0, 2, 1, 3)                                            # (B, N, T, 3)
    tod = xt[..., 1]
    dow = xt[..., 2]

    # TODO(synk): embedding gathers (tod/dow) + the tiny (.,3)@(3,8) input_proj have no useful
    # Pallas equivalent at this size; they are left to XLA and fuse into one prologue fusion.
    x_emb = jnp.matmul(xt, fp["input_proj_w"]) + fp["input_proj_b"]          # (B,N,T,INPUT_EMB)
    tod_idx = (tod * STEPS_PER_DAY).astype(jnp.int32)
    tod_emb = jnp.take(fp["tod_table"], tod_idx, axis=0)
    dow_emb = jnp.take(fp["dow_table"], dow.astype(jnp.int32), axis=0)
    adp_emb = jnp.broadcast_to(fp["adaptive_nt"], (B, N, T, ADAPTIVE_EMB))
    feats = jnp.concatenate([x_emb, tod_emb, dow_emb, adp_emb], axis=-1)     # (B,N,T,MODEL_DIM)

    # TODO(synk): the reference feeds a 4D tensor straight into MambaBlock whose Conv1d requires
    # 3D input (would raise in PyTorch); we run the temporal Mamba per node, seq_len = in_steps.
    feats_rows = feats.reshape(B * N * T, MODEL_DIM)                         # rows ordered (b, n, t)

    out = fused_tfmamba(feats_rows, fp)                                      # (BN, OUT_FEAT)
    out = out.reshape(B, N, OUT_STEPS, OUTPUT_DIM).transpose(0, 2, 1, 3)     # (B, OUT_STEPS, N, 1)
    return out


# ---------------- main ----------------
if __name__ == "__main__":
    key = jax.random.PRNGKey(0)
    k_par, k_val, k_tod, k_dow = jax.random.split(key, 4)

    params = init_params(k_par)
    fused_params = prepare_params(params)

    val = jax.random.normal(k_val, (BATCH, IN_STEPS, NUM_NODES, 1), jnp.float32)
    tod = jax.random.uniform(k_tod, (BATCH, IN_STEPS, NUM_NODES, 1), jnp.float32,
                             minval=0.0, maxval=0.999)
    dow = jax.random.randint(k_dow, (BATCH, IN_STEPS, NUM_NODES, 1), 0, 7).astype(jnp.float32)
    x = jnp.concatenate([val, tod, dow], axis=-1)          # (B, T, N, 3)

    fwd = jax.jit(tfmamba_forward)
    out = fwd(x, fused_params)
    out = jax.block_until_ready(out)

    assert out.shape == (BATCH, OUT_STEPS, NUM_NODES, OUTPUT_DIM), out.shape
    assert bool(jnp.all(jnp.isfinite(out)))
    print("KERNEL_OK")
</pallas_src>

<mosaic_0001>
module attributes {stable_mosaic.version = 11 : i64} {
  func.func @_fused_kernel(%arg0: memref<64x32xf32, #tpu.memory_space<vmem>>, %arg1: memref<1x32xf32, #tpu.memory_space<vmem>>, %arg2: memref<32x64xbf16, #tpu.memory_space<vmem>>, %arg3: memref<1x64xf32, #tpu.memory_space<vmem>>, %arg4: memref<32x64xbf16, #tpu.memory_space<vmem>>, %arg5: memref<1x64xf32, #tpu.memory_space<vmem>>, %arg6: memref<64x64xbf16, #tpu.memory_space<vmem>>, %arg7: memref<64x64xbf16, #tpu.memory_space<vmem>>, %arg8: memref<64x64xbf16, #tpu.memory_space<vmem>>, %arg9: memref<64x1xf32, #tpu.memory_space<vmem>>, %arg10: memref<64x64xbf16, #tpu.memory_space<vmem>>, %arg11: memref<1x64xf32, #tpu.memory_space<vmem>>, %arg12: memref<64x320xbf16, #tpu.memory_space<vmem>>, %arg13: memref<1x320xf32, #tpu.memory_space<vmem>>, %arg14: memref<64x32xbf16, #tpu.memory_space<vmem>>, %arg15: memref<1x32xf32, #tpu.memory_space<vmem>>, %arg16: memref<1x32xf32, #tpu.memory_space<vmem>>, %arg17: memref<32x64xbf16, #tpu.memory_space<vmem>>, %arg18: memref<1x64xf32, #tpu.memory_space<vmem>>, %arg19: memref<32x64xbf16, #tpu.memory_space<vmem>>, %arg20: memref<1x64xf32, #tpu.memory_space<vmem>>, %arg21: memref<64x64xbf16, #tpu.memory_space<vmem>>, %arg22: memref<64x64xbf16, #tpu.memory_space<vmem>>, %arg23: memref<64x64xbf16, #tpu.memory_space<vmem>>, %arg24: memref<64x1xf32, #tpu.memory_space<vmem>>, %arg25: memref<64x64xbf16, #tpu.memory_space<vmem>>, %arg26: memref<1x64xf32, #tpu.memory_space<vmem>>, %arg27: memref<64x320xbf16, #tpu.memory_space<vmem>>, %arg28: memref<1x320xf32, #tpu.memory_space<vmem>>, %arg29: memref<64x32xbf16, #tpu.memory_space<vmem>>, %arg30: memref<1x32xf32, #tpu.memory_space<vmem>>, %arg31: memref<1x64xf32, #tpu.memory_space<vmem>>, %arg32: memref<1x64xf32, #tpu.memory_space<vmem>>, %arg33: memref<32x64xbf16, #tpu.memory_space<vmem>>, %arg34: memref<64x64xf32, #tpu.memory_space<vmem>>, %arg35: memref<8x64xbf16, #tpu.memory_space<vmem>>, %arg36: memref<64x8xbf16, #tpu.memory_space<vmem>>, %arg37: memref<1x8xf32, #tpu.memory_space<vmem>>, %arg38: memref<8x8xf32, #tpu.memory_space<vmem>>) attributes {dimension_semantics = [], scalar_prefetch = 0 : i64, scratch_operands = 0 : i64, tpu.core_type = #tpu.core_type<tc>} {
    %c0 = arith.constant 0 : index
    %c0_0 = arith.constant 0 : index
    %0 = vector.load %arg31[%c0, %c0_0] : memref<1x64xf32, #tpu.memory_space<vmem>>, vector<1x64xf32>
    %c0_1 = arith.constant 0 : index
    %c0_2 = arith.constant 0 : index
    %1 = vector.load %arg32[%c0_1, %c0_2] : memref<1x64xf32, #tpu.memory_space<vmem>>, vector<1x64xf32>
    %c0_3 = arith.constant 0 : index
    %c0_4 = arith.constant 0 : index
    %2 = vector.load %arg0[%c0_3, %c0_4] : memref<64x32xf32, #tpu.memory_space<vmem>>, vector<64x32xf32>
    %3 = arith.mulf %2, %2 : vector<64x32xf32>
    %cst = arith.constant dense<0.000000e+00> : vector<64xf32>
    %4 = vector.multi_reduction <add>, %3, %cst [1] : vector<64x32xf32> to vector<64xf32>
    %5 = vector.shape_cast %4 : vector<64xf32> to vector<64x1xf32>
    %cst_5 = arith.constant 3.200000e+01 : f32
    %6 = vector.broadcast %cst_5 : f32 to vector<64x1xf32>
    %7 = arith.divf %5, %6 : vector<64x1xf32>
    %cst_6 = arith.constant 9.99999974E-6 : f32
    %8 = vector.broadcast %cst_6 : f32 to vector<64x1xf32>
    %9 = arith.addf %7, %8 : vector<64x1xf32>
    %10 = math.rsqrt %9 : vector<64x1xf32>
    %11 = vector.broadcast %10 : vector<64x1xf32> to vector<64x32xf32>
    %12 = arith.mulf %2, %11 : vector<64x32xf32>
    %c0_7 = arith.constant 0 : index
    %c0_8 = arith.constant 0 : index
    %13 = vector.load %arg1[%c0_7, %c0_8] : memref<1x32xf32, #tpu.memory_space<vmem>>, vector<1x32xf32>
    %14 = vector.broadcast %13 : vector<1x32xf32> to vector<64x32xf32>
    %15 = arith.mulf %12, %14 : vector<64x32xf32>
    %16 = arith.truncf %15 : vector<64x32xf32> to vector<64x32xbf16>
    %c0_9 = arith.constant 0 : index
    %c0_10 = arith.constant 0 : index
    %17 = vector.load %arg2[%c0_9, %c0_10] : memref<32x64xbf16, #tpu.memory_space<vmem>>, vector<32x64xbf16>
    %cst_11 = arith.constant dense<0.000000e+00> : vector<64x64xf32>
    %18 = tpu.matmul %16, %17, %cst_11 {dimension_numbers = #tpu.dot_dimension_numbers<[1], [0], [0], [1], [0, 0, 1, 1], [], []>} : vector<64x32xbf16>, vector<32x64xbf16>, vector<64x64xf32> -> vector<64x64xf32>
    %c0_12 = arith.constant 0 : index
    %c0_13 = arith.constant 0 : index
    %19 = vector.load %arg3[%c0_12, %c0_13] : memref<1x64xf32, #tpu.memory_space<vmem>>, vector<1x64xf32>
    %20 = vector.broadcast %19 : vector<1x64xf32> to vector<64x64xf32>
    %21 = arith.addf %18, %20 : vector<64x64xf32>
    %c0_14 = arith.constant 0 : index
    %c0_15 = arith.constant 0 : index
    %22 = vector.load %arg4[%c0_14, %c0_15] : memref<32x64xbf16, #tpu.memory_space<vmem>>, vector<32x64xbf16>
    %cst_16 = arith.constant dense<0.000000e+00> : vector<64x64xf32>
    %23 = tpu.matmul %16, %22, %cst_16 {dimension_numbers = #tpu.dot_dimension_numbers<[1], [0], [0], [1], [0, 0, 1, 1], [], []>} : vector<64x32xbf16>, vector<32x64xbf16>, vector<64x64xf32> -> vector<64x64xf32>
    %c0_17 = arith.constant 0 : index
    %c0_18 = arith.constant 0 : index
    %24 = vector.load %arg5[%c0_17, %c0_18] : memref<1x64xf32, #tpu.memory_space<vmem>>, vector<1x64xf32>
    %25 = vector.broadcast %24 : vector<1x64xf32> to vector<64x64xf32>
    %26 = arith.addf %23, %25 : vector<64x64xf32>
    %27 = arith.negf %26 : vector<64x64xf32>
    %28 = math.exp %27 : vector<64x64xf32>
    %cst_19 = arith.constant 1.000000e+00 : f32
    %29 = vector.broadcast %cst_19 : f32 to vector<64x64xf32>
    %30 = arith.addf %29, %28 : vector<64x64xf32>
    %31 = arith.divf %29, %30 : vector<64x64xf32>
    %32 = arith.mulf %26, %31 : vector<64x64xf32>
    %c1_i32 = arith.constant 1 : i32
    %33 = tpu.dynamic_rotate %21 by %c1_i32 dim 1 : vector<64x64xf32>, i32 -> vector<64x64xf32>
    %34 = vector.broadcast %0 : vector<1x64xf32> to vector<64x64xf32>
    %35 = arith.mulf %33, %34 : vector<64x64xf32>
    %c63_i32 = arith.constant 63 : i32
    %36 = tpu.dynamic_rotate %21 by %c63_i32 dim 1 : vector<64x64xf32>, i32 -> vector<64x64xf32>
    %37 = vector.broadcast %1 : vector<1x64xf32> to vector<64x64xf32>
    %38 = arith.mulf %36, %37 : vector<64x64xf32>
    %c0_20 = arith.constant 0 : index
    %c0_21 = arith.constant 0 : index
    %39 = vector.load %arg6[%c0_20, %c0_21] : memref<64x64xbf16, #tpu.memory_space<vmem>>, vector<64x64xbf16>
    %40 = arith.truncf %35 : vector<64x64xf32> to vector<64x64xbf16>
    %cst_22 = arith.constant dense<0.000000e+00> : vector<64x64xf32>
    %41 = tpu.matmul %39, %40, %cst_22 {dimension_numbers = #tpu.dot_dimension_numbers<[1], [0], [0], [1], [0, 0, 1, 1], [], []>} : vector<64x64xbf16>, vector<64x64xbf16>, vector<64x64xf32> -> vector<64x64xf32>
    %c0_23 = arith.constant 0 : index
    %c0_24 = arith.constant 0 : index
    %42 = vector.load %arg7[%c0_23, %c0_24] : memref<64x64xbf16, #tpu.memory_space<vmem>>, vector<64x64xbf16>
    %43 = arith.truncf %21 : vector<64x64xf32> to vector<64x64xbf16>
    %cst_25 = arith.constant dense<0.000000e+00> : vector<64x64xf32>
    %44 = tpu.matmul %42, %43, %cst_25 {dimension_numbers = #tpu.dot_dimension_numbers<[1], [0], [0], [1], [0, 0, 1, 1], [], []>} : vector<64x64xbf16>, vector<64x64xbf16>, vector<64x64xf32> -> vector<64x64xf32>
    %45 = arith.addf %41, %44 : vector<64x64xf32>
    %c0_26 = arith.constant 0 : index
    %c0_27 = arith.constant 0 : index
    %46 = vector.load %arg8[%c0_26, %c0_27] : memref<64x64xbf16, #tpu.memory_space<vmem>>, vector<64x64xbf16>
    %47 = arith.truncf %38 : vector<64x64xf32> to vector<64x64xbf16>
    %cst_28 = arith.constant dense<0.000000e+00> : vector<64x64xf32>
    %48 = tpu.matmul %46, %47, %cst_28 {dimension_numbers = #tpu.dot_dimension_numbers<[1], [0], [0], [1], [0, 0, 1, 1], [], []>} : vector<64x64xbf16>, vector<64x64xbf16>, vector<64x64xf32> -> vector<64x64xf32>
    %49 = arith.addf %45, %48 : vector<64x64xf32>
    %c0_29 = arith.constant 0 : index
    %c0_30 = arith.constant 0 : index
    %50 = vector.load %arg9[%c0_29, %c0_30] : memref<64x1xf32, #tpu.memory_space<vmem>>, vector<64x1xf32>
    %51 = vector.broadcast %50 : vector<64x1xf32> to vector<64x64xf32>
    %52 = arith.addf %49, %51 : vector<64x64xf32>
    %53 = arith.negf %52 : vector<64x64xf32>
    %54 = math.exp %53 : vector<64x64xf32>
    %cst_31 = arith.constant 1.000000e+00 : f32
    %55 = vector.broadcast %cst_31 : f32 to vector<64x64xf32>
    %56 = arith.addf %55, %54 : vector<64x64xf32>
    %57 = arith.divf %55, %56 : vector<64x64xf32>
    %58 = arith.mulf %52, %57 : vector<64x64xf32>
    %59 = arith.truncf %58 : vector<64x64xf32> to vector<64x64xbf16>
    %c0_32 = arith.constant 0 : index
    %c0_33 = arith.constant 0 : index
    %60 = vector.load %arg10[%c0_32, %c0_33] : memref<64x64xbf16, #tpu.memory_space<vmem>>, vector<64x64xbf16>
    %cst_34 = arith.constant dense<0.000000e+00> : vector<64x64xf32>
    %61 = tpu.matmul %59, %60, %cst_34 {dimension_numbers = #tpu.dot_dimension_numbers<[1], [0], [0], [1], [0, 0, 1, 1], [], []>} : vector<64x64xbf16>, vector<64x64xbf16>, vector<64x64xf32> -> vector<64x64xf32>
    %c0_35 = arith.constant 0 : index
    %c0_36 = arith.constant 0 : index
    %62 = vector.load %arg11[%c0_35, %c0_36] : memref<1x64xf32, #tpu.memory_space<vmem>>, vector<1x64xf32>
    %63 = vector.broadcast %62 : vector<1x64xf32> to vector<64x64xf32>
    %64 = arith.addf %61, %63 : vector<64x64xf32>
    %65 = arith.truncf %64 : vector<64x64xf32> to vector<64x64xbf16>
    %c0_37 = arith.constant 0 : index
    %c0_38 = arith.constant 0 : index
    %66 = vector.load %arg12[%c0_37, %c0_38] : memref<64x320xbf16, #tpu.memory_space<vmem>>, vector<64x320xbf16>
    %cst_39 = arith.constant dense<0.000000e+00> : vector<64x320xf32>
    %67 = tpu.matmul %65, %66, %cst_39 {dimension_numbers = #tpu.dot_dimension_numbers<[1], [0], [0], [1], [0, 0, 1, 1], [], []>} : vector<64x64xbf16>, vector<64x320xbf16>, vector<64x320xf32> -> vector<64x320xf32>
    %c0_40 = arith.constant 0 : index
    %c0_41 = arith.constant 0 : index
    %68 = vector.load %arg13[%c0_40, %c0_41] : memref<1x320xf32, #tpu.memory_space<vmem>>, vector<1x320xf32>
    %69 = vector.broadcast %68 : vector<1x320xf32> to vector<64x320xf32>
    %70 = arith.addf %67, %69 : vector<64x320xf32>
    %71 = vector.extract_strided_slice %70 {offsets = [0, 0], sizes = [64, 128], strides = [1, 1]} : vector<64x320xf32> to vector<64x128xf32>
    %72 = vector.extract_strided_slice %70 {offsets = [0, 128], sizes = [64, 128], strides = [1, 1]} : vector<64x320xf32> to vector<64x128xf32>
    %73 = vector.extract_strided_slice %70 {offsets = [0, 256], sizes = [64, 64], strides = [1, 1]} : vector<64x320xf32> to vector<64x64xf32>
    %cst_42 = arith.constant 2.000000e+01 : f32
    %74 = vector.broadcast %cst_42 : f32 to vector<64x64xf32>
    %75 = arith.cmpf ogt, %73, %74 : vector<64x64xf32>
    %cst_43 = arith.constant 2.000000e+01 : f32
    %76 = vector.broadcast %cst_43 : f32 to vector<64x64xf32>
    %77 = arith.minimumf %73, %76 : vector<64x64xf32>
    %78 = math.exp %77 : vector<64x64xf32>
    %79 = math.log1p %78 : vector<64x64xf32>
    %80 = arith.select %75, %73, %79 : vector<64x64xi1>, vector<64x64xf32>
    %81 = arith.mulf %71, %72 : vector<64x128xf32>
    %cst_44 = arith.constant dense<0.000000e+00> : vector<64xf32>
    %82 = vector.multi_reduction <add>, %81, %cst_44 [1] : vector<64x128xf32> to vector<64xf32>
    %83 = vector.shape_cast %82 : vector<64xf32> to vector<64x1xf32>
    %84 = arith.mulf %64, %80 : vector<64x64xf32>
    %85 = vector.broadcast %83 : vector<64x1xf32> to vector<64x64xf32>
    %86 = arith.mulf %84, %85 : vector<64x64xf32>
    %87 = arith.negf %86 : vector<64x64xf32>
    %88 = math.exp %87 : vector<64x64xf32>
    %cst_45 = arith.constant 1.000000e+00 : f32
    %89 = vector.broadcast %cst_45 : f32 to vector<64x64xf32>
    %90 = arith.addf %89, %88 : vector<64x64xf32>
    %91 = arith.divf %89, %90 : vector<64x64xf32>
    %92 = arith.mulf %86, %91 : vector<64x64xf32>
    %93 = arith.mulf %92, %32 : vector<64x64xf32>
    %94 = arith.truncf %93 : vector<64x64xf32> to vector<64x64xbf16>
    %c0_46 = arith.constant 0 : index
    %c0_47 = arith.constant 0 : index
    %95 = vector.load %arg14[%c0_46, %c0_47] : memref<64x32xbf16, #tpu.memory_space<vmem>>, vector<64x32xbf16>
    %cst_48 = arith.constant dense<0.000000e+00> : vector<64x32xf32>
    %96 = tpu.matmul %94, %95, %cst_48 {dimension_numbers = #tpu.dot_dimension_numbers<[1], [0], [0], [1], [0, 0, 1, 1], [], []>} : vector<64x64xbf16>, vector<64x32xbf16>, vector<64x32xf32> -> vector<64x32xf32>
    %c0_49 = arith.constant 0 : index
    %c0_50 = arith.constant 0 : index
    %97 = vector.load %arg15[%c0_49, %c0_50] : memref<1x32xf32, #tpu.memory_space<vmem>>, vector<1x32xf32>
    %98 = vector.broadcast %97 : vector<1x32xf32> to vector<64x32xf32>
    %99 = arith.addf %96, %98 : vector<64x32xf32>
    %100 = arith.mulf %99, %99 : vector<64x32xf32>
    %cst_51 = arith.constant dense<0.000000e+00> : vector<64xf32>
    %101 = vector.multi_reduction <add>, %100, %cst_51 [1] : vector<64x32xf32> to vector<64xf32>
    %102 = vector.shape_cast %101 : vector<64xf32> to vector<64x1xf32>
    %cst_52 = arith.constant 3.200000e+01 : f32
    %103 = vector.broadcast %cst_52 : f32 to vector<64x1xf32>
    %104 = arith.divf %102, %103 : vector<64x1xf32>
    %cst_53 = arith.constant 9.99999974E-6 : f32
    %105 = vector.broadcast %cst_53 : f32 to vector<64x1xf32>
    %106 = arith.addf %104, %105 : vector<64x1xf32>
    %107 = math.rsqrt %106 : vector<64x1xf32>
    %108 = vector.broadcast %107 : vector<64x1xf32> to vector<64x32xf32>
    %109 = arith.mulf %99, %108 : vector<64x32xf32>
    %c0_54 = arith.constant 0 : index
    %c0_55 = arith.constant 0 : index
    %110 = vector.load %arg16[%c0_54, %c0_55] : memref<1x32xf32, #tpu.memory_space<vmem>>, vector<1x32xf32>
    %111 = vector.broadcast %110 : vector<1x32xf32> to vector<64x32xf32>
    %112 = arith.mulf %109, %111 : vector<64x32xf32>
    %113 = arith.truncf %112 : vector<64x32xf32> to vector<64x32xbf16>
    %c0_56 = arith.constant 0 : index
    %c0_57 = arith.constant 0 : index
    %114 = vector.load %arg17[%c0_56, %c0_57] : memref<32x64xbf16, #tpu.memory_space<vmem>>, vector<32x64xbf16>
    %cst_58 = arith.constant dense<0.000000e+00> : vector<64x64xf32>
    %115 = tpu.matmul %113, %114, %cst_58 {dimension_numbers = #tpu.dot_dimension_numbers<[1], [0], [0], [1], [0, 0, 1, 1], [], []>} : vector<64x32xbf16>, vector<32x64xbf16>, vector<64x64xf32> -> vector<64x64xf32>
    %c0_59 = arith.constant 0 : index
    %c0_60 = arith.constant 0 : index
    %116 = vector.load %arg18[%c0_59, %c0_60] : memref<1x64xf32, #tpu.memory_space<vmem>>, vector<1x64xf32>
    %117 = vector.broadcast %116 : vector<1x64xf32> to vector<64x64xf32>
    %118 = arith.addf %115, %117 : vector<64x64xf32>
    %c0_61 = arith.constant 0 : index
    %c0_62 = arith.constant 0 : index
    %119 = vector.load %arg19[%c0_61, %c0_62] : memref<32x64xbf16, #tpu.memory_space<vmem>>, vector<32x64xbf16>
    %cst_63 = arith.constant dense<0.000000e+00> : vector<64x64xf32>
    %120 = tpu.matmul %113, %119, %cst_63 {dimension_numbers = #tpu.dot_dimension_numbers<[1], [0], [0], [1], [0, 0, 1, 1], [], []>} : vector<64x32xbf16>, vector<32x64xbf16>, vector<64x64xf32> -> vector<64x64xf32>
    %c0_64 = arith.constant 0 : index
    %c0_65 = arith.constant 0 : index
    %121 = vector.load %arg20[%c0_64, %c0_65] : memref<1x64xf32, #tpu.memory_space<vmem>>, vector<1x64xf32>
    %122 = vector.broadcast %121 : vector<1x64xf32> to vector<64x64xf32>
    %123 = arith.addf %120, %122 : vector<64x64xf32>
    %124 = arith.negf %123 : vector<64x64xf32>
    %125 = math.exp %124 : vector<64x64xf32>
    %cst_66 = arith.constant 1.000000e+00 : f32
    %126 = vector.broadcast %cst_66 : f32 to vector<64x64xf32>
    %127 = arith.addf %126, %125 : vector<64x64xf32>
    %128 = arith.divf %126, %127 : vector<64x64xf32>
    %129 = arith.mulf %123, %128 : vector<64x64xf32>
    %c1_i32_67 = arith.constant 1 : i32
    %130 = tpu.dynamic_rotate %118 by %c1_i32_67 dim 1 : vector<64x64xf32>, i32 -> vector<64x64xf32>
    %131 = vector.broadcast %0 : vector<1x64xf32> to vector<64x64xf32>
    %132 = arith.mulf %130, %131 : vector<64x64xf32>
    %c63_i32_68 = arith.constant 63 : i32
    %133 = tpu.dynamic_rotate %118 by %c63_i32_68 dim 1 : vector<64x64xf32>, i32 -> vector<64x64xf32>
    %134 = vector.broadcast %1 : vector<1x64xf32> to vector<64x64xf32>
    %135 = arith.mulf %133, %134 : vector<64x64xf32>
    %c0_69 = arith.constant 0 : index
    %c0_70 = arith.constant 0 : index
    %136 = vector.load %arg21[%c0_69, %c0_70] : memref<64x64xbf16, #tpu.memory_space<vmem>>, vector<64x64xbf16>
    %137 = arith.truncf %132 : vector<64x64xf32> to vector<64x64xbf16>
    %cst_71 = arith.constant dense<0.000000e+00> : vector<64x64xf32>
    %138 = tpu.matmul %136, %137, %cst_71 {dimension_numbers = #tpu.dot_dimension_numbers<[1], [0], [0], [1], [0, 0, 1, 1], [], []>} : vector<64x64xbf16>, vector<64x64xbf16>, vector<64x64xf32> -> vector<64x64xf32>
    %c0_72 = arith.constant 0 : index
    %c0_73 = arith.constant 0 : index
    %139 = vector.load %arg22[%c0_72, %c0_73] : memref<64x64xbf16, #tpu.memory_space<vmem>>, vector<64x64xbf16>
    %140 = arith.truncf %118 : vector<64x64xf32> to vector<64x64xbf16>
    %cst_74 = arith.constant dense<0.000000e+00> : vector<64x64xf32>
    %141 = tpu.matmul %139, %140, %cst_74 {dimension_numbers = #tpu.dot_dimension_numbers<[1], [0], [0], [1], [0, 0, 1, 1], [], []>} : vector<64x64xbf16>, vector<64x64xbf16>, vector<64x64xf32> -> vector<64x64xf32>
    %142 = arith.addf %138, %141 : vector<64x64xf32>
    %c0_75 = arith.constant 0 : index
    %c0_76 = arith.constant 0 : index
    %143 = vector.load %arg23[%c0_75, %c0_76] : memref<64x64xbf16, #tpu.memory_space<vmem>>, vector<64x64xbf16>
    %144 = arith.truncf %135 : vector<64x64xf32> to vector<64x64xbf16>
    %cst_77 = arith.constant dense<0.000000e+00> : vector<64x64xf32>
    %145 = tpu.matmul %143, %144, %cst_77 {dimension_numbers = #tpu.dot_dimension_numbers<[1], [0], [0], [1], [0, 0, 1, 1], [], []>} : vector<64x64xbf16>, vector<64x64xbf16>, vector<64x64xf32> -> vector<64x64xf32>
    %146 = arith.addf %142, %145 : vector<64x64xf32>
    %c0_78 = arith.constant 0 : index
    %c0_79 = arith.constant 0 : index
    %147 = vector.load %arg24[%c0_78, %c0_79] : memref<64x1xf32, #tpu.memory_space<vmem>>, vector<64x1xf32>
    %148 = vector.broadcast %147 : vector<64x1xf32> to vector<64x64xf32>
    %149 = arith.addf %146, %148 : vector<64x64xf32>
    %150 = arith.negf %149 : vector<64x64xf32>
    %151 = math.exp %150 : vector<64x64xf32>
    %cst_80 = arith.constant 1.000000e+00 : f32
    %152 = vector.broadcast %cst_80 : f32 to vector<64x64xf32>
    %153 = arith.addf %152, %151 : vector<64x64xf32>
    %154 = arith.divf %152, %153 : vector<64x64xf32>
    %155 = arith.mulf %149, %154 : vector<64x64xf32>
    %156 = arith.truncf %155 : vector<64x64xf32> to vector<64x64xbf16>
    %c0_81 = arith.constant 0 : index
    %c0_82 = arith.constant 0 : index
    %157 = vector.load %arg25[%c0_81, %c0_82] : memref<64x64xbf16, #tpu.memory_space<vmem>>, vector<64x64xbf16>
    %cst_83 = arith.constant dense<0.000000e+00> : vector<64x64xf32>
    %158 = tpu.matmul %156, %157, %cst_83 {dimension_numbers = #tpu.dot_dimension_numbers<[1], [0], [0], [1], [0, 0, 1, 1], [], []>} : vector<64x64xbf16>, vector<64x64xbf16>, vector<64x64xf32> -> vector<64x64xf32>
    %c0_84 = arith.constant 0 : index
    %c0_85 = arith.constant 0 : index
    %159 = vector.load %arg26[%c0_84, %c0_85] : memref<1x64xf32, #tpu.memory_space<vmem>>, vector<1x64xf32>
    %160 = vector.broadcast %159 : vector<1x64xf32> to vector<64x64xf32>
    %161 = arith.addf %158, %160 : vector<64x64xf32>
    %162 = arith.truncf %161 : vector<64x64xf32> to vector<64x64xbf16>
    %c0_86 = arith.constant 0 : index
    %c0_87 = arith.constant 0 : index
    %163 = vector.load %arg27[%c0_86, %c0_87] : memref<64x320xbf16, #tpu.memory_space<vmem>>, vector<64x320xbf16>
    %cst_88 = arith.constant dense<0.000000e+00> : vector<64x320xf32>
    %164 = tpu.matmul %162, %163, %cst_88 {dimension_numbers = #tpu.dot_dimension_numbers<[1], [0], [0], [1], [0, 0, 1, 1], [], []>} : vector<64x64xbf16>, vector<64x320xbf16>, vector<64x320xf32> -> vector<64x320xf32>
    %c0_89 = arith.constant 0 : index
    %c0_90 = arith.constant 0 : index
    %165 = vector.load %arg28[%c0_89, %c0_90] : memref<1x320xf32, #tpu.memory_space<vmem>>, vector<1x320xf32>
    %166 = vector.broadcast %165 : vector<1x320xf32> to vector<64x320xf32>
    %167 = arith.addf %164, %166 : vector<64x320xf32>
    %168 = vector.extract_strided_slice %167 {offsets = [0, 0], sizes = [64, 128], strides = [1, 1]} : vector<64x320xf32> to vector<64x128xf32>
    %169 = vector.extract_strided_slice %167 {offsets = [0, 128], sizes = [64, 128], strides = [1, 1]} : vector<64x320xf32> to vector<64x128xf32>
    %170 = vector.extract_strided_slice %167 {offsets = [0, 256], sizes = [64, 64], strides = [1, 1]} : vector<64x320xf32> to vector<64x64xf32>
    %cst_91 = arith.constant 2.000000e+01 : f32
    %171 = vector.broadcast %cst_91 : f32 to vector<64x64xf32>
    %172 = arith.cmpf ogt, %170, %171 : vector<64x64xf32>
    %cst_92 = arith.constant 2.000000e+01 : f32
    %173 = vector.broadcast %cst_92 : f32 to vector<64x64xf32>
    %174 = arith.minimumf %170, %173 : vector<64x64xf32>
    %175 = math.exp %174 : vector<64x64xf32>
    %176 = math.log1p %175 : vector<64x64xf32>
    %177 = arith.select %172, %170, %176 : vector<64x64xi1>, vector<64x64xf32>
    %178 = arith.mulf %168, %169 : vector<64x128xf32>
    %cst_93 = arith.constant dense<0.000000e+00> : vector<64xf32>
    %179 = vector.multi_reduction <add>, %178, %cst_93 [1] : vector<64x128xf32> to vector<64xf32>
    %180 = vector.shape_cast %179 : vector<64xf32> to vector<64x1xf32>
    %181 = arith.mulf %161, %177 : vector<64x64xf32>
    %182 = vector.broadcast %180 : vector<64x1xf32> to vector<64x64xf32>
    %183 = arith.mulf %181, %182 : vector<64x64xf32>
    %184 = arith.negf %183 : vector<64x64xf32>
    %185 = math.exp %184 : vector<64x64xf32>
    %cst_94 = arith.constant 1.000000e+00 : f32
    %186 = vector.broadcast %cst_94 : f32 to vector<64x64xf32>
    %187 = arith.addf %186, %185 : vector<64x64xf32>
    %188 = arith.divf %186, %187 : vector<64x64xf32>
    %189 = arith.mulf %183, %188 : vector<64x64xf32>
    %190 = arith.mulf %189, %129 : vector<64x64xf32>
    %191 = arith.truncf %190 : vector<64x64xf32> to vector<64x64xbf16>
    %c0_95 = arith.constant 0 : index
    %c0_96 = arith.constant 0 : index
    %192 = vector.load %arg29[%c0_95, %c0_96] : memref<64x32xbf16, #tpu.memory_space<vmem>>, vector<64x32xbf16>
    %cst_97 = arith.constant dense<0.000000e+00> : vector<64x32xf32>
    %193 = tpu.matmul %191, %192, %cst_97 {dimension_numbers = #tpu.dot_dimension_numbers<[1], [0], [0], [1], [0, 0, 1, 1], [], []>} : vector<64x64xbf16>, vector<64x32xbf16>, vector<64x32xf32> -> vector<64x32xf32>
    %c0_98 = arith.constant 0 : index
    %c0_99 = arith.constant 0 : index
    %194 = vector.load %arg30[%c0_98, %c0_99] : memref<1x32xf32, #tpu.memory_space<vmem>>, vector<1x32xf32>
    %195 = vector.broadcast %194 : vector<1x32xf32> to vector<64x32xf32>
    %196 = arith.addf %193, %195 : vector<64x32xf32>
    %197 = arith.truncf %196 : vector<64x32xf32> to vector<64x32xbf16>
    %c0_100 = arith.constant 0 : index
    %c0_101 = arith.constant 0 : index
    %198 = vector.load %arg33[%c0_100, %c0_101] : memref<32x64xbf16, #tpu.memory_space<vmem>>, vector<32x64xbf16>
    %cst_102 = arith.constant dense<0.000000e+00> : vector<64x64xf32>
    %199 = tpu.matmul %197, %198, %cst_102 {dimension_numbers = #tpu.dot_dimension_numbers<[1], [0], [0], [1], [0, 0, 1, 1], [], []>} : vector<64x32xbf16>, vector<32x64xbf16>, vector<64x64xf32> -> vector<64x64xf32>
    %c0_103 = arith.constant 0 : index
    %c0_104 = arith.constant 0 : index
    %200 = vector.load %arg34[%c0_103, %c0_104] : memref<64x64xf32, #tpu.memory_space<vmem>>, vector<64x64xf32>
    %201 = arith.mulf %199, %200 : vector<64x64xf32>
    %c0_105 = arith.constant 0 : index
    %c0_106 = arith.constant 0 : index
    %202 = vector.load %arg35[%c0_105, %c0_106] : memref<8x64xbf16, #tpu.memory_space<vmem>>, vector<8x64xbf16>
    %203 = arith.truncf %201 : vector<64x64xf32> to vector<64x64xbf16>
    %cst_107 = arith.constant dense<0.000000e+00> : vector<8x64xf32>
    %204 = tpu.matmul %202, %203, %cst_107 {dimension_numbers = #tpu.dot_dimension_numbers<[1], [0], [0], [1], [0, 0, 1, 1], [], []>} : vector<8x64xbf16>, vector<64x64xbf16>, vector<8x64xf32> -> vector<8x64xf32>
    %205 = arith.truncf %204 : vector<8x64xf32> to vector<8x64xbf16>
    %c0_108 = arith.constant 0 : index
    %c0_109 = arith.constant 0 : index
    %206 = vector.load %arg36[%c0_108, %c0_109] : memref<64x8xbf16, #tpu.memory_space<vmem>>, vector<64x8xbf16>
    %cst_110 = arith.constant dense<0.000000e+00> : vector<8x8xf32>
    %207 = tpu.matmul %205, %206, %cst_110 {dimension_numbers = #tpu.dot_dimension_numbers<[1], [0], [0], [1], [0, 0, 1, 1], [], []>} : vector<8x64xbf16>, vector<64x8xbf16>, vector<8x8xf32> -> vector<8x8xf32>
    %c0_111 = arith.constant 0 : index
    %c0_112 = arith.constant 0 : index
    %208 = vector.load %arg37[%c0_111, %c0_112] : memref<1x8xf32, #tpu.memory_space<vmem>>, vector<1x8xf32>
    %209 = vector.broadcast %208 : vector<1x8xf32> to vector<8x8xf32>
    %210 = arith.addf %207, %209 : vector<8x8xf32>
    %c0_113 = arith.constant 0 : index
    %c0_114 = arith.constant 0 : index
    %211 = vector.load %arg38[%c0_113, %c0_114] : memref<8x8xf32, #tpu.memory_space<vmem>>, vector<8x8xf32>
    tpu.vector_store %arg38[%c0_113, %c0_114], %210 {strides = array<i32>} : memref<8x8xf32, #tpu.memory_space<vmem>>, vector<8x8xf32>,
    return
  }
}

</mosaic_0001>

<llo_original>
// kernel: tfmamba_forward.1
$region0: #{tfmamba_forward.1}
  #allocation0 [shape = 'u32[]', space=smem, size = 0x4, offset = 0x4, fixed_abs, tag = 'smem constant byte address 0x4 - core index']
  #allocation1 [shape = 'u32[144,128]{1,0:T(1,128)}', space=vmem, size = 0x12000, scoped, tag = 'internal scratch']
  %s0 = inlined_call_operand.smem [shape: u32[39], index: -1, kind: input, shape index: {}]
  %s1 = sld [smem:[%s0]]
  %s2 = scalar_lea.smem %s0, 1
  %s3 = sld [smem:[%s2]]
  %s4 = scalar_lea.smem %s0, 2
  %s5 = sld [smem:[%s4]]
  %s6 = scalar_lea.smem %s0, 3
  %s7 = sld [smem:[%s6]]
  %s8 = scalar_lea.smem %s0, 4
  %s9 = sld [smem:[%s8]]
  %s10 = scalar_lea.smem %s0, 5
  %s11 = sld [smem:[%s10]]
  %s12 = scalar_lea.smem %s0, 6
  %s13 = sld [smem:[%s12]]
  %s14 = scalar_lea.smem %s0, 7
  %s15 = sld [smem:[%s14]]
  %s16 = scalar_lea.smem %s0, 8
  %s17 = sld [smem:[%s16]]
  %s18 = scalar_lea.smem %s0, 9
  %s19 = sld [smem:[%s18]]
  %s20 = scalar_lea.smem %s0, 10
  %s21 = sld [smem:[%s20]]
  %s22 = scalar_lea.smem %s0, 11
  %s23 = sld [smem:[%s22]]
  %s24 = scalar_lea.smem %s0, 12
  %s25 = sld [smem:[%s24]]
  %s26 = scalar_lea.smem %s0, 13
  %s27 = sld [smem:[%s26]]
  %s28 = scalar_lea.smem %s0, 14
  %s29 = sld [smem:[%s28]]
  %s30 = scalar_lea.smem %s0, 15
  %s31 = sld [smem:[%s30]]
  %s32 = scalar_lea.smem %s0, 16
  %s33 = sld [smem:[%s32]]
  %s34 = scalar_lea.smem %s0, 17
  %s35 = sld [smem:[%s34]]
  %s36 = scalar_lea.smem %s0, 18
  %s37 = sld [smem:[%s36]]
  %s38 = scalar_lea.smem %s0, 19
  %s39 = sld [smem:[%s38]]
  %s40 = scalar_lea.smem %s0, 20
  %s41 = sld [smem:[%s40]]
  %s42 = scalar_lea.smem %s0, 21
  %s43 = sld [smem:[%s42]]
  %s44 = scalar_lea.smem %s0, 22
  %s45 = sld [smem:[%s44]]
  %s46 = scalar_lea.smem %s0, 23
  %s47 = sld [smem:[%s46]]
  %s48 = scalar_lea.smem %s0, 24
  %s49 = sld [smem:[%s48]]
  %s50 = scalar_lea.smem %s0, 25
  %s51 = sld [smem:[%s50]]
  %s52 = scalar_lea.smem %s0, 26
  %s53 = sld [smem:[%s52]]
  %s54 = scalar_lea.smem %s0, 27
  %s55 = sld [smem:[%s54]]
  %s56 = scalar_lea.smem %s0, 28
  %s57 = sld [smem:[%s56]]
  %s58 = scalar_lea.smem %s0, 29
  %s59 = sld [smem:[%s58]]
  %s60 = scalar_lea.smem %s0, 30
  %s61 = sld [smem:[%s60]]
  %s62 = scalar_lea.smem %s0, 31
  %s63 = sld [smem:[%s62]]
  %s64 = scalar_lea.smem %s0, 32
  %s65 = sld [smem:[%s64]]
  %s66 = scalar_lea.smem %s0, 33
  %s67 = sld [smem:[%s66]]
  %s68 = scalar_lea.smem %s0, 34
  %s69 = sld [smem:[%s68]]
  %s70 = scalar_lea.smem %s0, 35
  %s71 = sld [smem:[%s70]]
  %s72 = scalar_lea.smem %s0, 36
  %s73 = sld [smem:[%s72]]
  %s74 = scalar_lea.smem %s0, 37
  %s75 = sld [smem:[%s74]]
  %s76 = scalar_lea.smem %s0, 38
  %s77 = sld [smem:[%s76]]
  %s78 = sld [smem:[#allocation0]]
  $region162: #{tfmamba_forward.1} parent=0
    _
  %s80 = ssub.s32 1, %s78
  %s81 = scalar_select 0, %s80, %s78
  $region1: #{tfmamba_forward.1} parent=0
    #allocation2 [shape = 'u8[4096]{0}', space=vmem, size = 0x1000, scoped, tag = 'output window, operand 0, single buffered']
    #allocation3 [shape = 's32[1]{0}', space=sflag, size = 0x4, scoped, tag = 'scoped memory for tfmamba_forward.1']
    %82 = vsyncpa [#allocation3], 0
    // Predicated region
    $region2: #{tfmamba_forward.1} parent=1 // pred_check
      _
    $region3: #{tfmamba_forward.1} parent=1 // pred_check_branch
      %84 = sbr.rel (0) target = $region5
    $region4: #{tfmamba_forward.1} parent=1 // pred_region
      _
    $region5: #{tfmamba_forward.1} parent=1 // pred_fallthru
      _
    // Predicated region
    $region6: #{tfmamba_forward.1} parent=1 // pred_check
      _
    $region7: #{tfmamba_forward.1} parent=1 // pred_check_branch
      %86 = sbr.rel (0) target = $region9
    $region8: #{tfmamba_forward.1} parent=1 // pred_region
      _
    $region9: #{tfmamba_forward.1} parent=1 // pred_fallthru
      _
    // Predicated region
    $region10: #{tfmamba_forward.1} parent=1 // pred_check
      _
    $region11: #{tfmamba_forward.1} parent=1 // pred_check_branch
      %88 = sbr.rel (0) target = $region13
    $region12: #{tfmamba_forward.1} parent=1 // pred_region
      _
    $region13: #{tfmamba_forward.1} parent=1 // pred_fallthru
      _
    // Predicated region
    $region14: #{tfmamba_forward.1} parent=1 // pred_check
      _
    $region15: #{tfmamba_forward.1} parent=1 // pred_check_branch
      %90 = sbr.rel (0) target = $region17
    $region16: #{tfmamba_forward.1} parent=1 // pred_region
      _
    $region17: #{tfmamba_forward.1} parent=1 // pred_fallthru
      _
    // Predicated region
    $region18: #{tfmamba_forward.1} parent=1 // pred_check
      _
    $region19: #{tfmamba_forward.1} parent=1 // pred_check_branch
      %92 = sbr.rel (0) target = $region21
    $region20: #{tfmamba_forward.1} parent=1 // pred_region
      _
    $region21: #{tfmamba_forward.1} parent=1 // pred_fallthru
      _
    // Predicated region
    $region22: #{tfmamba_forward.1} parent=1 // pred_check
      _
    $region23: #{tfmamba_forward.1} parent=1 // pred_check_branch
      %94 = sbr.rel (0) target = $region25
    $region24: #{tfmamba_forward.1} parent=1 // pred_region
      _
    $region25: #{tfmamba_forward.1} parent=1 // pred_fallthru
      _
    // Predicated region
    $region26: #{tfmamba_forward.1} parent=1 // pred_check
      _
    $region27: #{tfmamba_forward.1} parent=1 // pred_check_branch
      %96 = sbr.rel (0) target = $region29
    $region28: #{tfmamba_forward.1} parent=1 // pred_region
      _
    $region29: #{tfmamba_forward.1} parent=1 // pred_fallthru
      _
    // Predicated region
    $region30: #{tfmamba_forward.1} parent=1 // pred_check
      _
    $region31: #{tfmamba_forward.1} parent=1 // pred_check_branch
      %98 = sbr.rel (0) target = $region33
    $region32: #{tfmamba_forward.1} parent=1 // pred_region
      _
    $region33: #{tfmamba_forward.1} parent=1 // pred_fallthru
      _
    // Predicated region
    $region34: #{tfmamba_forward.1} parent=1 // pred_check
      _
    $region35: #{tfmamba_forward.1} parent=1 // pred_check_branch
      %100 = sbr.rel (0) target = $region37
    $region36: #{tfmamba_forward.1} parent=1 // pred_region
      _
    $region37: #{tfmamba_forward.1} parent=1 // pred_fallthru
      _
    // Predicated region
    $region38: #{tfmamba_forward.1} parent=1 // pred_check
      _
    $region39: #{tfmamba_forward.1} parent=1 // pred_check_branch
      %102 = sbr.rel (0) target = $region41
    $region40: #{tfmamba_forward.1} parent=1 // pred_region
      _
    $region41: #{tfmamba_forward.1} parent=1 // pred_fallthru
      _
    // Predicated region
    $region42: #{tfmamba_forward.1} parent=1 // pred_check
      _
    $region43: #{tfmamba_forward.1} parent=1 // pred_check_branch
      %104 = sbr.rel (0) target = $region45
    $region44: #{tfmamba_forward.1} parent=1 // pred_region
      _
    $region45: #{tfmamba_forward.1} parent=1 // pred_fallthru
      _
    // Predicated region
    $region46: #{tfmamba_forward.1} parent=1 // pred_check
      _
    $region47: #{tfmamba_forward.1} parent=1 // pred_check_branch
      %106 = sbr.rel (0) target = $region49
    $region48: #{tfmamba_forward.1} parent=1 // pred_region
      _
    $region49: #{tfmamba_forward.1} parent=1 // pred_fallthru
      _
    // Predicated region
    $region50: #{tfmamba_forward.1} parent=1 // pred_check
      _
    $region51: #{tfmamba_forward.1} parent=1 // pred_check_branch
      %108 = sbr.rel (0) target = $region53
    $region52: #{tfmamba_forward.1} parent=1 // pred_region
      _
    $region53: #{tfmamba_forward.1} parent=1 // pred_fallthru
      _
    // Predicated region
    $region54: #{tfmamba_forward.1} parent=1 // pred_check
      _
    $region55: #{tfmamba_forward.1} parent=1 // pred_check_branch
      %110 = sbr.rel (0) target = $region57
    $region56: #{tfmamba_forward.1} parent=1 // pred_region
      _
    $region57: #{tfmamba_forward.1} parent=1 // pred_fallthru
      _
    // Predicated region
    $region58: #{tfmamba_forward.1} parent=1 // pred_check
      _
    $region59: #{tfmamba_forward.1} parent=1 // pred_check_branch
      %112 = sbr.rel (0) target = $region61
    $region60: #{tfmamba_forward.1} parent=1 // pred_region
      _
    $region61: #{tfmamba_forward.1} parent=1 // pred_fallthru
      _
    // Predicated region
    $region62: #{tfmamba_forward.1} parent=1 // pred_check
      _
    $region63: #{tfmamba_forward.1} parent=1 // pred_check_branch
      %114 = sbr.rel (0) target = $region65
    $region64: #{tfmamba_forward.1} parent=1 // pred_region
      _
    $region65: #{tfmamba_forward.1} parent=1 // pred_fallthru
      _
    // Predicated region
    $region66: #{tfmamba_forward.1} parent=1 // pred_check
      _
    $region67: #{tfmamba_forward.1} parent=1 // pred_check_branch
      %116 = sbr.rel (0) target = $region69
    $region68: #{tfmamba_forward.1} parent=1 // pred_region
      _
    $region69: #{tfmamba_forward.1} parent=1 // pred_fallthru
      _
    // Predicated region
    $region70: #{tfmamba_forward.1} parent=1 // pred_check
      _
    $region71: #{tfmamba_forward.1} parent=1 // pred_check_branch
      %118 = sbr.rel (0) target = $region73
    $region72: #{tfmamba_forward.1} parent=1 // pred_region
      _
    $region73: #{tfmamba_forward.1} parent=1 // pred_fallthru
      _
    // Predicated region
    $region74: #{tfmamba_forward.1} parent=1 // pred_check
      _
    $region75: #{tfmamba_forward.1} parent=1 // pred_check_branch
      %120 = sbr.rel (0) target = $region77
    $region76: #{tfmamba_forward.1} parent=1 // pred_region
      _
    $region77: #{tfmamba_forward.1} parent=1 // pred_fallthru
      _
    // Predicated region
    $region78: #{tfmamba_forward.1} parent=1 // pred_check
      _
    $region79: #{tfmamba_forward.1} parent=1 // pred_check_branch
      %122 = sbr.rel (0) target = $region81
    $region80: #{tfmamba_forward.1} parent=1 // pred_region
      _
    $region81: #{tfmamba_forward.1} parent=1 // pred_fallthru
      _
    // Predicated region
    $region82: #{tfmamba_forward.1} parent=1 // pred_check
      _
    $region83: #{tfmamba_forward.1} parent=1 // pred_check_branch
      %124 = sbr.rel (0) target = $region85
    $region84: #{tfmamba_forward.1} parent=1 // pred_region
      _
    $region85: #{tfmamba_forward.1} parent=1 // pred_fallthru
      _
    // Predicated region
    $region86: #{tfmamba_forward.1} parent=1 // pred_check
      _
    $region87: #{tfmamba_forward.1} parent=1 // pred_check_branch
      %126 = sbr.rel (0) target = $region89
    $region88: #{tfmamba_forward.1} parent=1 // pred_region
      _
    $region89: #{tfmamba_forward.1} parent=1 // pred_fallthru
      _
    // Predicated region
    $region90: #{tfmamba_forward.1} parent=1 // pred_check
      _
    $region91: #{tfmamba_forward.1} parent=1 // pred_check_branch
      %128 = sbr.rel (0) target = $region93
    $region92: #{tfmamba_forward.1} parent=1 // pred_region
      _
    $region93: #{tfmamba_forward.1} parent=1 // pred_fallthru
      _
    // Predicated region
    $region94: #{tfmamba_forward.1} parent=1 // pred_check
      _
    $region95: #{tfmamba_forward.1} parent=1 // pred_check_branch
      %130 = sbr.rel (0) target = $region97
    $region96: #{tfmamba_forward.1} parent=1 // pred_region
      _
    $region97: #{tfmamba_forward.1} parent=1 // pred_fallthru
      _
    // Predicated region
    $region98: #{tfmamba_forward.1} parent=1 // pred_check
      _
    $region99: #{tfmamba_forward.1} parent=1 // pred_check_branch
      %132 = sbr.rel (0) target = $region101
    $region100: #{tfmamba_forward.1} parent=1 // pred_region
      _
    $region101: #{tfmamba_forward.1} parent=1 // pred_fallthru
      _
    // Predicated region
    $region102: #{tfmamba_forward.1} parent=1 // pred_check
      _
    $region103: #{tfmamba_forward.1} parent=1 // pred_check_branch
      %134 = sbr.rel (0) target = $region105
    $region104: #{tfmamba_forward.1} parent=1 // pred_region
      _
    $region105: #{tfmamba_forward.1} parent=1 // pred_fallthru
      _
    // Predicated region
    $region106: #{tfmamba_forward.1} parent=1 // pred_check
      _
    $region107: #{tfmamba_forward.1} parent=1 // pred_check_branch
      %136 = sbr.rel (0) target = $region109
    $region108: #{tfmamba_forward.1} parent=1 // pred_region
      _
    $region109: #{tfmamba_forward.1} parent=1 // pred_fallthru
      _
    // Predicated region
    $region110: #{tfmamba_forward.1} parent=1 // pred_check
      _
    $region111: #{tfmamba_forward.1} parent=1 // pred_check_branch
      %138 = sbr.rel (0) target = $region113
    $region112: #{tfmamba_forward.1} parent=1 // pred_region
      _
    $region113: #{tfmamba_forward.1} parent=1 // pred_fallthru
      _
    // Predicated region
    $region114: #{tfmamba_forward.1} parent=1 // pred_check
      _
    $region115: #{tfmamba_forward.1} parent=1 // pred_check_branch
      %140 = sbr.rel (0) target = $region117
    $region116: #{tfmamba_forward.1} parent=1 // pred_region
      _
    $region117: #{tfmamba_forward.1} parent=1 // pred_fallthru
      _
    // Predicated region
    $region118: #{tfmamba_forward.1} parent=1 // pred_check
      _
    $region119: #{tfmamba_forward.1} parent=1 // pred_check_branch
      %142 = sbr.rel (0) target = $region121
    $region120: #{tfmamba_forward.1} parent=1 // pred_region
      _
    $region121: #{tfmamba_forward.1} parent=1 // pred_fallthru
      _
    // Predicated region
    $region122: #{tfmamba_forward.1} parent=1 // pred_check
      _
    $region123: #{tfmamba_forward.1} parent=1 // pred_check_branch
      %144 = sbr.rel (0) target = $region125
    $region124: #{tfmamba_forward.1} parent=1 // pred_region
      _
    $region125: #{tfmamba_forward.1} parent=1 // pred_fallthru
      _
    // Predicated region
    $region126: #{tfmamba_forward.1} parent=1 // pred_check
      _
    $region127: #{tfmamba_forward.1} parent=1 // pred_check_branch
      %146 = sbr.rel (0) target = $region129
    $region128: #{tfmamba_forward.1} parent=1 // pred_region
      _
    $region129: #{tfmamba_forward.1} parent=1 // pred_fallthru
      _
    // Predicated region
    $region130: #{tfmamba_forward.1} parent=1 // pred_check
      _
    $region131: #{tfmamba_forward.1} parent=1 // pred_check_branch
      %148 = sbr.rel (0) target = $region133
    $region132: #{tfmamba_forward.1} parent=1 // pred_region
      _
    $region133: #{tfmamba_forward.1} parent=1 // pred_fallthru
      _
    // Predicated region
    $region134: #{tfmamba_forward.1} parent=1 // pred_check
      _
    $region135: #{tfmamba_forward.1} parent=1 // pred_check_branch
      %150 = sbr.rel (0) target = $region137
    $region136: #{tfmamba_forward.1} parent=1 // pred_region
      _
    $region137: #{tfmamba_forward.1} parent=1 // pred_fallthru
      _
    // Predicated region
    $region138: #{tfmamba_forward.1} parent=1 // pred_check
      _
    $region139: #{tfmamba_forward.1} parent=1 // pred_check_branch
      %152 = sbr.rel (0) target = $region141
    $region140: #{tfmamba_forward.1} parent=1 // pred_region
      _
    $region141: #{tfmamba_forward.1} parent=1 // pred_fallthru
      _
    // Predicated region
    $region142: #{tfmamba_forward.1} parent=1 // pred_check
      _
    $region143: #{tfmamba_forward.1} parent=1 // pred_check_branch
      %154 = sbr.rel (0) target = $region145
    $region144: #{tfmamba_forward.1} parent=1 // pred_region
      _
    $region145: #{tfmamba_forward.1} parent=1 // pred_fallthru
      _
    // Predicated region
    $region146: #{tfmamba_forward.1} parent=1 // pred_check
      _
    $region147: #{tfmamba_forward.1} parent=1 // pred_check_branch
      %156 = sbr.rel (0) target = $region149
    $region148: #{tfmamba_forward.1} parent=1 // pred_region
      _
    $region149: #{tfmamba_forward.1} parent=1 // pred_fallthru
      _
    // Predicated region
    $region150: #{tfmamba_forward.1} parent=1 // pred_check
      _
    $region151: #{tfmamba_forward.1} parent=1 // pred_check_branch
      %158 = sbr.rel (0) target = $region153
    $region152: #{tfmamba_forward.1} parent=1 // pred_region
      _
    $region153: #{tfmamba_forward.1} parent=1 // pred_fallthru
      _
    %v160 = vld [vmem:[%s63] sm:$0x1]
    %v161 = vld [vmem:[%s65] sm:$0x1]
    %v162 = vld [vmem:[%s1] sm:$0xff]
    %v163 = vld [vmem:[%s1 + $0x8] sm:$0xff]
    %v164 = vld [vmem:[%s1 + $0x10] sm:$0xff]
    %v165 = vld [vmem:[%s1 + $0x18] sm:$0xff]
    %v166 = vld [vmem:[%s1 + $0x20] sm:$0xff]
    %v167 = vld [vmem:[%s1 + $0x28] sm:$0xff]
    %v168 = vld [vmem:[%s1 + $0x30] sm:$0xff]
    %v169 = vld [vmem:[%s1 + $0x38] sm:$0xff]
    %v170 = vmul.f32 %v162, %v162
    %v171 = vmul.f32 %v163, %v163
    %v172 = vmul.f32 %v164, %v164
    %v173 = vmul.f32 %v165, %v165
    %v174 = vmul.f32 %v166, %v166
    %v175 = vmul.f32 %v167, %v167
    %v176 = vmul.f32 %v168, %v168
    %v177 = vmul.f32 %v169, %v169
    %vm178 = vcmask 261120
    %v179 = vsel %vm178, %v170, 0.0
    %180 = vadd.xlane.f32.xlu0 %v179
    %v181 = vpop.xlane.xlu0 %180
    %v182 = vsel %vm178, %v171, 0.0
    %183 = vadd.xlane.f32.xlu0 %v182
    %v184 = vpop.xlane.xlu0 %183
    %v185 = vsel %vm178, %v172, 0.0
    %186 = vadd.xlane.f32.xlu0 %v185
    %v187 = vpop.xlane.xlu0 %186
    %v188 = vsel %vm178, %v173, 0.0
    %189 = vadd.xlane.f32.xlu0 %v188
    %v190 = vpop.xlane.xlu0 %189
    %v191 = vsel %vm178, %v174, 0.0
    %192 = vadd.xlane.f32.xlu0 %v191
    %v193 = vpop.xlane.xlu0 %192
    %v194 = vsel %vm178, %v175, 0.0
    %195 = vadd.xlane.f32.xlu0 %v194
    %v196 = vpop.xlane.xlu0 %195
    %v197 = vsel %vm178, %v176, 0.0
    %198 = vadd.xlane.f32.xlu0 %v197
    %v199 = vpop.xlane.xlu0 %198
    %v200 = vsel %vm178, %v177, 0.0
    %201 = vadd.xlane.f32.xlu0 %v200
    %v202 = vpop.xlane.xlu0 %201
    %v203 = vrcp.pop 32.0
    %v204 = vmul.f32 %v181, %v203
    %v205 = vmul.f32 %v184, %v203
    %v206 = vmul.f32 %v187, %v203
    %v207 = vmul.f32 %v190, %v203
    %v208 = vmul.f32 %v193, %v203
    %v209 = vmul.f32 %v196, %v203
    %v210 = vmul.f32 %v199, %v203
    %v211 = vmul.f32 %v202, %v203
    %v212 = vadd.f32 %v204, 1e-05
    %v213 = vadd.f32 %v205, 1e-05
    %v214 = vadd.f32 %v206, 1e-05
    %v215 = vadd.f32 %v207, 1e-05
    %v216 = vadd.f32 %v208, 1e-05
    %v217 = vadd.f32 %v209, 1e-05
    %v218 = vadd.f32 %v210, 1e-05
    %v219 = vadd.f32 %v211, 1e-05
    %v220 = vrsqrt.pop %v212
    %v221 = vrsqrt.pop %v213
    %v222 = vrsqrt.pop %v214
    %v223 = vrsqrt.pop %v215
    %v224 = vrsqrt.pop %v216
    %v225 = vrsqrt.pop %v217
    %v226 = vrsqrt.pop %v218
    %v227 = vrsqrt.pop %v219
    %v228 = vmul.f32 %v162, %v220
    %v229 = vmul.f32 %v163, %v221
    %v230 = vmul.f32 %v164, %v222
    %v231 = vmul.f32 %v165, %v223
    %v232 = vmul.f32 %v166, %v224
    %v233 = vmul.f32 %v167, %v225
    %v234 = vmul.f32 %v168, %v226
    %v235 = vmul.f32 %v169, %v227
    %v236 = vld [vmem:[%s3] sm:$0x1]
    %v238 = vlaneseq
    %v239 = vshrl.u32 %v238, 7
    %v240 = vsub.s32 0, %v239
    %v241 = vrot.slane %v236, %v240
    %v243 = vmul.f32 %v228, %v241
    %v244 = vmul.f32 %v229, %v241
    %v245 = vmul.f32 %v230, %v241
    %v246 = vmul.f32 %v231, %v241
    %v247 = vmul.f32 %v232, %v241
    %v248 = vmul.f32 %v233, %v241
    %v249 = vmul.f32 %v234, %v241
    %v250 = vmul.f32 %v235, %v241
    %v251 = vpack.c.bf16 %v244, %v243
    %v252 = vpack.c.bf16 %v246, %v245
    %v253 = vpack.c.bf16 %v248, %v247
    %v254 = vpack.c.bf16 %v250, %v249
    %v255 = vld [vmem:[%s5] sm:$0xf]
    %v256 = vld [vmem:[%s5 + $0x4] sm:$0xf]
    %v257 = vld [vmem:[%s5 + $0x8] sm:$0xf]
    %v258 = vld [vmem:[%s5 + $0xc] sm:$0xf]
    %v259 = vld [vmem:[%s7] sm:$0x1]
    %v261 = vlaneseq
    %v262 = vshrl.u32 %v261, 7
    %v263 = vsub.s32 0, %v262
    %v264 = vrot.slane %v259, %v263
    %v270 = vunpack.c.l.b16 %v255
    %v271 = vunpack.c.l.b16 %v256
    %v272 = vunpack.c.l.b16 %v257
    %v273 = vunpack.c.l.b16 %v258
    %v274 = vpack.c.b16 %v271, %v270
    %v275 = vpack.c.b16 %v273, %v272
    %v279 = vsel %vm178, %v251, 0
    %v282 = vsel %vm178, %v252, 0
    %v285 = vsel %vm178, %v253, 0
    %v288 = vsel %vm178, %v254, 0
    %290 = vmatprep.subr.bf16.mxu0 0
    %291 = vmatpush1.bf16.msra.mxu0 %v274
    %292 = vmatprep.subr.bf16.mxu0 0
    %293 = vmatpush1.bf16.msra.mxu0 %v275
    %294 = vmatprep.subr.bf16.mxu0 0
    %295 = vmatpush1.bf16.msra.mxu0 0
    %296 = vmatprep.subr.bf16.mxu0 0
    %297 = vmatpush1.bf16.msra.mxu0 0
    %298 = vmatprep.subr.bf16.mxu0 0
    %299 = vmatpush1.bf16.msra.mxu0 0
    %300 = vmatprep.subr.bf16.mxu0 0
    %301 = vmatpush1.bf16.msra.mxu0 0
    %302 = vmatprep.subr.bf16.mxu0 0
    %303 = vmatpush1.bf16.msra.mxu0 0
    %304 = vmatprep.subr.bf16.mxu0 0
    %305 = vmatpush1.bf16.msra.mxu0 0
    %306 = vmatprep.subr.bf16.mxu0 0
    %307 = vmatpush1.bf16.msra.mxu0 0
    %308 = vmatprep.subr.bf16.mxu0 0
    %309 = vmatpush1.bf16.msra.mxu0 0
    %310 = vmatprep.subr.bf16.mxu0 0
    %311 = vmatpush1.bf16.msra.mxu0 0
    %312 = vmatprep.subr.bf16.mxu0 0
    %313 = vmatpush1.bf16.msra.mxu0 0
    %314 = vmatprep.subr.bf16.mxu0 0
    %315 = vmatpush1.bf16.msra.mxu0 0
    %316 = vmatprep.subr.bf16.mxu0 0
    %317 = vmatpush1.bf16.msra.mxu0 0
    %318 = vmatprep.subr.bf16.mxu0 0
    %319 = vmatpush1.bf16.msra.mxu0 0
    %320 = vmatprep.subr.bf16.mxu0 0
    %321 = vmatpush1.bf16.msra.mxu0 0
    %322 = vmatprep.mubr.bf16.mxu0 0
    %323 = vmatmul.mubr.bf16.gmra.mrb[0].mxu0 %v279
    %v324 = vpop.f32.mrb[0].mxu0
    %v325 = vadd.f32 %v264, %v324
    %v326 = vpop.f32.mrb[0].mxu0
    %v327 = vpop.f32.mrb[0].mxu0
    %v328 = vadd.f32 %v264, %v327
    %v329 = vpop.f32.mrb[0].mxu0
    %330 = vmatprep.mubr.bf16.mxu0 0
    %331 = vmatmul.mubr.bf16.gmra.mrb[0].mxu0 %v282
    %v332 = vpop.f32.mrb[0].mxu0
    %v333 = vadd.f32 %v264, %v332
    %v334 = vpop.f32.mrb[0].mxu0
    %v335 = vpop.f32.mrb[0].mxu0
    %v336 = vadd.f32 %v264, %v335
    %v337 = vpop.f32.mrb[0].mxu0
    %338 = vmatprep.mubr.bf16.mxu0 0
    %339 = vmatmul.mubr.bf16.gmra.mrb[0].mxu0 %v285
    %v340 = vpop.f32.mrb[0].mxu0
    %v341 = vadd.f32 %v264, %v340
    %v342 = vpop.f32.mrb[0].mxu0
    %v343 = vpop.f32.mrb[0].mxu0
    %v344 = vadd.f32 %v264, %v343
    %v345 = vpop.f32.mrb[0].mxu0
    %346 = vmatprep.mubr.bf16.mxu0 0
    %347 = vmatmul.mubr.bf16.gmra.mrb[0].mxu0 %v288
    %v348 = vpop.f32.mrb[0].mxu0
    %v349 = vadd.f32 %v264, %v348
    %v350 = vpop.f32.mrb[0].mxu0
    %v351 = vpop.f32.mrb[0].mxu0
    %v352 = vadd.f32 %v264, %v351
    %v353 = vpop.f32.mrb[0].mxu0
    %354 = vdwg.mxu0
    %v355 = vld [vmem:[%s9] sm:$0xf]
    %v356 = vld [vmem:[%s9 + $0x4] sm:$0xf]
    %v357 = vld [vmem:[%s9 + $0x8] sm:$0xf]
    %v358 = vld [vmem:[%s9 + $0xc] sm:$0xf]
    %v359 = vld [vmem:[%s11] sm:$0x1]
    %v361 = vlaneseq
    %v362 = vshrl.u32 %v361, 7
    %v363 = vsub.s32 0, %v362
    %v364 = vrot.slane %v359, %v363
    %v370 = vunpack.c.l.b16 %v355
    %v371 = vunpack.c.l.b16 %v356
    %v372 = vunpack.c.l.b16 %v357
    %v373 = vunpack.c.l.b16 %v358
    %v374 = vpack.c.b16 %v371, %v370
    %v375 = vpack.c.b16 %v373, %v372
    %378 = vmatprep.subr.bf16.mxu0 0
    %379 = vmatpush1.bf16.msra.mxu0 %v374
    %380 = vmatprep.subr.bf16.mxu0 0
    %381 = vmatpush1.bf16.msra.mxu0 %v375
    %382 = vmatprep.subr.bf16.mxu0 0
    %383 = vmatpush1.bf16.msra.mxu0 0
    %384 = vmatprep.subr.bf16.mxu0 0
    %385 = vmatpush1.bf16.msra.mxu0 0
    %386 = vmatprep.subr.bf16.mxu0 0
    %387 = vmatpush1.bf16.msra.mxu0 0
    %388 = vmatprep.subr.bf16.mxu0 0
    %389 = vmatpush1.bf16.msra.mxu0 0
    %390 = vmatprep.subr.bf16.mxu0 0
    %391 = vmatpush1.bf16.msra.mxu0 0
    %392 = vmatprep.subr.bf16.mxu0 0
    %393 = vmatpush1.bf16.msra.mxu0 0
    %394 = vmatprep.subr.bf16.mxu0 0
    %395 = vmatpush1.bf16.msra.mxu0 0
    %396 = vmatprep.subr.bf16.mxu0 0
    %397 = vmatpush1.bf16.msra.mxu0 0
    %398 = vmatprep.subr.bf16.mxu0 0
    %399 = vmatpush1.bf16.msra.mxu0 0
    %400 = vmatprep.subr.bf16.mxu0 0
    %401 = vmatpush1.bf16.msra.mxu0 0
    %402 = vmatprep.subr.bf16.mxu0 0
    %403 = vmatpush1.bf16.msra.mxu0 0
    %404 = vmatprep.subr.bf16.mxu0 0
    %405 = vmatpush1.bf16.msra.mxu0 0
    %406 = vmatprep.subr.bf16.mxu0 0
    %407 = vmatpush1.bf16.msra.mxu0 0
    %408 = vmatprep.subr.bf16.mxu0 0
    %409 = vmatpush1.bf16.msra.mxu0 0
    %410 = vmatprep.mubr.bf16.mxu0 0
    %411 = vmatmul.mubr.bf16.gmra.mrb[0].mxu0 %v279
    %v412 = vpop.f32.mrb[0].mxu0
    %v413 = vadd.f32 %v364, %v412
    %v414 = vpop.f32.mrb[0].mxu0
    %v415 = vpop.f32.mrb[0].mxu0
    %v416 = vadd.f32 %v364, %v415
    %v417 = vpop.f32.mrb[0].mxu0
    %418 = vmatprep.mubr.bf16.mxu0 0
    %419 = vmatmul.mubr.bf16.gmra.mrb[0].mxu0 %v282
    %v420 = vpop.f32.mrb[0].mxu0
    %v421 = vadd.f32 %v364, %v420
    %v422 = vpop.f32.mrb[0].mxu0
    %v423 = vpop.f32.mrb[0].mxu0
    %v424 = vadd.f32 %v364, %v423
    %v425 = vpop.f32.mrb[0].mxu0
    %426 = vmatprep.mubr.bf16.mxu0 0
    %427 = vmatmul.mubr.bf16.gmra.mrb[0].mxu0 %v285
    %v428 = vpop.f32.mrb[0].mxu0
    %v429 = vadd.f32 %v364, %v428
    %v430 = vpop.f32.mrb[0].mxu0
    %v431 = vpop.f32.mrb[0].mxu0
    %v432 = vadd.f32 %v364, %v431
    %v433 = vpop.f32.mrb[0].mxu0
    %434 = vmatprep.mubr.bf16.mxu0 0
    %435 = vmatmul.mubr.bf16.gmra.mrb[0].mxu0 %v288
    %v436 = vpop.f32.mrb[0].mxu0
    %v437 = vadd.f32 %v364, %v436
    %v438 = vpop.f32.mrb[0].mxu0
    %v439 = vpop.f32.mrb[0].mxu0
    %v440 = vadd.f32 %v364, %v439
    %v441 = vpop.f32.mrb[0].mxu0
    %442 = vdwg.mxu0
    %v443 = vxor.u32 %v413, 2147483648
    %v444 = vxor.u32 %v416, 2147483648
    %v445 = vxor.u32 %v421, 2147483648
    %v446 = vxor.u32 %v424, 2147483648
    %v447 = vxor.u32 %v429, 2147483648
    %v448 = vxor.u32 %v432, 2147483648
    %v449 = vxor.u32 %v437, 2147483648
    %v450 = vxor.u32 %v440, 2147483648
    %v451 = vmul.f32 %v443, 1.442695
    %v452 = vpow.pop %v451
    %v453 = vmul.f32 %v444, 1.442695
    %v454 = vpow.pop %v453
    %v455 = vmul.f32 %v445, 1.442695
    %v456 = vpow.pop %v455
    %v457 = vmul.f32 %v446, 1.442695
    %v458 = vpow.pop %v457
    %v459 = vmul.f32 %v447, 1.442695
    %v460 = vpow.pop %v459
    %v461 = vmul.f32 %v448, 1.442695
    %v462 = vpow.pop %v461
    %v463 = vmul.f32 %v449, 1.442695
    %v464 = vpow.pop %v463
    %v465 = vmul.f32 %v450, 1.442695
    %v466 = vpow.pop %v465
    %v467 = vadd.f32 %v452, 1.0
    %v468 = vadd.f32 %v454, 1.0
    %v469 = vadd.f32 %v456, 1.0
    %v470 = vadd.f32 %v458, 1.0
    %v471 = vadd.f32 %v460, 1.0
    %v472 = vadd.f32 %v462, 1.0
    %v473 = vadd.f32 %v464, 1.0
    %v474 = vadd.f32 %v466, 1.0
    %v475 = vrcp.pop %v467
    %v476 = vmul.f32 1.0, %v475
    %v477 = vrcp.pop %v468
    %v478 = vmul.f32 1.0, %v477
    %v479 = vrcp.pop %v469
    %v480 = vmul.f32 1.0, %v479
    %v481 = vrcp.pop %v470
    %v482 = vmul.f32 1.0, %v481
    %v483 = vrcp.pop %v471
    %v484 = vmul.f32 1.0, %v483
    %v485 = vrcp.pop %v472
    %v486 = vmul.f32 1.0, %v485
    %v487 = vrcp.pop %v473
    %v488 = vmul.f32 1.0, %v487
    %v489 = vrcp.pop %v474
    %v490 = vmul.f32 1.0, %v489
    %v491 = vmul.f32 %v413, %v476
    %v492 = vmul.f32 %v416, %v478
    %v493 = vmul.f32 %v421, %v480
    %v494 = vmul.f32 %v424, %v482
    %v495 = vmul.f32 %v429, %v484
    %v496 = vmul.f32 %v432, %v486
    %v497 = vmul.f32 %v437, %v488
    %v498 = vmul.f32 %v440, %v490
    %vm499 = vcmask 1048064
    %500 = vrot.lane.b32.xlu0 %v325, 64
    %v501 = vpop.permute.xlu0 %500
    %v502 = vsel %vm499, %v501, %v325
    %503 = vrot.lane.b32.xlu0 %v328, 64
    %v504 = vpop.permute.xlu0 %503
    %v505 = vsel %vm499, %v504, %v328
    %506 = vrot.lane.b32.xlu0 %v333, 64
    %v507 = vpop.permute.xlu0 %506
    %v508 = vsel %vm499, %v507, %v333
    %509 = vrot.lane.b32.xlu0 %v336, 64
    %v510 = vpop.permute.xlu0 %509
    %v511 = vsel %vm499, %v510, %v336
    %512 = vrot.lane.b32.xlu0 %v341, 64
    %v513 = vpop.permute.xlu0 %512
    %v514 = vsel %vm499, %v513, %v341
    %515 = vrot.lane.b32.xlu0 %v344, 64
    %v516 = vpop.permute.xlu0 %515
    %v517 = vsel %vm499, %v516, %v344
    %518 = vrot.lane.b32.xlu0 %v349, 64
    %v519 = vpop.permute.xlu0 %518
    %v520 = vsel %vm499, %v519, %v349
    %521 = vrot.lane.b32.xlu0 %v352, 64
    %v522 = vpop.permute.xlu0 %521
    %v523 = vsel %vm499, %v522, %v352
    %524 = vrot.lane.b32.xlu0 %v502, 64
    %v525 = vpop.permute.xlu0 %524
    %526 = vrot.lane.b32.xlu0 %v505, 64
    %v527 = vpop.permute.xlu0 %526
    %528 = vrot.lane.b32.xlu0 %v508, 64
    %v529 = vpop.permute.xlu0 %528
    %530 = vrot.lane.b32.xlu0 %v511, 64
    %v531 = vpop.permute.xlu0 %530
    %532 = vrot.lane.b32.xlu0 %v514, 64
    %v533 = vpop.permute.xlu0 %532
    %534 = vrot.lane.b32.xlu0 %v517, 64
    %v535 = vpop.permute.xlu0 %534
    %536 = vrot.lane.b32.xlu0 %v520, 64
    %v537 = vpop.permute.xlu0 %536
    %538 = vrot.lane.b32.xlu0 %v523, 64
    %v539 = vpop.permute.xlu0 %538
    %v540 = vsel %vm499, %v525, %v325
    %v541 = vsel %vm499, %v527, %v328
    %v542 = vsel %vm499, %v529, %v333
    %v543 = vsel %vm499, %v531, %v336
    %v544 = vsel %vm499, %v533, %v341
    %v545 = vsel %vm499, %v535, %v344
    %v546 = vsel %vm499, %v537, %v349
    %v547 = vsel %vm499, %v539, %v352
    %v549 = vlaneseq
    %v550 = vshrl.u32 %v549, 7
    %v551 = vsub.s32 0, %v550
    %v552 = vrot.slane %v160, %v551
    %553 = vrot.lane.b32.xlu0 %v552, 63
    %v554 = vpop.permute.xlu0 %553
    %v556 = vmul.f32 %v540, %v554
    %v557 = vmul.f32 %v541, %v554
    %v558 = vmul.f32 %v542, %v554
    %v559 = vmul.f32 %v543, %v554
    %v560 = vmul.f32 %v544, %v554
    %v561 = vmul.f32 %v545, %v554
    %v562 = vmul.f32 %v546, %v554
    %v563 = vmul.f32 %v547, %v554
    %v565 = vlaneseq
    %v566 = vshrl.u32 %v565, 7
    %v567 = vsub.s32 0, %v566
    %v568 = vrot.slane %v161, %v567
    %569 = vrot.lane.b32.xlu0 %v568, 1
    %v570 = vpop.permute.xlu0 %569
    %v572 = vmul.f32 %v540, %v570
    %v573 = vmul.f32 %v541, %v570
    %v574 = vmul.f32 %v542, %v570
    %v575 = vmul.f32 %v543, %v570
    %v576 = vmul.f32 %v544, %v570
    %v577 = vmul.f32 %v545, %v570
    %v578 = vmul.f32 %v546, %v570
    %v579 = vmul.f32 %v547, %v570
    %v580 = vld [vmem:[%s13] sm:$0xf]
    %v581 = vld [vmem:[%s13 + $0x4] sm:$0xf]
    %v582 = vld [vmem:[%s13 + $0x8] sm:$0xf]
    %v583 = vld [vmem:[%s13 + $0xc] sm:$0xf]
    %v584 = vld [vmem:[%s13 + $0x10] sm:$0xf]
    %v585 = vld [vmem:[%s13 + $0x14] sm:$0xf]
    %v586 = vld [vmem:[%s13 + $0x18] sm:$0xf]
    %v587 = vld [vmem:[%s13 + $0x1c] sm:$0xf]
    %v588 = vpack.c.bf16 %v557, %v556
    %v589 = vpack.c.bf16 %v559, %v558
    %v590 = vpack.c.bf16 %v561, %v560
    %v591 = vpack.c.bf16 %v563, %v562
    %v592 = vld [vmem:[%s15] sm:$0xf]
    %v593 = vld [vmem:[%s15 + $0x4] sm:$0xf]
    %v594 = vld [vmem:[%s15 + $0x8] sm:$0xf]
    %v595 = vld [vmem:[%s15 + $0xc] sm:$0xf]
    %v596 = vld [vmem:[%s15 + $0x10] sm:$0xf]
    %v597 = vld [vmem:[%s15 + $0x14] sm:$0xf]
    %v598 = vld [vmem:[%s15 + $0x18] sm:$0xf]
    %v599 = vld [vmem:[%s15 + $0x1c] sm:$0xf]
    %v600 = vpack.c.bf16 %v328, %v325
    %v601 = vpack.c.bf16 %v336, %v333
    %v602 = vpack.c.bf16 %v344, %v341
    %v603 = vpack.c.bf16 %v352, %v349
    %v612 = vunpack.c.l.b16 %v592
    %v613 = vunpack.c.l.b16 %v593
    %v614 = vunpack.c.l.b16 %v594
    %v615 = vunpack.c.l.b16 %v595
    %v616 = vunpack.c.l.b16 %v596
    %v617 = vunpack.c.l.b16 %v597
    %v618 = vunpack.c.l.b16 %v598
    %v619 = vunpack.c.l.b16 %v599
    %v620 = vpack.c.b16 %v613, %v612
    %v621 = vpack.c.b16 %v615, %v614
    %v622 = vpack.c.b16 %v617, %v616
    %v623 = vpack.c.b16 %v619, %v618
    %vm624 = vcmask 523264
    %v626 = vsel %vm624, %v620, 0
    %v629 = vsel %vm624, %v621, 0
    %v632 = vsel %vm624, %v622, 0
    %v635 = vsel %vm624, %v623, 0
    %637 = vmatprep.subr.bf16.mxu0 0
    %638 = vmatpush1.bf16.msra.mxu0 %v600
    %639 = vmatprep.subr.bf16.mxu0 0
    %640 = vmatpush1.bf16.msra.mxu0 %v601
    %641 = vmatprep.subr.bf16.mxu0 0
    %642 = vmatpush1.bf16.msra.mxu0 %v602
    %643 = vmatprep.subr.bf16.mxu0 0
    %644 = vmatpush1.bf16.msra.mxu0 %v603
    %645 = vmatprep.subr.bf16.mxu0 0
    %646 = vmatpush1.bf16.msra.mxu0 0
    %647 = vmatprep.subr.bf16.mxu0 0
    %648 = vmatpush1.bf16.msra.mxu0 0
    %649 = vmatprep.subr.bf16.mxu0 0
    %650 = vmatpush1.bf16.msra.mxu0 0
    %651 = vmatprep.subr.bf16.mxu0 0
    %652 = vmatpush1.bf16.msra.mxu0 0
    %653 = vmatprep.subr.bf16.mxu0 0
    %654 = vmatpush1.bf16.msra.mxu0 0
    %655 = vmatprep.subr.bf16.mxu0 0
    %656 = vmatpush1.bf16.msra.mxu0 0
    %657 = vmatprep.subr.bf16.mxu0 0
    %658 = vmatpush1.bf16.msra.mxu0 0
    %659 = vmatprep.subr.bf16.mxu0 0
    %660 = vmatpush1.bf16.msra.mxu0 0
    %661 = vmatprep.subr.bf16.mxu0 0
    %662 = vmatpush1.bf16.msra.mxu0 0
    %663 = vmatprep.subr.bf16.mxu0 0
    %664 = vmatpush1.bf16.msra.mxu0 0
    %665 = vmatprep.subr.bf16.mxu0 0
    %666 = vmatpush1.bf16.msra.mxu0 0
    %667 = vmatprep.subr.bf16.mxu0 0
    %668 = vmatpush1.bf16.msra.mxu0 0
    %669 = vmatprep.mubr.bf16.mxu0 0
    %670 = vmatmul.mubr.bf16.gmra.mrb[0].mxu0 %v626
    %v671 = vpop.f32.mrb[0].mxu0
    %v672 = vadd.f32 0.0, %v671
    %v673 = vpop.f32.mrb[0].mxu0
    %v674 = vpop.f32.mrb[0].mxu0
    %v675 = vadd.f32 0.0, %v674
    %v676 = vpop.f32.mrb[0].mxu0
    %677 = vmatprep.mubr.bf16.mxu0 0
    %678 = vmatmul.mubr.bf16.gmra.mrb[0].mxu0 %v629
    %v679 = vpop.f32.mrb[0].mxu0
    %v680 = vadd.f32 0.0, %v679
    %v681 = vpop.f32.mrb[0].mxu0
    %v682 = vpop.f32.mrb[0].mxu0
    %v683 = vadd.f32 0.0, %v682
    %v684 = vpop.f32.mrb[0].mxu0
    %685 = vmatprep.mubr.bf16.mxu0 0
    %686 = vmatmul.mubr.bf16.gmra.mrb[0].mxu0 %v632
    %v687 = vpop.f32.mrb[0].mxu0
    %v688 = vadd.f32 0.0, %v687
    %v689 = vpop.f32.mrb[0].mxu0
    %v690 = vpop.f32.mrb[0].mxu0
    %v691 = vadd.f32 0.0, %v690
    %v692 = vpop.f32.mrb[0].mxu0
    %693 = vmatprep.mubr.bf16.mxu0 0
    %694 = vmatmul.mubr.bf16.gmra.mrb[0].mxu0 %v635
    %v695 = vpop.f32.mrb[0].mxu0
    %v696 = vadd.f32 0.0, %v695
    %v697 = vpop.f32.mrb[0].mxu0
    %v698 = vpop.f32.mrb[0].mxu0
    %v699 = vadd.f32 0.0, %v698
    %v700 = vpop.f32.mrb[0].mxu0
    %701 = vdwg.mxu0
    %v710 = vunpack.c.l.b16 %v580
    %v711 = vunpack.c.l.b16 %v581
    %v712 = vunpack.c.l.b16 %v582
    %v713 = vunpack.c.l.b16 %v583
    %v714 = vunpack.c.l.b16 %v584
    %v715 = vunpack.c.l.b16 %v585
    %v716 = vunpack.c.l.b16 %v586
    %v717 = vunpack.c.l.b16 %v587
    %v718 = vpack.c.b16 %v711, %v710
    %v719 = vpack.c.b16 %v713, %v712
    %v720 = vpack.c.b16 %v715, %v714
    %v721 = vpack.c.b16 %v717, %v716
    %726 = vrot.lane.b32.xlu0 %v588, 65
    %v727 = vpop.permute.xlu0 %726
    %728 = vrot.lane.b32.xlu0 %v589, 65
    %v729 = vpop.permute.xlu0 %728
    %730 = vrot.lane.b32.xlu0 %v590, 65
    %v731 = vpop.permute.xlu0 %730
    %732 = vrot.lane.b32.xlu0 %v591, 65
    %v733 = vpop.permute.xlu0 %732
    %v739 = vsel %vm624, %v718, 0
    %v742 = vsel %vm624, %v719, 0
    %v745 = vsel %vm624, %v720, 0
    %v748 = vsel %vm624, %v721, 0
    %750 = vmatprep.subr.bf16.mxu0 0
    %751 = vmatpush1.bf16.msra.mxu0 %v727
    %752 = vmatprep.subr.bf16.mxu0 0
    %753 = vmatpush1.bf16.msra.mxu0 %v729
    %754 = vmatprep.subr.bf16.mxu0 0
    %755 = vmatpush1.bf16.msra.mxu0 %v731
    %756 = vmatprep.subr.bf16.mxu0 0
    %757 = vmatpush1.bf16.msra.mxu0 %v733
    %758 = vmatprep.subr.bf16.mxu0 0
    %759 = vmatpush1.bf16.msra.mxu0 0
    %760 = vmatprep.subr.bf16.mxu0 0
    %761 = vmatpush1.bf16.msra.mxu0 0
    %762 = vmatprep.subr.bf16.mxu0 0
    %763 = vmatpush1.bf16.msra.mxu0 0
    %764 = vmatprep.subr.bf16.mxu0 0
    %765 = vmatpush1.bf16.msra.mxu0 0
    %766 = vmatprep.subr.bf16.mxu0 0
    %767 = vmatpush1.bf16.msra.mxu0 0
    %768 = vmatprep.subr.bf16.mxu0 0
    %769 = vmatpush1.bf16.msra.mxu0 0
    %770 = vmatprep.subr.bf16.mxu0 0
    %771 = vmatpush1.bf16.msra.mxu0 0
    %772 = vmatprep.subr.bf16.mxu0 0
    %773 = vmatpush1.bf16.msra.mxu0 0
    %774 = vmatprep.subr.bf16.mxu0 0
    %775 = vmatpush1.bf16.msra.mxu0 0
    %776 = vmatprep.subr.bf16.mxu0 0
    %777 = vmatpush1.bf16.msra.mxu0 0
    %778 = vmatprep.subr.bf16.mxu0 0
    %779 = vmatpush1.bf16.msra.mxu0 0
    %780 = vmatprep.subr.bf16.mxu0 0
    %781 = vmatpush1.bf16.msra.mxu0 0
    %782 = vmatprep.mubr.bf16.mxu0 0
    %783 = vmatmul.mubr.bf16.gmra.mrb[0].mxu0 %v739
    %v784 = vpop.f32.mrb[0].mxu0
    %v785 = vadd.f32 %v672, %v784
    %v786 = vpop.f32.mrb[0].mxu0
    %v787 = vpop.f32.mrb[0].mxu0
    %v788 = vadd.f32 %v675, %v787
    %v789 = vpop.f32.mrb[0].mxu0
    %790 = vmatprep.mubr.bf16.mxu0 0
    %791 = vmatmul.mubr.bf16.gmra.mrb[0].mxu0 %v742
    %v792 = vpop.f32.mrb[0].mxu0
    %v793 = vadd.f32 %v680, %v792
    %v794 = vpop.f32.mrb[0].mxu0
    %v795 = vpop.f32.mrb[0].mxu0
    %v796 = vadd.f32 %v683, %v795
    %v797 = vpop.f32.mrb[0].mxu0
    %798 = vmatprep.mubr.bf16.mxu0 0
    %799 = vmatmul.mubr.bf16.gmra.mrb[0].mxu0 %v745
    %v800 = vpop.f32.mrb[0].mxu0
    %v801 = vadd.f32 %v688, %v800
    %v802 = vpop.f32.mrb[0].mxu0
    %v803 = vpop.f32.mrb[0].mxu0
    %v804 = vadd.f32 %v691, %v803
    %v805 = vpop.f32.mrb[0].mxu0
    %806 = vmatprep.mubr.bf16.mxu0 0
    %807 = vmatmul.mubr.bf16.gmra.mrb[0].mxu0 %v748
    %v808 = vpop.f32.mrb[0].mxu0
    %v809 = vadd.f32 %v696, %v808
    %v810 = vpop.f32.mrb[0].mxu0
    %v811 = vpop.f32.mrb[0].mxu0
    %v812 = vadd.f32 %v699, %v811
    %v813 = vpop.f32.mrb[0].mxu0
    %814 = vdwg.mxu0
    %v815 = vld [vmem:[%s17] sm:$0xf]
    %v816 = vld [vmem:[%s17 + $0x4] sm:$0xf]
    %v817 = vld [vmem:[%s17 + $0x8] sm:$0xf]
    %v818 = vld [vmem:[%s17 + $0xc] sm:$0xf]
    %v819 = vld [vmem:[%s17 + $0x10] sm:$0xf]
    %v820 = vld [vmem:[%s17 + $0x14] sm:$0xf]
    %v821 = vld [vmem:[%s17 + $0x18] sm:$0xf]
    %v822 = vld [vmem:[%s17 + $0x1c] sm:$0xf]
    %v823 = vpack.c.bf16 %v573, %v572
    %v824 = vpack.c.bf16 %v575, %v574
    %v825 = vpack.c.bf16 %v577, %v576
    %v826 = vpack.c.bf16 %v579, %v578
    %v835 = vunpack.c.l.b16 %v815
    %v836 = vunpack.c.l.b16 %v816
    %v837 = vunpack.c.l.b16 %v817
    %v838 = vunpack.c.l.b16 %v818
    %v839 = vunpack.c.l.b16 %v819
    %v840 = vunpack.c.l.b16 %v820
    %v841 = vunpack.c.l.b16 %v821
    %v842 = vunpack.c.l.b16 %v822
    %v843 = vpack.c.b16 %v836, %v835
    %v844 = vpack.c.b16 %v838, %v837
    %v845 = vpack.c.b16 %v840, %v839
    %v846 = vpack.c.b16 %v842, %v841
    %851 = vrot.lane.b32.xlu0 %v823, 127
    %v852 = vpop.permute.xlu0 %851
    %853 = vrot.lane.b32.xlu0 %v824, 127
    %v854 = vpop.permute.xlu0 %853
    %855 = vrot.lane.b32.xlu0 %v825, 127
    %v856 = vpop.permute.xlu0 %855
    %857 = vrot.lane.b32.xlu0 %v826, 127
    %v858 = vpop.permute.xlu0 %857
    %v864 = vsel %vm624, %v843, 0
    %v867 = vsel %vm624, %v844, 0
    %v870 = vsel %vm624, %v845, 0
    %v873 = vsel %vm624, %v846, 0
    %875 = vmatprep.subr.bf16.mxu0 0
    %876 = vmatpush1.bf16.msra.mxu0 %v852
    %877 = vmatprep.subr.bf16.mxu0 0
    %878 = vmatpush1.bf16.msra.mxu0 %v854
    %879 = vmatprep.subr.bf16.mxu0 0
    %880 = vmatpush1.bf16.msra.mxu0 %v856
    %881 = vmatprep.subr.bf16.mxu0 0
    %882 = vmatpush1.bf16.msra.mxu0 %v858
    %883 = vmatprep.subr.bf16.mxu0 0
    %884 = vmatpush1.bf16.msra.mxu0 0
    %885 = vmatprep.subr.bf16.mxu0 0
    %886 = vmatpush1.bf16.msra.mxu0 0
    %887 = vmatprep.subr.bf16.mxu0 0
    %888 = vmatpush1.bf16.msra.mxu0 0
    %889 = vmatprep.subr.bf16.mxu0 0
    %890 = vmatpush1.bf16.msra.mxu0 0
    %891 = vmatprep.subr.bf16.mxu0 0
    %892 = vmatpush1.bf16.msra.mxu0 0
    %893 = vmatprep.subr.bf16.mxu0 0
    %894 = vmatpush1.bf16.msra.mxu0 0
    %895 = vmatprep.subr.bf16.mxu0 0
    %896 = vmatpush1.bf16.msra.mxu0 0
    %897 = vmatprep.subr.bf16.mxu0 0
    %898 = vmatpush1.bf16.msra.mxu0 0
    %899 = vmatprep.subr.bf16.mxu0 0
    %900 = vmatpush1.bf16.msra.mxu0 0
    %901 = vmatprep.subr.bf16.mxu0 0
    %902 = vmatpush1.bf16.msra.mxu0 0
    %903 = vmatprep.subr.bf16.mxu0 0
    %904 = vmatpush1.bf16.msra.mxu0 0
    %905 = vmatprep.subr.bf16.mxu0 0
    %906 = vmatpush1.bf16.msra.mxu0 0
    %907 = vmatprep.mubr.bf16.mxu0 0
    %908 = vmatmul.mubr.bf16.gmra.mrb[0].mxu0 %v864
    %v909 = vpop.f32.mrb[0].mxu0
    %v910 = vadd.f32 0.0, %v909
    %v911 = vpop.f32.mrb[0].mxu0
    %v912 = vpop.f32.mrb[0].mxu0
    %v913 = vadd.f32 0.0, %v912
    %v914 = vpop.f32.mrb[0].mxu0
    %915 = vmatprep.mubr.bf16.mxu0 0
    %916 = vmatmul.mubr.bf16.gmra.mrb[0].mxu0 %v867
    %v917 = vpop.f32.mrb[0].mxu0
    %v918 = vadd.f32 0.0, %v917
    %v919 = vpop.f32.mrb[0].mxu0
    %v920 = vpop.f32.mrb[0].mxu0
    %v921 = vadd.f32 0.0, %v920
    %v922 = vpop.f32.mrb[0].mxu0
    %923 = vmatprep.mubr.bf16.mxu0 0
    %924 = vmatmul.mubr.bf16.gmra.mrb[0].mxu0 %v870
    %v925 = vpop.f32.mrb[0].mxu0
    %v926 = vadd.f32 0.0, %v925
    %v927 = vpop.f32.mrb[0].mxu0
    %v928 = vpop.f32.mrb[0].mxu0
    %v929 = vadd.f32 0.0, %v928
    %v930 = vpop.f32.mrb[0].mxu0
    %931 = vmatprep.mubr.bf16.mxu0 0
    %932 = vmatmul.mubr.bf16.gmra.mrb[0].mxu0 %v873
    %v933 = vpop.f32.mrb[0].mxu0
    %v934 = vadd.f32 0.0, %v933
    %v935 = vpop.f32.mrb[0].mxu0
    %v936 = vpop.f32.mrb[0].mxu0
    %v937 = vadd.f32 0.0, %v936
    %v938 = vpop.f32.mrb[0].mxu0
    %939 = vdwg.mxu0
    %v940 = vadd.f32 %v785, %v910
    %v941 = vadd.f32 %v788, %v913
    %v942 = vadd.f32 %v793, %v918
    %v943 = vadd.f32 %v796, %v921
    %v944 = vadd.f32 %v801, %v926
    %v945 = vadd.f32 %v804, %v929
    %v946 = vadd.f32 %v809, %v934
    %v947 = vadd.f32 %v812, %v937
    %v948 = vld [vmem:[%s19] sm:$0xff]
    %v949 = vld [vmem:[%s19 + $0x8] sm:$0xff]
    %v950 = vld [vmem:[%s19 + $0x10] sm:$0xff]
    %v951 = vld [vmem:[%s19 + $0x18] sm:$0xff]
    %v952 = vld [vmem:[%s19 + $0x20] sm:$0xff]
    %v953 = vld [vmem:[%s19 + $0x28] sm:$0xff]
    %v954 = vld [vmem:[%s19 + $0x30] sm:$0xff]
    %v955 = vld [vmem:[%s19 + $0x38] sm:$0xff]
    %957 = vset.pattern.permute.xlu0 0
    %958 = vperm.xlu0 %957, %v948
    %v959 = vpop.permute.xlu0 %958
    %962 = vset.pattern.permute.xlu0 0
    %963 = vperm.xlu0 %962, %v949
    %v964 = vpop.permute.xlu0 %963
    %967 = vset.pattern.permute.xlu0 0
    %968 = vperm.xlu0 %967, %v950
    %v969 = vpop.permute.xlu0 %968
    %972 = vset.pattern.permute.xlu0 0
    %973 = vperm.xlu0 %972, %v951
    %v974 = vpop.permute.xlu0 %973
    %977 = vset.pattern.permute.xlu0 0
    %978 = vperm.xlu0 %977, %v952
    %v979 = vpop.permute.xlu0 %978
    %982 = vset.pattern.permute.xlu0 0
    %983 = vperm.xlu0 %982, %v953
    %v984 = vpop.permute.xlu0 %983
    %987 = vset.pattern.permute.xlu0 0
    %988 = vperm.xlu0 %987, %v954
    %v989 = vpop.permute.xlu0 %988
    %992 = vset.pattern.permute.xlu0 0
    %993 = vperm.xlu0 %992, %v955
    %v994 = vpop.permute.xlu0 %993
    %v996 = vadd.f32 %v940, %v959
    %v997 = vadd.f32 %v941, %v964
    %v998 = vadd.f32 %v942, %v969
    %v999 = vadd.f32 %v943, %v974
    %v1000 = vadd.f32 %v944, %v979
    %v1001 = vadd.f32 %v945, %v984
    %v1002 = vadd.f32 %v946, %v989
    %v1003 = vadd.f32 %v947, %v994
    %v1004 = vxor.u32 %v996, 2147483648
    %v1005 = vxor.u32 %v997, 2147483648
    %v1006 = vxor.u32 %v998, 2147483648
    %v1007 = vxor.u32 %v999, 2147483648
    %v1008 = vxor.u32 %v1000, 2147483648
    %v1009 = vxor.u32 %v1001, 2147483648
    %v1010 = vxor.u32 %v1002, 2147483648
    %v1011 = vxor.u32 %v1003, 2147483648
    %v1012 = vmul.f32 %v1004, 1.442695
    %v1013 = vpow.pop %v1012
    %v1014 = vmul.f32 %v1005, 1.442695
    %v1015 = vpow.pop %v1014
    %v1016 = vmul.f32 %v1006, 1.442695
    %v1017 = vpow.pop %v1016
    %v1018 = vmul.f32 %v1007, 1.442695
    %v1019 = vpow.pop %v1018
    %v1020 = vmul.f32 %v1008, 1.442695
    %v1021 = vpow.pop %v1020
    %v1022 = vmul.f32 %v1009, 1.442695
    %v1023 = vpow.pop %v1022
    %v1024 = vmul.f32 %v1010, 1.442695
    %v1025 = vpow.pop %v1024
    %v1026 = vmul.f32 %v1011, 1.442695
    %v1027 = vpow.pop %v1026
    %v1028 = vadd.f32 %v1013, 1.0
    %v1029 = vadd.f32 %v1015, 1.0
    %v1030 = vadd.f32 %v1017, 1.0
    %v1031 = vadd.f32 %v1019, 1.0
    %v1032 = vadd.f32 %v1021, 1.0
    %v1033 = vadd.f32 %v1023, 1.0
    %v1034 = vadd.f32 %v1025, 1.0
    %v1035 = vadd.f32 %v1027, 1.0
    %v1036 = vrcp.pop %v1028
    %v1037 = vmul.f32 1.0, %v1036
    %v1038 = vrcp.pop %v1029
    %v1039 = vmul.f32 1.0, %v1038
    %v1040 = vrcp.pop %v1030
    %v1041 = vmul.f32 1.0, %v1040
    %v1042 = vrcp.pop %v1031
    %v1043 = vmul.f32 1.0, %v1042
    %v1044 = vrcp.pop %v1032
    %v1045 = vmul.f32 1.0, %v1044
    %v1046 = vrcp.pop %v1033
    %v1047 = vmul.f32 1.0, %v1046
    %v1048 = vrcp.pop %v1034
    %v1049 = vmul.f32 1.0, %v1048
    %v1050 = vrcp.pop %v1035
    %v1051 = vmul.f32 1.0, %v1050
    %v1052 = vmul.f32 %v996, %v1037
    %v1053 = vmul.f32 %v997, %v1039
    %v1054 = vmul.f32 %v998, %v1041
    %v1055 = vmul.f32 %v999, %v1043
    %v1056 = vmul.f32 %v1000, %v1045
    %v1057 = vmul.f32 %v1001, %v1047
    %v1058 = vmul.f32 %v1002, %v1049
    %v1059 = vmul.f32 %v1003, %v1051
    %v1060 = vpack.c.bf16 %v1053, %v1052
    %v1061 = vpack.c.bf16 %v1055, %v1054
    %v1062 = vpack.c.bf16 %v1057, %v1056
    %v1063 = vpack.c.bf16 %v1059, %v1058
    %v1064 = vld [vmem:[%s21] sm:$0xf]
    %v1065 = vld [vmem:[%s21 + $0x4] sm:$0xf]
    %v1066 = vld [vmem:[%s21 + $0x8] sm:$0xf]
    %v1067 = vld [vmem:[%s21 + $0xc] sm:$0xf]
    %v1068 = vld [vmem:[%s21 + $0x10] sm:$0xf]
    %v1069 = vld [vmem:[%s21 + $0x14] sm:$0xf]
    %v1070 = vld [vmem:[%s21 + $0x18] sm:$0xf]
    %v1071 = vld [vmem:[%s21 + $0x1c] sm:$0xf]
    %v1072 = vld [vmem:[%s23] sm:$0x1]
    %v1074 = vlaneseq
    %v1075 = vshrl.u32 %v1074, 7
    %v1076 = vsub.s32 0, %v1075
    %v1077 = vrot.slane %v1072, %v1076
    %v1087 = vunpack.c.l.b16 %v1064
    %v1088 = vunpack.c.l.b16 %v1065
    %v1089 = vunpack.c.l.b16 %v1066
    %v1090 = vunpack.c.l.b16 %v1067
    %v1091 = vunpack.c.l.b16 %v1068
    %v1092 = vunpack.c.l.b16 %v1069
    %v1093 = vunpack.c.l.b16 %v1070
    %v1094 = vunpack.c.l.b16 %v1071
    %v1095 = vpack.c.b16 %v1088, %v1087
    %v1096 = vpack.c.b16 %v1090, %v1089
    %v1097 = vpack.c.b16 %v1092, %v1091
    %v1098 = vpack.c.b16 %v1094, %v1093
    %v1104 = vsel %vm624, %v1060, 0
    %v1107 = vsel %vm624, %v1061, 0
    %v1110 = vsel %vm624, %v1062, 0
    %v1113 = vsel %vm624, %v1063, 0
    %1115 = vmatprep.subr.bf16.mxu0 0
    %1116 = vmatpush1.bf16.msra.mxu0 %v1095
    %1117 = vmatprep.subr.bf16.mxu0 0
    %1118 = vmatpush1.bf16.msra.mxu0 %v1096
    %1119 = vmatprep.subr.bf16.mxu0 0
    %1120 = vmatpush1.bf16.msra.mxu0 %v1097
    %1121 = vmatprep.subr.bf16.mxu0 0
    %1122 = vmatpush1.bf16.msra.mxu0 %v1098
    %1123 = vmatprep.subr.bf16.mxu0 0
    %1124 = vmatpush1.bf16.msra.mxu0 0
    %1125 = vmatprep.subr.bf16.mxu0 0
    %1126 = vmatpush1.bf16.msra.mxu0 0
    %1127 = vmatprep.subr.bf16.mxu0 0
    %1128 = vmatpush1.bf16.msra.mxu0 0
    %1129 = vmatprep.subr.bf16.mxu0 0
    %1130 = vmatpush1.bf16.msra.mxu0 0
    %1131 = vmatprep.subr.bf16.mxu0 0
    %1132 = vmatpush1.bf16.msra.mxu0 0
    %1133 = vmatprep.subr.bf16.mxu0 0
    %1134 = vmatpush1.bf16.msra.mxu0 0
    %1135 = vmatprep.subr.bf16.mxu0 0
    %1136 = vmatpush1.bf16.msra.mxu0 0
    %1137 = vmatprep.subr.bf16.mxu0 0
    %1138 = vmatpush1.bf16.msra.mxu0 0
    %1139 = vmatprep.subr.bf16.mxu0 0
    %1140 = vmatpush1.bf16.msra.mxu0 0
    %1141 = vmatprep.subr.bf16.mxu0 0
    %1142 = vmatpush1.bf16.msra.mxu0 0
    %1143 = vmatprep.subr.bf16.mxu0 0
    %1144 = vmatpush1.bf16.msra.mxu0 0
    %1145 = vmatprep.subr.bf16.mxu0 0
    %1146 = vmatpush1.bf16.msra.mxu0 0
    %1147 = vmatprep.mubr.bf16.mxu0 0
    %1148 = vmatmul.mubr.bf16.gmra.mrb[0].mxu0 %v1104
    %v1149 = vpop.f32.mrb[0].mxu0
    %v1150 = vadd.f32 %v1077, %v1149
    %v1151 = vpop.f32.mrb[0].mxu0
    %v1152 = vpop.f32.mrb[0].mxu0
    %v1153 = vadd.f32 %v1077, %v1152
    %v1154 = vpop.f32.mrb[0].mxu0
    %1155 = vmatprep.mubr.bf16.mxu0 0
    %1156 = vmatmul.mubr.bf16.gmra.mrb[0].mxu0 %v1107
    %v1157 = vpop.f32.mrb[0].mxu0
    %v1158 = vadd.f32 %v1077, %v1157
    %v1159 = vpop.f32.mrb[0].mxu0
    %v1160 = vpop.f32.mrb[0].mxu0
    %v1161 = vadd.f32 %v1077, %v1160
    %v1162 = vpop.f32.mrb[0].mxu0
    %1163 = vmatprep.mubr.bf16.mxu0 0
    %1164 = vmatmul.mubr.bf16.gmra.mrb[0].mxu0 %v1110
    %v1165 = vpop.f32.mrb[0].mxu0
    %v1166 = vadd.f32 %v1077, %v1165
    %v1167 = vpop.f32.mrb[0].mxu0
    %v1168 = vpop.f32.mrb[0].mxu0
    %v1169 = vadd.f32 %v1077, %v1168
    %v1170 = vpop.f32.mrb[0].mxu0
    %1171 = vmatprep.mubr.bf16.mxu0 0
    %1172 = vmatmul.mubr.bf16.gmra.mrb[0].mxu0 %v1113
    %v1173 = vpop.f32.mrb[0].mxu0
    %v1174 = vadd.f32 %v1077, %v1173
    %v1175 = vpop.f32.mrb[0].mxu0
    %v1176 = vpop.f32.mrb[0].mxu0
    %v1177 = vadd.f32 %v1077, %v1176
    %v1178 = vpop.f32.mrb[0].mxu0
    %1179 = vdwg.mxu0
    %v1180 = vpack.c.bf16 %v1153, %v1150
    %v1181 = vpack.c.bf16 %v1161, %v1158
    %v1182 = vpack.c.bf16 %v1169, %v1166
    %v1183 = vpack.c.bf16 %v1177, %v1174
    %v1184 = vld [vmem:[%s25] sm:$0xff]
    %v1185 = vld [vmem:[%s25 + $0x8] sm:$0xf]
    %v1186 = vld [vmem:[%s25 + $0xc] sm:$0xff]
    %v1187 = vld [vmem:[%s25 + $0x14] sm:$0xf]
    %v1188 = vld [vmem:[%s25 + $0x18] sm:$0xff]
    %v1189 = vld [vmem:[%s25 + $0x20] sm:$0xf]
    %v1190 = vld [vmem:[%s25 + $0x24] sm:$0xff]
    %v1191 = vld [vmem:[%s25 + $0x2c] sm:$0xf]
    %v1192 = vld [vmem:[%s25 + $0x30] sm:$0xff]
    %v1193 = vld [vmem:[%s25 + $0x38] sm:$0xf]
    %v1194 = vld [vmem:[%s25 + $0x3c] sm:$0xff]
    %v1195 = vld [vmem:[%s25 + $0x44] sm:$0xf]
    %v1196 = vld [vmem:[%s25 + $0x48] sm:$0xff]
    %v1197 = vld [vmem:[%s25 + $0x50] sm:$0xf]
    %v1198 = vld [vmem:[%s25 + $0x54] sm:$0xff]
    %v1199 = vld [vmem:[%s25 + $0x5c] sm:$0xf]
    %v1200 = vld [vmem:[%s27] sm:$0x7]
    %v1202 = vlaneseq
    %v1203 = vshrl.u32 %v1202, 7
    %v1204 = vsub.s32 0, %v1203
    %v1205 = vrot.slane %v1200, %v1204
    %v1206 = vlaneseq
    %v1207 = vshrl.u32 %v1206, 7
    %v1208 = vsub.s32 1, %v1207
    %v1209 = vrot.slane %v1200, %v1208
    %v1210 = vlaneseq
    %v1211 = vshrl.u32 %v1210, 7
    %v1212 = vsub.s32 2, %v1211
    %v1213 = vrot.slane %v1200, %v1212
    %v1233 = vunpack.c.l.b16 %v1184
    %v1234 = vunpack.c.h.b16 %v1184
    %v1235 = vunpack.c.l.b16 %v1185
    %v1236 = vunpack.c.l.b16 %v1186
    %v1237 = vunpack.c.h.b16 %v1186
    %v1238 = vunpack.c.l.b16 %v1187
    %v1239 = vunpack.c.l.b16 %v1188
    %v1240 = vunpack.c.h.b16 %v1188
    %v1241 = vunpack.c.l.b16 %v1189
    %v1242 = vunpack.c.l.b16 %v1190
    %v1243 = vunpack.c.h.b16 %v1190
    %v1244 = vunpack.c.l.b16 %v1191
    %v1245 = vunpack.c.l.b16 %v1192
    %v1246 = vunpack.c.h.b16 %v1192
    %v1247 = vunpack.c.l.b16 %v1193
    %v1248 = vunpack.c.l.b16 %v1194
    %v1249 = vunpack.c.h.b16 %v1194
    %v1250 = vunpack.c.l.b16 %v1195
    %v1251 = vunpack.c.l.b16 %v1196
    %v1252 = vunpack.c.h.b16 %v1196
    %v1253 = vunpack.c.l.b16 %v1197
    %v1254 = vunpack.c.l.b16 %v1198
    %v1255 = vunpack.c.h.b16 %v1198
    %v1256 = vunpack.c.l.b16 %v1199
    %v1257 = vpack.c.b16 %v1236, %v1233
    %v1258 = vpack.c.b16 %v1237, %v1234
    %v1259 = vpack.c.b16 %v1238, %v1235
    %v1260 = vpack.c.b16 %v1242, %v1239
    %v1261 = vpack.c.b16 %v1243, %v1240
    %v1262 = vpack.c.b16 %v1244, %v1241
    %v1263 = vpack.c.b16 %v1248, %v1245
    %v1264 = vpack.c.b16 %v1249, %v1246
    %v1265 = vpack.c.b16 %v1250, %v1247
    %v1266 = vpack.c.b16 %v1254, %v1251
    %v1267 = vpack.c.b16 %v1255, %v1252
    %v1268 = vpack.c.b16 %v1256, %v1253
    %v1282 = vsel %vm624, %v1180, 0
    %v1285 = vsel %vm624, %v1181, 0
    %v1288 = vsel %vm624, %v1182, 0
    %v1291 = vsel %vm624, %v1183, 0
    %1293 = vmatprep.subr.bf16.mxu0 %v1258
    %1294 = vmatpush1.bf16.msra.mxu0 %v1257
    %1295 = vmatprep.subr.bf16.mxu0 %v1261
    %1296 = vmatpush1.bf16.msra.mxu0 %v1260
    %1297 = vmatprep.subr.bf16.mxu0 %v1264
    %1298 = vmatpush1.bf16.msra.mxu0 %v1263
    %1299 = vmatprep.subr.bf16.mxu0 %v1267
    %1300 = vmatpush1.bf16.msra.mxu0 %v1266
    %1301 = vmatprep.subr.bf16.mxu0 0
    %1302 = vmatpush1.bf16.msra.mxu0 0
    %1303 = vmatprep.subr.bf16.mxu0 0
    %1304 = vmatpush1.bf16.msra.mxu0 0
    %1305 = vmatprep.subr.bf16.mxu0 0
    %1306 = vmatpush1.bf16.msra.mxu0 0
    %1307 = vmatprep.subr.bf16.mxu0 0
    %1308 = vmatpush1.bf16.msra.mxu0 0
    %1309 = vmatprep.subr.bf16.mxu0 0
    %1310 = vmatpush1.bf16.msra.mxu0 0
    %1311 = vmatprep.subr.bf16.mxu0 0
    %1312 = vmatpush1.bf16.msra.mxu0 0
    %1313 = vmatprep.subr.bf16.mxu0 0
    %1314 = vmatpush1.bf16.msra.mxu0 0
    %1315 = vmatprep.subr.bf16.mxu0 0
    %1316 = vmatpush1.bf16.msra.mxu0 0
    %1317 = vmatprep.subr.bf16.mxu0 0
    %1318 = vmatpush1.bf16.msra.mxu0 0
    %1319 = vmatprep.subr.bf16.mxu0 0
    %1320 = vmatpush1.bf16.msra.mxu0 0
    %1321 = vmatprep.subr.bf16.mxu0 0
    %1322 = vmatpush1.bf16.msra.mxu0 0
    %1323 = vmatprep.subr.bf16.mxu0 0
    %1324 = vmatpush1.bf16.msra.mxu0 0
    %1325 = vmatprep.mubr.bf16.mxu0 0
    %1326 = vmatmul.mubr.bf16.gmra.mrb[0].mxu0 %v1282
    %v1327 = vpop.f32.mrb[0].mxu0
    %v1328 = vadd.f32 %v1205, %v1327
    %v1329 = vpop.f32.mrb[0].mxu0
    %v1330 = vadd.f32 %v1209, %v1329
    %v1331 = vpop.f32.mrb[0].mxu0
    %v1332 = vadd.f32 %v1205, %v1331
    %v1333 = vpop.f32.mrb[0].mxu0
    %v1334 = vadd.f32 %v1209, %v1333
    %1335 = vmatprep.mubr.bf16.mxu0 0
    %1336 = vmatmul.mubr.bf16.gmra.mrb[0].mxu0 %v1285
    %v1337 = vpop.f32.mrb[0].mxu0
    %v1338 = vadd.f32 %v1205, %v1337
    %v1339 = vpop.f32.mrb[0].mxu0
    %v1340 = vadd.f32 %v1209, %v1339
    %v1341 = vpop.f32.mrb[0].mxu0
    %v1342 = vadd.f32 %v1205, %v1341
    %v1343 = vpop.f32.mrb[0].mxu0
    %v1344 = vadd.f32 %v1209, %v1343
    %1345 = vmatprep.mubr.bf16.mxu0 0
    %1346 = vmatmul.mubr.bf16.gmra.mrb[0].mxu0 %v1288
    %v1347 = vpop.f32.mrb[0].mxu0
    %v1348 = vadd.f32 %v1205, %v1347
    %v1349 = vpop.f32.mrb[0].mxu0
    %v1350 = vadd.f32 %v1209, %v1349
    %v1351 = vpop.f32.mrb[0].mxu0
    %v1352 = vadd.f32 %v1205, %v1351
    %v1353 = vpop.f32.mrb[0].mxu0
    %v1354 = vadd.f32 %v1209, %v1353
    %1355 = vmatprep.mubr.bf16.mxu0 0
    %1356 = vmatmul.mubr.bf16.gmra.mrb[0].mxu0 %v1291
    %v1357 = vpop.f32.mrb[0].mxu0
    %v1358 = vadd.f32 %v1205, %v1357
    %v1359 = vpop.f32.mrb[0].mxu0
    %v1360 = vadd.f32 %v1209, %v1359
    %v1361 = vpop.f32.mrb[0].mxu0
    %v1362 = vadd.f32 %v1205, %v1361
    %v1363 = vpop.f32.mrb[0].mxu0
    %v1364 = vadd.f32 %v1209, %v1363
    %1365 = vdwg.mxu0
    %1366 = vmatprep.subr.bf16.mxu0 0
    %1367 = vmatpush1.bf16.msra.mxu0 %v1259
    %1368 = vmatprep.subr.bf16.mxu0 0
    %1369 = vmatpush1.bf16.msra.mxu0 %v1262
    %1370 = vmatprep.subr.bf16.mxu0 0
    %1371 = vmatpush1.bf16.msra.mxu0 %v1265
    %1372 = vmatprep.subr.bf16.mxu0 0
    %1373 = vmatpush1.bf16.msra.mxu0 %v1268
    %1374 = vmatprep.subr.bf16.mxu0 0
    %1375 = vmatpush1.bf16.msra.mxu0 0
    %1376 = vmatprep.subr.bf16.mxu0 0
    %1377 = vmatpush1.bf16.msra.mxu0 0
    %1378 = vmatprep.subr.bf16.mxu0 0
    %1379 = vmatpush1.bf16.msra.mxu0 0
    %1380 = vmatprep.subr.bf16.mxu0 0
    %1381 = vmatpush1.bf16.msra.mxu0 0
    %1382 = vmatprep.subr.bf16.mxu0 0
    %1383 = vmatpush1.bf16.msra.mxu0 0
    %1384 = vmatprep.subr.bf16.mxu0 0
    %1385 = vmatpush1.bf16.msra.mxu0 0
    %1386 = vmatprep.subr.bf16.mxu0 0
    %1387 = vmatpush1.bf16.msra.mxu0 0
    %1388 = vmatprep.subr.bf16.mxu0 0
    %1389 = vmatpush1.bf16.msra.mxu0 0
    %1390 = vmatprep.subr.bf16.mxu0 0
    %1391 = vmatpush1.bf16.msra.mxu0 0
    %1392 = vmatprep.subr.bf16.mxu0 0
    %1393 = vmatpush1.bf16.msra.mxu0 0
    %1394 = vmatprep.subr.bf16.mxu0 0
    %1395 = vmatpush1.bf16.msra.mxu0 0
    %1396 = vmatprep.subr.bf16.mxu0 0
    %1397 = vmatpush1.bf16.msra.mxu0 0
    %1398 = vmatprep.mubr.bf16.mxu0 0
    %1399 = vmatmul.mubr.bf16.gmra.mrb[0].mxu0 %v1282
    %v1400 = vpop.f32.mrb[0].mxu0
    %v1401 = vadd.f32 %v1213, %v1400
    %v1402 = vpop.f32.mrb[0].mxu0
    %v1403 = vpop.f32.mrb[0].mxu0
    %v1404 = vadd.f32 %v1213, %v1403
    %v1405 = vpop.f32.mrb[0].mxu0
    %1406 = vmatprep.mubr.bf16.mxu0 0
    %1407 = vmatmul.mubr.bf16.gmra.mrb[0].mxu0 %v1285
    %v1408 = vpop.f32.mrb[0].mxu0
    %v1409 = vadd.f32 %v1213, %v1408
    %v1410 = vpop.f32.mrb[0].mxu0
    %v1411 = vpop.f32.mrb[0].mxu0
    %v1412 = vadd.f32 %v1213, %v1411
    %v1413 = vpop.f32.mrb[0].mxu0
    %1414 = vmatprep.mubr.bf16.mxu0 0
    %1415 = vmatmul.mubr.bf16.gmra.mrb[0].mxu0 %v1288
    %v1416 = vpop.f32.mrb[0].mxu0
    %v1417 = vadd.f32 %v1213, %v1416
    %v1418 = vpop.f32.mrb[0].mxu0
    %v1419 = vpop.f32.mrb[0].mxu0
    %v1420 = vadd.f32 %v1213, %v1419
    %v1421 = vpop.f32.mrb[0].mxu0
    %1422 = vmatprep.mubr.bf16.mxu0 0
    %1423 = vmatmul.mubr.bf16.gmra.mrb[0].mxu0 %v1291
    %v1424 = vpop.f32.mrb[0].mxu0
    %v1425 = vadd.f32 %v1213, %v1424
    %v1426 = vpop.f32.mrb[0].mxu0
    %v1427 = vpop.f32.mrb[0].mxu0
    %v1428 = vadd.f32 %v1213, %v1427
    %v1429 = vpop.f32.mrb[0].mxu0
    %1430 = vdwg.mxu0
    %vm1431 = vcmp.gt.f32.partialorder %v1401, 20.0
    %vm1432 = vcmp.gt.f32.partialorder %v1404, 20.0
    %vm1433 = vcmp.gt.f32.partialorder %v1409, 20.0
    %vm1434 = vcmp.gt.f32.partialorder %v1412, 20.0
    %vm1435 = vcmp.gt.f32.partialorder %v1417, 20.0
    %vm1436 = vcmp.gt.f32.partialorder %v1420, 20.0
    %vm1437 = vcmp.gt.f32.partialorder %v1425, 20.0
    %vm1438 = vcmp.gt.f32.partialorder %v1428, 20.0
    %v1439 = vmin.f32 %v1401, 20.0
    %v1440 = vmin.f32 %v1404, 20.0
    %v1441 = vmin.f32 %v1409, 20.0
    %v1442 = vmin.f32 %v1412, 20.0
    %v1443 = vmin.f32 %v1417, 20.0
    %v1444 = vmin.f32 %v1420, 20.0
    %v1445 = vmin.f32 %v1425, 20.0
    %v1446 = vmin.f32 %v1428, 20.0
    %v1447 = vmul.f32 %v1439, 1.442695
    %v1448 = vpow.pop %v1447
    %v1449 = vmul.f32 %v1440, 1.442695
    %v1450 = vpow.pop %v1449
    %v1451 = vmul.f32 %v1441, 1.442695
    %v1452 = vpow.pop %v1451
    %v1453 = vmul.f32 %v1442, 1.442695
    %v1454 = vpow.pop %v1453
    %v1455 = vmul.f32 %v1443, 1.442695
    %v1456 = vpow.pop %v1455
    %v1457 = vmul.f32 %v1444, 1.442695
    %v1458 = vpow.pop %v1457
    %v1459 = vmul.f32 %v1445, 1.442695
    %v1460 = vpow.pop %v1459
    %v1461 = vmul.f32 %v1446, 1.442695
    %v1462 = vpow.pop %v1461
    %v1463 = vadd.f32 %v1448, 1.0
    %v1464 = vlog2.pop %v1463
    %v1465 = vmul.f32 %v1464, 0.6931472
    %v1466 = vmul.f32 -0.5, %v1448
    %v1467 = vadd.f32 %v1466, 1.0
    %v1468 = vmul.f32 %v1467, %v1448
    %v1469 = vand.u32 2147483647, %v1448
    %vm1470 = vcmp.lt.f32.partialorder %v1469, 0.0004427343
    %v1471 = vsel %vm1470, %v1468, %v1465
    %v1472 = vadd.f32 %v1450, 1.0
    %v1473 = vlog2.pop %v1472
    %v1474 = vmul.f32 %v1473, 0.6931472
    %v1475 = vmul.f32 -0.5, %v1450
    %v1476 = vadd.f32 %v1475, 1.0
    %v1477 = vmul.f32 %v1476, %v1450
    %v1478 = vand.u32 2147483647, %v1450
    %vm1479 = vcmp.lt.f32.partialorder %v1478, 0.0004427343
    %v1480 = vsel %vm1479, %v1477, %v1474
    %v1481 = vadd.f32 %v1452, 1.0
    %v1482 = vlog2.pop %v1481
    %v1483 = vmul.f32 %v1482, 0.6931472
    %v1484 = vmul.f32 -0.5, %v1452
    %v1485 = vadd.f32 %v1484, 1.0
    %v1486 = vmul.f32 %v1485, %v1452
    %v1487 = vand.u32 2147483647, %v1452
    %vm1488 = vcmp.lt.f32.partialorder %v1487, 0.0004427343
    %v1489 = vsel %vm1488, %v1486, %v1483
    %v1490 = vadd.f32 %v1454, 1.0
    %v1491 = vlog2.pop %v1490
    %v1492 = vmul.f32 %v1491, 0.6931472
    %v1493 = vmul.f32 -0.5, %v1454
    %v1494 = vadd.f32 %v1493, 1.0
    %v1495 = vmul.f32 %v1494, %v1454
    %v1496 = vand.u32 2147483647, %v1454
    %vm1497 = vcmp.lt.f32.partialorder %v1496, 0.0004427343
    %v1498 = vsel %vm1497, %v1495, %v1492
    %v1499 = vadd.f32 %v1456, 1.0
    %v1500 = vlog2.pop %v1499
    %v1501 = vmul.f32 %v1500, 0.6931472
    %v1502 = vmul.f32 -0.5, %v1456
    %v1503 = vadd.f32 %v1502, 1.0
    %v1504 = vmul.f32 %v1503, %v1456
    %v1505 = vand.u32 2147483647, %v1456
    %vm1506 = vcmp.lt.f32.partialorder %v1505, 0.0004427343
    %v1507 = vsel %vm1506, %v1504, %v1501
    %v1508 = vadd.f32 %v1458, 1.0
    %v1509 = vlog2.pop %v1508
    %v1510 = vmul.f32 %v1509, 0.6931472
    %v1511 = vmul.f32 -0.5, %v1458
    %v1512 = vadd.f32 %v1511, 1.0
    %v1513 = vmul.f32 %v1512, %v1458
    %v1514 = vand.u32 2147483647, %v1458
    %vm1515 = vcmp.lt.f32.partialorder %v1514, 0.0004427343
    %v1516 = vsel %vm1515, %v1513, %v1510
    %v1517 = vadd.f32 %v1460, 1.0
    %v1518 = vlog2.pop %v1517
    %v1519 = vmul.f32 %v1518, 0.6931472
    %v1520 = vmul.f32 -0.5, %v1460
    %v1521 = vadd.f32 %v1520, 1.0
    %v1522 = vmul.f32 %v1521, %v1460
    %v1523 = vand.u32 2147483647, %v1460
    %vm1524 = vcmp.lt.f32.partialorder %v1523, 0.0004427343
    %v1525 = vsel %vm1524, %v1522, %v1519
    %v1526 = vadd.f32 %v1462, 1.0
    %v1527 = vlog2.pop %v1526
    %v1528 = vmul.f32 %v1527, 0.6931472
    %v1529 = vmul.f32 -0.5, %v1462
    %v1530 = vadd.f32 %v1529, 1.0
    %v1531 = vmul.f32 %v1530, %v1462
    %v1532 = vand.u32 2147483647, %v1462
    %vm1533 = vcmp.lt.f32.partialorder %v1532, 0.0004427343
    %v1534 = vsel %vm1533, %v1531, %v1528
    %v1535 = vsel %vm1431, %v1401, %v1471
    %v1536 = vsel %vm1432, %v1404, %v1480
    %v1537 = vsel %vm1433, %v1409, %v1489
    %v1538 = vsel %vm1434, %v1412, %v1498
    %v1539 = vsel %vm1435, %v1417, %v1507
    %v1540 = vsel %vm1436, %v1420, %v1516
    %v1541 = vsel %vm1437, %v1425, %v1525
    %v1542 = vsel %vm1438, %v1428, %v1534
    %v1543 = vmul.f32 %v1328, %v1330
    %v1544 = vmul.f32 %v1332, %v1334
    %v1545 = vmul.f32 %v1338, %v1340
    %v1546 = vmul.f32 %v1342, %v1344
    %v1547 = vmul.f32 %v1348, %v1350
    %v1548 = vmul.f32 %v1352, %v1354
    %v1549 = vmul.f32 %v1358, %v1360
    %v1550 = vmul.f32 %v1362, %v1364
    %1551 = vadd.xlane.f32.xlu0 %v1543
    %v1552 = vpop.xlane.xlu0 %1551
    %1553 = vadd.xlane.f32.xlu0 %v1544
    %v1554 = vpop.xlane.xlu0 %1553
    %1555 = vadd.xlane.f32.xlu0 %v1545
    %v1556 = vpop.xlane.xlu0 %1555
    %1557 = vadd.xlane.f32.xlu0 %v1546
    %v1558 = vpop.xlane.xlu0 %1557
    %1559 = vadd.xlane.f32.xlu0 %v1547
    %v1560 = vpop.xlane.xlu0 %1559
    %1561 = vadd.xlane.f32.xlu0 %v1548
    %v1562 = vpop.xlane.xlu0 %1561
    %1563 = vadd.xlane.f32.xlu0 %v1549
    %v1564 = vpop.xlane.xlu0 %1563
    %1565 = vadd.xlane.f32.xlu0 %v1550
    %v1566 = vpop.xlane.xlu0 %1565
    %v1567 = vmul.f32 %v1150, %v1535
    %v1568 = vmul.f32 %v1153, %v1536
    %v1569 = vmul.f32 %v1158, %v1537
    %v1570 = vmul.f32 %v1161, %v1538
    %v1571 = vmul.f32 %v1166, %v1539
    %v1572 = vmul.f32 %v1169, %v1540
    %v1573 = vmul.f32 %v1174, %v1541
    %v1574 = vmul.f32 %v1177, %v1542
    %v1575 = vmul.f32 %v1567, %v1552
    %v1576 = vmul.f32 %v1568, %v1554
    %v1577 = vmul.f32 %v1569, %v1556
    %v1578 = vmul.f32 %v1570, %v1558
    %v1579 = vmul.f32 %v1571, %v1560
    %v1580 = vmul.f32 %v1572, %v1562
    %v1581 = vmul.f32 %v1573, %v1564
    %v1582 = vmul.f32 %v1574, %v1566
    %v1583 = vxor.u32 %v1575, 2147483648
    %v1584 = vxor.u32 %v1576, 2147483648
    %v1585 = vxor.u32 %v1577, 2147483648
    %v1586 = vxor.u32 %v1578, 2147483648
    %v1587 = vxor.u32 %v1579, 2147483648
    %v1588 = vxor.u32 %v1580, 2147483648
    %v1589 = vxor.u32 %v1581, 2147483648
    %v1590 = vxor.u32 %v1582, 2147483648
    %v1591 = vmul.f32 %v1583, 1.442695
    %v1592 = vpow.pop %v1591
    %v1593 = vmul.f32 %v1584, 1.442695
    %v1594 = vpow.pop %v1593
    %v1595 = vmul.f32 %v1585, 1.442695
    %v1596 = vpow.pop %v1595
    %v1597 = vmul.f32 %v1586, 1.442695
    %v1598 = vpow.pop %v1597
    %v1599 = vmul.f32 %v1587, 1.442695
    %v1600 = vpow.pop %v1599
    %v1601 = vmul.f32 %v1588, 1.442695
    %v1602 = vpow.pop %v1601
    %v1603 = vmul.f32 %v1589, 1.442695
    %v1604 = vpow.pop %v1603
    %v1605 = vmul.f32 %v1590, 1.442695
    %v1606 = vpow.pop %v1605
    %v1607 = vadd.f32 %v1592, 1.0
    %v1608 = vadd.f32 %v1594, 1.0
    %v1609 = vadd.f32 %v1596, 1.0
    %v1610 = vadd.f32 %v1598, 1.0
    %v1611 = vadd.f32 %v1600, 1.0
    %v1612 = vadd.f32 %v1602, 1.0
    %v1613 = vadd.f32 %v1604, 1.0
    %v1614 = vadd.f32 %v1606, 1.0
    %v1615 = vrcp.pop %v1607
    %v1616 = vmul.f32 1.0, %v1615
    %v1617 = vrcp.pop %v1608
    %v1618 = vmul.f32 1.0, %v1617
    %v1619 = vrcp.pop %v1609
    %v1620 = vmul.f32 1.0, %v1619
    %v1621 = vrcp.pop %v1610
    %v1622 = vmul.f32 1.0, %v1621
    %v1623 = vrcp.pop %v1611
    %v1624 = vmul.f32 1.0, %v1623
    %v1625 = vrcp.pop %v1612
    %v1626 = vmul.f32 1.0, %v1625
    %v1627 = vrcp.pop %v1613
    %v1628 = vmul.f32 1.0, %v1627
    %v1629 = vrcp.pop %v1614
    %v1630 = vmul.f32 1.0, %v1629
    %v1631 = vmul.f32 %v1575, %v1616
    %v1632 = vmul.f32 %v1576, %v1618
    %v1633 = vmul.f32 %v1577, %v1620
    %v1634 = vmul.f32 %v1578, %v1622
    %v1635 = vmul.f32 %v1579, %v1624
    %v1636 = vmul.f32 %v1580, %v1626
    %v1637 = vmul.f32 %v1581, %v1628
    %v1638 = vmul.f32 %v1582, %v1630
    %v1639 = vmul.f32 %v1631, %v491
    %v1640 = vmul.f32 %v1632, %v492
    %v1641 = vmul.f32 %v1633, %v493
    %v1642 = vmul.f32 %v1634, %v494
    %v1643 = vmul.f32 %v1635, %v495
    %v1644 = vmul.f32 %v1636, %v496
    %v1645 = vmul.f32 %v1637, %v497
    %v1646 = vmul.f32 %v1638, %v498
    %v1647 = vpack.c.bf16 %v1640, %v1639
    %v1648 = vpack.c.bf16 %v1642, %v1641
    %v1649 = vpack.c.bf16 %v1644, %v1643
    %v1650 = vpack.c.bf16 %v1646, %v1645
    %v1651 = vld [vmem:[%s29] sm:$0xf]
    %v1652 = vld [vmem:[%s29 + $0x4] sm:$0xf]
    %v1653 = vld [vmem:[%s29 + $0x8] sm:$0xf]
    %v1654 = vld [vmem:[%s29 + $0xc] sm:$0xf]
    %v1655 = vld [vmem:[%s29 + $0x10] sm:$0xf]
    %v1656 = vld [vmem:[%s29 + $0x14] sm:$0xf]
    %v1657 = vld [vmem:[%s29 + $0x18] sm:$0xf]
    %v1658 = vld [vmem:[%s29 + $0x1c] sm:$0xf]
    %v1659 = vld [vmem:[%s31] sm:$0x1]
    %v1661 = vlaneseq
    %v1662 = vshrl.u32 %v1661, 7
    %v1663 = vsub.s32 0, %v1662
    %v1664 = vrot.slane %v1659, %v1663
    %v1674 = vunpack.c.l.b16 %v1651
    %v1675 = vunpack.c.l.b16 %v1652
    %v1676 = vunpack.c.l.b16 %v1653
    %v1677 = vunpack.c.l.b16 %v1654
    %v1678 = vunpack.c.l.b16 %v1655
    %v1679 = vunpack.c.l.b16 %v1656
    %v1680 = vunpack.c.l.b16 %v1657
    %v1681 = vunpack.c.l.b16 %v1658
    %v1682 = vpack.c.b16 %v1675, %v1674
    %v1683 = vpack.c.b16 %v1677, %v1676
    %v1684 = vpack.c.b16 %v1679, %v1678
    %v1685 = vpack.c.b16 %v1681, %v1680
    %v1691 = vsel %vm624, %v1647, 0
    %v1694 = vsel %vm624, %v1648, 0
    %v1697 = vsel %vm624, %v1649, 0
    %v1700 = vsel %vm624, %v1650, 0
    %1702 = vmatprep.subr.bf16.mxu0 0
    %1703 = vmatpush1.bf16.msra.mxu0 %v1682
    %1704 = vmatprep.subr.bf16.mxu0 0
    %1705 = vmatpush1.bf16.msra.mxu0 %v1683
    %1706 = vmatprep.subr.bf16.mxu0 0
    %1707 = vmatpush1.bf16.msra.mxu0 %v1684
    %1708 = vmatprep.subr.bf16.mxu0 0
    %1709 = vmatpush1.bf16.msra.mxu0 %v1685
    %1710 = vmatprep.subr.bf16.mxu0 0
    %1711 = vmatpush1.bf16.msra.mxu0 0
    %1712 = vmatprep.subr.bf16.mxu0 0
    %1713 = vmatpush1.bf16.msra.mxu0 0
    %1714 = vmatprep.subr.bf16.mxu0 0
    %1715 = vmatpush1.bf16.msra.mxu0 0
    %1716 = vmatprep.subr.bf16.mxu0 0
    %1717 = vmatpush1.bf16.msra.mxu0 0
    %1718 = vmatprep.subr.bf16.mxu0 0
    %1719 = vmatpush1.bf16.msra.mxu0 0
    %1720 = vmatprep.subr.bf16.mxu0 0
    %1721 = vmatpush1.bf16.msra.mxu0 0
    %1722 = vmatprep.subr.bf16.mxu0 0
    %1723 = vmatpush1.bf16.msra.mxu0 0
    %1724 = vmatprep.subr.bf16.mxu0 0
    %1725 = vmatpush1.bf16.msra.mxu0 0
    %1726 = vmatprep.subr.bf16.mxu0 0
    %1727 = vmatpush1.bf16.msra.mxu0 0
    %1728 = vmatprep.subr.bf16.mxu0 0
    %1729 = vmatpush1.bf16.msra.mxu0 0
    %1730 = vmatprep.subr.bf16.mxu0 0
    %1731 = vmatpush1.bf16.msra.mxu0 0
    %1732 = vmatprep.subr.bf16.mxu0 0
    %1733 = vmatpush1.bf16.msra.mxu0 0
    %1734 = vmatprep.mubr.bf16.mxu0 0
    %1735 = vmatmul.mubr.bf16.gmra.mrb[0].mxu0 %v1691
    %v1736 = vpop.f32.mrb[0].mxu0
    %v1737 = vadd.f32 %v1664, %v1736
    %v1738 = vpop.f32.mrb[0].mxu0
    %v1739 = vpop.f32.mrb[0].mxu0
    %v1740 = vadd.f32 %v1664, %v1739
    %v1741 = vpop.f32.mrb[0].mxu0
    %1742 = vmatprep.mubr.bf16.mxu0 0
    %1743 = vmatmul.mubr.bf16.gmra.mrb[0].mxu0 %v1694
    %v1744 = vpop.f32.mrb[0].mxu0
    %v1745 = vadd.f32 %v1664, %v1744
    %v1746 = vpop.f32.mrb[0].mxu0
    %v1747 = vpop.f32.mrb[0].mxu0
    %v1748 = vadd.f32 %v1664, %v1747
    %v1749 = vpop.f32.mrb[0].mxu0
    %1750 = vmatprep.mubr.bf16.mxu0 0
    %1751 = vmatmul.mubr.bf16.gmra.mrb[0].mxu0 %v1697
    %v1752 = vpop.f32.mrb[0].mxu0
    %v1753 = vadd.f32 %v1664, %v1752
    %v1754 = vpop.f32.mrb[0].mxu0
    %v1755 = vpop.f32.mrb[0].mxu0
    %v1756 = vadd.f32 %v1664, %v1755
    %v1757 = vpop.f32.mrb[0].mxu0
    %1758 = vmatprep.mubr.bf16.mxu0 0
    %1759 = vmatmul.mubr.bf16.gmra.mrb[0].mxu0 %v1700
    %v1760 = vpop.f32.mrb[0].mxu0
    %v1761 = vadd.f32 %v1664, %v1760
    %v1762 = vpop.f32.mrb[0].mxu0
    %v1763 = vpop.f32.mrb[0].mxu0
    %v1764 = vadd.f32 %v1664, %v1763
    %v1765 = vpop.f32.mrb[0].mxu0
    %1766 = vdwg.mxu0
    %v1767 = vmul.f32 %v1737, %v1737
    %v1768 = vmul.f32 %v1740, %v1740
    %v1769 = vmul.f32 %v1745, %v1745
    %v1770 = vmul.f32 %v1748, %v1748
    %v1771 = vmul.f32 %v1753, %v1753
    %v1772 = vmul.f32 %v1756, %v1756
    %v1773 = vmul.f32 %v1761, %v1761
    %v1774 = vmul.f32 %v1764, %v1764
    %v1775 = vsel %vm178, %v1767, 0.0
    %1776 = vadd.xlane.f32.xlu0 %v1775
    %v1777 = vpop.xlane.xlu0 %1776
    %v1778 = vsel %vm178, %v1768, 0.0
    %1779 = vadd.xlane.f32.xlu0 %v1778
    %v1780 = vpop.xlane.xlu0 %1779
    %v1781 = vsel %vm178, %v1769, 0.0
    %1782 = vadd.xlane.f32.xlu0 %v1781
    %v1783 = vpop.xlane.xlu0 %1782
    %v1784 = vsel %vm178, %v1770, 0.0
    %1785 = vadd.xlane.f32.xlu0 %v1784
    %v1786 = vpop.xlane.xlu0 %1785
    %v1787 = vsel %vm178, %v1771, 0.0
    %1788 = vadd.xlane.f32.xlu0 %v1787
    %v1789 = vpop.xlane.xlu0 %1788
    %v1790 = vsel %vm178, %v1772, 0.0
    %1791 = vadd.xlane.f32.xlu0 %v1790
    %v1792 = vpop.xlane.xlu0 %1791
    %v1793 = vsel %vm178, %v1773, 0.0
    %1794 = vadd.xlane.f32.xlu0 %v1793
    %v1795 = vpop.xlane.xlu0 %1794
    %v1796 = vsel %vm178, %v1774, 0.0
    %1797 = vadd.xlane.f32.xlu0 %v1796
    %v1798 = vpop.xlane.xlu0 %1797
    %v1799 = vmul.f32 %v1777, %v203
    %v1800 = vmul.f32 %v1780, %v203
    %v1801 = vmul.f32 %v1783, %v203
    %v1802 = vmul.f32 %v1786, %v203
    %v1803 = vmul.f32 %v1789, %v203
    %v1804 = vmul.f32 %v1792, %v203
    %v1805 = vmul.f32 %v1795, %v203
    %v1806 = vmul.f32 %v1798, %v203
    %v1807 = vadd.f32 %v1799, 1e-05
    %v1808 = vadd.f32 %v1800, 1e-05
    %v1809 = vadd.f32 %v1801, 1e-05
    %v1810 = vadd.f32 %v1802, 1e-05
    %v1811 = vadd.f32 %v1803, 1e-05
    %v1812 = vadd.f32 %v1804, 1e-05
    %v1813 = vadd.f32 %v1805, 1e-05
    %v1814 = vadd.f32 %v1806, 1e-05
    %v1815 = vrsqrt.pop %v1807
    %v1816 = vrsqrt.pop %v1808
    %v1817 = vrsqrt.pop %v1809
    %v1818 = vrsqrt.pop %v1810
    %v1819 = vrsqrt.pop %v1811
    %v1820 = vrsqrt.pop %v1812
    %v1821 = vrsqrt.pop %v1813
    %v1822 = vrsqrt.pop %v1814
    %v1823 = vmul.f32 %v1737, %v1815
    %v1824 = vmul.f32 %v1740, %v1816
    %v1825 = vmul.f32 %v1745, %v1817
    %v1826 = vmul.f32 %v1748, %v1818
    %v1827 = vmul.f32 %v1753, %v1819
    %v1828 = vmul.f32 %v1756, %v1820
    %v1829 = vmul.f32 %v1761, %v1821
    %v1830 = vmul.f32 %v1764, %v1822
    %v1831 = vld [vmem:[%s33] sm:$0x1]
    %v1833 = vlaneseq
    %v1834 = vshrl.u32 %v1833, 7
    %v1835 = vsub.s32 0, %v1834
    %v1836 = vrot.slane %v1831, %v1835
    %v1838 = vmul.f32 %v1823, %v1836
    %v1839 = vmul.f32 %v1824, %v1836
    %v1840 = vmul.f32 %v1825, %v1836
    %v1841 = vmul.f32 %v1826, %v1836
    %v1842 = vmul.f32 %v1827, %v1836
    %v1843 = vmul.f32 %v1828, %v1836
    %v1844 = vmul.f32 %v1829, %v1836
    %v1845 = vmul.f32 %v1830, %v1836
    %v1846 = vpack.c.bf16 %v1839, %v1838
    %v1847 = vpack.c.bf16 %v1841, %v1840
    %v1848 = vpack.c.bf16 %v1843, %v1842
    %v1849 = vpack.c.bf16 %v1845, %v1844
    %v1850 = vld [vmem:[%s35] sm:$0xf]
    %v1851 = vld [vmem:[%s35 + $0x4] sm:$0xf]
    %v1852 = vld [vmem:[%s35 + $0x8] sm:$0xf]
    %v1853 = vld [vmem:[%s35 + $0xc] sm:$0xf]
    %v1854 = vld [vmem:[%s37] sm:$0x1]
    %v1856 = vlaneseq
    %v1857 = vshrl.u32 %v1856, 7
    %v1858 = vsub.s32 0, %v1857
    %v1859 = vrot.slane %v1854, %v1858
    %v1865 = vunpack.c.l.b16 %v1850
    %v1866 = vunpack.c.l.b16 %v1851
    %v1867 = vunpack.c.l.b16 %v1852
    %v1868 = vunpack.c.l.b16 %v1853
    %v1869 = vpack.c.b16 %v1866, %v1865
    %v1870 = vpack.c.b16 %v1868, %v1867
    %v1874 = vsel %vm178, %v1846, 0
    %v1877 = vsel %vm178, %v1847, 0
    %v1880 = vsel %vm178, %v1848, 0
    %v1883 = vsel %vm178, %v1849, 0
    %1885 = vmatprep.subr.bf16.mxu0 0
    %1886 = vmatpush1.bf16.msra.mxu0 %v1869
    %1887 = vmatprep.subr.bf16.mxu0 0
    %1888 = vmatpush1.bf16.msra.mxu0 %v1870
    %1889 = vmatprep.subr.bf16.mxu0 0
    %1890 = vmatpush1.bf16.msra.mxu0 0
    %1891 = vmatprep.subr.bf16.mxu0 0
    %1892 = vmatpush1.bf16.msra.mxu0 0
    %1893 = vmatprep.subr.bf16.mxu0 0
    %1894 = vmatpush1.bf16.msra.mxu0 0
    %1895 = vmatprep.subr.bf16.mxu0 0
    %1896 = vmatpush1.bf16.msra.mxu0 0
    %1897 = vmatprep.subr.bf16.mxu0 0
    %1898 = vmatpush1.bf16.msra.mxu0 0
    %1899 = vmatprep.subr.bf16.mxu0 0
    %1900 = vmatpush1.bf16.msra.mxu0 0
    %1901 = vmatprep.subr.bf16.mxu0 0
    %1902 = vmatpush1.bf16.msra.mxu0 0
    %1903 = vmatprep.subr.bf16.mxu0 0
    %1904 = vmatpush1.bf16.msra.mxu0 0
    %1905 = vmatprep.subr.bf16.mxu0 0
    %1906 = vmatpush1.bf16.msra.mxu0 0
    %1907 = vmatprep.subr.bf16.mxu0 0
    %1908 = vmatpush1.bf16.msra.mxu0 0
    %1909 = vmatprep.subr.bf16.mxu0 0
    %1910 = vmatpush1.bf16.msra.mxu0 0
    %1911 = vmatprep.subr.bf16.mxu0 0
    %1912 = vmatpush1.bf16.msra.mxu0 0
    %1913 = vmatprep.subr.bf16.mxu0 0
    %1914 = vmatpush1.bf16.msra.mxu0 0
    %1915 = vmatprep.subr.bf16.mxu0 0
    %1916 = vmatpush1.bf16.msra.mxu0 0
    %1917 = vmatprep.mubr.bf16.mxu0 0
    %1918 = vmatmul.mubr.bf16.gmra.mrb[0].mxu0 %v1874
    %v1919 = vpop.f32.mrb[0].mxu0
    %v1920 = vadd.f32 %v1859, %v1919
    %v1921 = vpop.f32.mrb[0].mxu0
    %v1922 = vpop.f32.mrb[0].mxu0
    %v1923 = vadd.f32 %v1859, %v1922
    %v1924 = vpop.f32.mrb[0].mxu0
    %1925 = vmatprep.mubr.bf16.mxu0 0
    %1926 = vmatmul.mubr.bf16.gmra.mrb[0].mxu0 %v1877
    %v1927 = vpop.f32.mrb[0].mxu0
    %v1928 = vadd.f32 %v1859, %v1927
    %v1929 = vpop.f32.mrb[0].mxu0
    %v1930 = vpop.f32.mrb[0].mxu0
    %v1931 = vadd.f32 %v1859, %v1930
    %v1932 = vpop.f32.mrb[0].mxu0
    %1933 = vmatprep.mubr.bf16.mxu0 0
    %1934 = vmatmul.mubr.bf16.gmra.mrb[0].mxu0 %v1880
    %v1935 = vpop.f32.mrb[0].mxu0
    %v1936 = vadd.f32 %v1859, %v1935
    %v1937 = vpop.f32.mrb[0].mxu0
    %v1938 = vpop.f32.mrb[0].mxu0
    %v1939 = vadd.f32 %v1859, %v1938
    %v1940 = vpop.f32.mrb[0].mxu0
    %1941 = vmatprep.mubr.bf16.mxu0 0
    %1942 = vmatmul.mubr.bf16.gmra.mrb[0].mxu0 %v1883
    %v1943 = vpop.f32.mrb[0].mxu0
    %v1944 = vadd.f32 %v1859, %v1943
    %v1945 = vpop.f32.mrb[0].mxu0
    %v1946 = vpop.f32.mrb[0].mxu0
    %v1947 = vadd.f32 %v1859, %v1946
    %v1948 = vpop.f32.mrb[0].mxu0
    %1949 = vdwg.mxu0
    %v1950 = vld [vmem:[%s39] sm:$0xf]
    %v1951 = vld [vmem:[%s39 + $0x4] sm:$0xf]
    %v1952 = vld [vmem:[%s39 + $0x8] sm:$0xf]
    %v1953 = vld [vmem:[%s39 + $0xc] sm:$0xf]
    %v1954 = vld [vmem:[%s41] sm:$0x1]
    %v1956 = vlaneseq
    %v1957 = vshrl.u32 %v1956, 7
    %v1958 = vsub.s32 0, %v1957
    %v1959 = vrot.slane %v1954, %v1958
    %v1965 = vunpack.c.l.b16 %v1950
    %v1966 = vunpack.c.l.b16 %v1951
    %v1967 = vunpack.c.l.b16 %v1952
    %v1968 = vunpack.c.l.b16 %v1953
    %v1969 = vpack.c.b16 %v1966, %v1965
    %v1970 = vpack.c.b16 %v1968, %v1967
    %1973 = vmatprep.subr.bf16.mxu0 0
    %1974 = vmatpush1.bf16.msra.mxu0 %v1969
    %1975 = vmatprep.subr.bf16.mxu0 0
    %1976 = vmatpush1.bf16.msra.mxu0 %v1970
    %1977 = vmatprep.subr.bf16.mxu0 0
    %1978 = vmatpush1.bf16.msra.mxu0 0
    %1979 = vmatprep.subr.bf16.mxu0 0
    %1980 = vmatpush1.bf16.msra.mxu0 0
    %1981 = vmatprep.subr.bf16.mxu0 0
    %1982 = vmatpush1.bf16.msra.mxu0 0
    %1983 = vmatprep.subr.bf16.mxu0 0
    %1984 = vmatpush1.bf16.msra.mxu0 0
    %1985 = vmatprep.subr.bf16.mxu0 0
    %1986 = vmatpush1.bf16.msra.mxu0 0
    %1987 = vmatprep.subr.bf16.mxu0 0
    %1988 = vmatpush1.bf16.msra.mxu0 0
    %1989 = vmatprep.subr.bf16.mxu0 0
    %1990 = vmatpush1.bf16.msra.mxu0 0
    %1991 = vmatprep.subr.bf16.mxu0 0
    %1992 = vmatpush1.bf16.msra.mxu0 0
    %1993 = vmatprep.subr.bf16.mxu0 0
    %1994 = vmatpush1.bf16.msra.mxu0 0
    %1995 = vmatprep.subr.bf16.mxu0 0
    %1996 = vmatpush1.bf16.msra.mxu0 0
    %1997 = vmatprep.subr.bf16.mxu0 0
    %1998 = vmatpush1.bf16.msra.mxu0 0
    %1999 = vmatprep.subr.bf16.mxu0 0
    %2000 = vmatpush1.bf16.msra.mxu0 0
    %2001 = vmatprep.subr.bf16.mxu0 0
    %2002 = vmatpush1.bf16.msra.mxu0 0
    %2003 = vmatprep.subr.bf16.mxu0 0
    %2004 = vmatpush1.bf16.msra.mxu0 0
    %2005 = vmatprep.mubr.bf16.mxu0 0
    %2006 = vmatmul.mubr.bf16.gmra.mrb[0].mxu0 %v1874
    %v2007 = vpop.f32.mrb[0].mxu0
    %v2008 = vadd.f32 %v1959, %v2007
    %v2009 = vpop.f32.mrb[0].mxu0
    %v2010 = vpop.f32.mrb[0].mxu0
    %v2011 = vadd.f32 %v1959, %v2010
    %v2012 = vpop.f32.mrb[0].mxu0
    %2013 = vmatprep.mubr.bf16.mxu0 0
    %2014 = vmatmul.mubr.bf16.gmra.mrb[0].mxu0 %v1877
    %v2015 = vpop.f32.mrb[0].mxu0
    %v2016 = vadd.f32 %v1959, %v2015
    %v2017 = vpop.f32.mrb[0].mxu0
    %v2018 = vpop.f32.mrb[0].mxu0
    %v2019 = vadd.f32 %v1959, %v2018
    %v2020 = vpop.f32.mrb[0].mxu0
    %2021 = vmatprep.mubr.bf16.mxu0 0
    %2022 = vmatmul.mubr.bf16.gmra.mrb[0].mxu0 %v1880
    %v2023 = vpop.f32.mrb[0].mxu0
    %v2024 = vadd.f32 %v1959, %v2023
    %v2025 = vpop.f32.mrb[0].mxu0
    %v2026 = vpop.f32.mrb[0].mxu0
    %v2027 = vadd.f32 %v1959, %v2026
    %v2028 = vpop.f32.mrb[0].mxu0
    %2029 = vmatprep.mubr.bf16.mxu0 0
    %2030 = vmatmul.mubr.bf16.gmra.mrb[0].mxu0 %v1883
    %v2031 = vpop.f32.mrb[0].mxu0
    %v2032 = vadd.f32 %v1959, %v2031
    %v2033 = vpop.f32.mrb[0].mxu0
    %v2034 = vpop.f32.mrb[0].mxu0
    %v2035 = vadd.f32 %v1959, %v2034
    %v2036 = vpop.f32.mrb[0].mxu0
    %2037 = vdwg.mxu0
    %v2038 = vxor.u32 %v2008, 2147483648
    %v2039 = vxor.u32 %v2011, 2147483648
    %v2040 = vxor.u32 %v2016, 2147483648
    %v2041 = vxor.u32 %v2019, 2147483648
    %v2042 = vxor.u32 %v2024, 2147483648
    %v2043 = vxor.u32 %v2027, 2147483648
    %v2044 = vxor.u32 %v2032, 2147483648
    %v2045 = vxor.u32 %v2035, 2147483648
    %v2046 = vmul.f32 %v2038, 1.442695
    %v2047 = vpow.pop %v2046
    %v2048 = vmul.f32 %v2039, 1.442695
    %v2049 = vpow.pop %v2048
    %v2050 = vmul.f32 %v2040, 1.442695
    %v2051 = vpow.pop %v2050
    %v2052 = vmul.f32 %v2041, 1.442695
    %v2053 = vpow.pop %v2052
    %v2054 = vmul.f32 %v2042, 1.442695
    %v2055 = vpow.pop %v2054
    %v2056 = vmul.f32 %v2043, 1.442695
    %v2057 = vpow.pop %v2056
    %v2058 = vmul.f32 %v2044, 1.442695
    %v2059 = vpow.pop %v2058
    %v2060 = vmul.f32 %v2045, 1.442695
    %v2061 = vpow.pop %v2060
    %v2062 = vadd.f32 %v2047, 1.0
    %v2063 = vadd.f32 %v2049, 1.0
    %v2064 = vadd.f32 %v2051, 1.0
    %v2065 = vadd.f32 %v2053, 1.0
    %v2066 = vadd.f32 %v2055, 1.0
    %v2067 = vadd.f32 %v2057, 1.0
    %v2068 = vadd.f32 %v2059, 1.0
    %v2069 = vadd.f32 %v2061, 1.0
    %v2070 = vrcp.pop %v2062
    %v2071 = vmul.f32 1.0, %v2070
    %v2072 = vrcp.pop %v2063
    %v2073 = vmul.f32 1.0, %v2072
    %v2074 = vrcp.pop %v2064
    %v2075 = vmul.f32 1.0, %v2074
    %v2076 = vrcp.pop %v2065
    %v2077 = vmul.f32 1.0, %v2076
    %v2078 = vrcp.pop %v2066
    %v2079 = vmul.f32 1.0, %v2078
    %v2080 = vrcp.pop %v2067
    %v2081 = vmul.f32 1.0, %v2080
    %v2082 = vrcp.pop %v2068
    %v2083 = vmul.f32 1.0, %v2082
    %v2084 = vrcp.pop %v2069
    %v2085 = vmul.f32 1.0, %v2084
    %v2086 = vmul.f32 %v2008, %v2071
    %v2087 = vmul.f32 %v2011, %v2073
    %v2088 = vmul.f32 %v2016, %v2075
    %v2089 = vmul.f32 %v2019, %v2077
    %v2090 = vmul.f32 %v2024, %v2079
    %v2091 = vmul.f32 %v2027, %v2081
    %v2092 = vmul.f32 %v2032, %v2083
    %v2093 = vmul.f32 %v2035, %v2085
    %2094 = vrot.lane.b32.xlu0 %v1920, 64
    %v2095 = vpop.permute.xlu0 %2094
    %v2096 = vsel %vm499, %v2095, %v1920
    %2097 = vrot.lane.b32.xlu0 %v1923, 64
    %v2098 = vpop.permute.xlu0 %2097
    %v2099 = vsel %vm499, %v2098, %v1923
    %2100 = vrot.lane.b32.xlu0 %v1928, 64
    %v2101 = vpop.permute.xlu0 %2100
    %v2102 = vsel %vm499, %v2101, %v1928
    %2103 = vrot.lane.b32.xlu0 %v1931, 64
    %v2104 = vpop.permute.xlu0 %2103
    %v2105 = vsel %vm499, %v2104, %v1931
    %2106 = vrot.lane.b32.xlu0 %v1936, 64
    %v2107 = vpop.permute.xlu0 %2106
    %v2108 = vsel %vm499, %v2107, %v1936
    %2109 = vrot.lane.b32.xlu0 %v1939, 64
    %v2110 = vpop.permute.xlu0 %2109
    %v2111 = vsel %vm499, %v2110, %v1939
    %2112 = vrot.lane.b32.xlu0 %v1944, 64
    %v2113 = vpop.permute.xlu0 %2112
    %v2114 = vsel %vm499, %v2113, %v1944
    %2115 = vrot.lane.b32.xlu0 %v1947, 64
    %v2116 = vpop.permute.xlu0 %2115
    %v2117 = vsel %vm499, %v2116, %v1947
    %2118 = vrot.lane.b32.xlu0 %v2096, 64
    %v2119 = vpop.permute.xlu0 %2118
    %2120 = vrot.lane.b32.xlu0 %v2099, 64
    %v2121 = vpop.permute.xlu0 %2120
    %2122 = vrot.lane.b32.xlu0 %v2102, 64
    %v2123 = vpop.permute.xlu0 %2122
    %2124 = vrot.lane.b32.xlu0 %v2105, 64
    %v2125 = vpop.permute.xlu0 %2124
    %2126 = vrot.lane.b32.xlu0 %v2108, 64
    %v2127 = vpop.permute.xlu0 %2126
    %2128 = vrot.lane.b32.xlu0 %v2111, 64
    %v2129 = vpop.permute.xlu0 %2128
    %2130 = vrot.lane.b32.xlu0 %v2114, 64
    %v2131 = vpop.permute.xlu0 %2130
    %2132 = vrot.lane.b32.xlu0 %v2117, 64
    %v2133 = vpop.permute.xlu0 %2132
    %v2134 = vsel %vm499, %v2119, %v1920
    %v2135 = vsel %vm499, %v2121, %v1923
    %v2136 = vsel %vm499, %v2123, %v1928
    %v2137 = vsel %vm499, %v2125, %v1931
    %v2138 = vsel %vm499, %v2127, %v1936
    %v2139 = vsel %vm499, %v2129, %v1939
    %v2140 = vsel %vm499, %v2131, %v1944
    %v2141 = vsel %vm499, %v2133, %v1947
    %v2142 = vmul.f32 %v2134, %v554
    %v2143 = vmul.f32 %v2135, %v554
    %v2144 = vmul.f32 %v2136, %v554
    %v2145 = vmul.f32 %v2137, %v554
    %v2146 = vmul.f32 %v2138, %v554
    %v2147 = vmul.f32 %v2139, %v554
    %v2148 = vmul.f32 %v2140, %v554
    %v2149 = vmul.f32 %v2141, %v554
    %v2150 = vmul.f32 %v2134, %v570
    %v2151 = vmul.f32 %v2135, %v570
    %v2152 = vmul.f32 %v2136, %v570
    %v2153 = vmul.f32 %v2137, %v570
    %v2154 = vmul.f32 %v2138, %v570
    %v2155 = vmul.f32 %v2139, %v570
    %v2156 = vmul.f32 %v2140, %v570
    %v2157 = vmul.f32 %v2141, %v570
    %v2158 = vld [vmem:[%s43] sm:$0xf]
    %v2159 = vld [vmem:[%s43 + $0x4] sm:$0xf]
    %v2160 = vld [vmem:[%s43 + $0x8] sm:$0xf]
    %v2161 = vld [vmem:[%s43 + $0xc] sm:$0xf]
    %v2162 = vld [vmem:[%s43 + $0x10] sm:$0xf]
    %v2163 = vld [vmem:[%s43 + $0x14] sm:$0xf]
    %v2164 = vld [vmem:[%s43 + $0x18] sm:$0xf]
    %v2165 = vld [vmem:[%s43 + $0x1c] sm:$0xf]
    %v2166 = vpack.c.bf16 %v2143, %v2142
    %v2167 = vpack.c.bf16 %v2145, %v2144
    %v2168 = vpack.c.bf16 %v2147, %v2146
    %v2169 = vpack.c.bf16 %v2149, %v2148
    %v2170 = vld [vmem:[%s45] sm:$0xf]
    %v2171 = vld [vmem:[%s45 + $0x4] sm:$0xf]
    %v2172 = vld [vmem:[%s45 + $0x8] sm:$0xf]
    %v2173 = vld [vmem:[%s45 + $0xc] sm:$0xf]
    %v2174 = vld [vmem:[%s45 + $0x10] sm:$0xf]
    %v2175 = vld [vmem:[%s45 + $0x14] sm:$0xf]
    %v2176 = vld [vmem:[%s45 + $0x18] sm:$0xf]
    %v2177 = vld [vmem:[%s45 + $0x1c] sm:$0xf]
    %v2178 = vpack.c.bf16 %v1923, %v1920
    %v2179 = vpack.c.bf16 %v1931, %v1928
    %v2180 = vpack.c.bf16 %v1939, %v1936
    %v2181 = vpack.c.bf16 %v1947, %v1944
    %v2190 = vunpack.c.l.b16 %v2170
    %v2191 = vunpack.c.l.b16 %v2171
    %v2192 = vunpack.c.l.b16 %v2172
    %v2193 = vunpack.c.l.b16 %v2173
    %v2194 = vunpack.c.l.b16 %v2174
    %v2195 = vunpack.c.l.b16 %v2175
    %v2196 = vunpack.c.l.b16 %v2176
    %v2197 = vunpack.c.l.b16 %v2177
    %v2198 = vpack.c.b16 %v2191, %v2190
    %v2199 = vpack.c.b16 %v2193, %v2192
    %v2200 = vpack.c.b16 %v2195, %v2194
    %v2201 = vpack.c.b16 %v2197, %v2196
    %v2203 = vsel %vm624, %v2198, 0
    %v2206 = vsel %vm624, %v2199, 0
    %v2209 = vsel %vm624, %v2200, 0
    %v2212 = vsel %vm624, %v2201, 0
    %2214 = vmatprep.subr.bf16.mxu0 0
    %2215 = vmatpush1.bf16.msra.mxu0 %v2178
    %2216 = vmatprep.subr.bf16.mxu0 0
    %2217 = vmatpush1.bf16.msra.mxu0 %v2179
    %2218 = vmatprep.subr.bf16.mxu0 0
    %2219 = vmatpush1.bf16.msra.mxu0 %v2180
    %2220 = vmatprep.subr.bf16.mxu0 0
    %2221 = vmatpush1.bf16.msra.mxu0 %v2181
    %2222 = vmatprep.subr.bf16.mxu0 0
    %2223 = vmatpush1.bf16.msra.mxu0 0
    %2224 = vmatprep.subr.bf16.mxu0 0
    %2225 = vmatpush1.bf16.msra.mxu0 0
    %2226 = vmatprep.subr.bf16.mxu0 0
    %2227 = vmatpush1.bf16.msra.mxu0 0
    %2228 = vmatprep.subr.bf16.mxu0 0
    %2229 = vmatpush1.bf16.msra.mxu0 0
    %2230 = vmatprep.subr.bf16.mxu0 0
    %2231 = vmatpush1.bf16.msra.mxu0 0
    %2232 = vmatprep.subr.bf16.mxu0 0
    %2233 = vmatpush1.bf16.msra.mxu0 0
    %2234 = vmatprep.subr.bf16.mxu0 0
    %2235 = vmatpush1.bf16.msra.mxu0 0
    %2236 = vmatprep.subr.bf16.mxu0 0
    %2237 = vmatpush1.bf16.msra.mxu0 0
    %2238 = vmatprep.subr.bf16.mxu0 0
    %2239 = vmatpush1.bf16.msra.mxu0 0
    %2240 = vmatprep.subr.bf16.mxu0 0
    %2241 = vmatpush1.bf16.msra.mxu0 0
    %2242 = vmatprep.subr.bf16.mxu0 0
    %2243 = vmatpush1.bf16.msra.mxu0 0
    %2244 = vmatprep.subr.bf16.mxu0 0
    %2245 = vmatpush1.bf16.msra.mxu0 0
    %2246 = vmatprep.mubr.bf16.mxu0 0
    %2247 = vmatmul.mubr.bf16.gmra.mrb[0].mxu0 %v2203
    %v2248 = vpop.f32.mrb[0].mxu0
    %v2249 = vadd.f32 0.0, %v2248
    %v2250 = vpop.f32.mrb[0].mxu0
    %v2251 = vpop.f32.mrb[0].mxu0
    %v2252 = vadd.f32 0.0, %v2251
    %v2253 = vpop.f32.mrb[0].mxu0
    %2254 = vmatprep.mubr.bf16.mxu0 0
    %2255 = vmatmul.mubr.bf16.gmra.mrb[0].mxu0 %v2206
    %v2256 = vpop.f32.mrb[0].mxu0
    %v2257 = vadd.f32 0.0, %v2256
    %v2258 = vpop.f32.mrb[0].mxu0
    %v2259 = vpop.f32.mrb[0].mxu0
    %v2260 = vadd.f32 0.0, %v2259
    %v2261 = vpop.f32.mrb[0].mxu0
    %2262 = vmatprep.mubr.bf16.mxu0 0
    %2263 = vmatmul.mubr.bf16.gmra.mrb[0].mxu0 %v2209
    %v2264 = vpop.f32.mrb[0].mxu0
    %v2265 = vadd.f32 0.0, %v2264
    %v2266 = vpop.f32.mrb[0].mxu0
    %v2267 = vpop.f32.mrb[0].mxu0
    %v2268 = vadd.f32 0.0, %v2267
    %v2269 = vpop.f32.mrb[0].mxu0
    %2270 = vmatprep.mubr.bf16.mxu0 0
    %2271 = vmatmul.mubr.bf16.gmra.mrb[0].mxu0 %v2212
    %v2272 = vpop.f32.mrb[0].mxu0
    %v2273 = vadd.f32 0.0, %v2272
    %v2274 = vpop.f32.mrb[0].mxu0
    %v2275 = vpop.f32.mrb[0].mxu0
    %v2276 = vadd.f32 0.0, %v2275
    %v2277 = vpop.f32.mrb[0].mxu0
    %2278 = vdwg.mxu0
    %v2287 = vunpack.c.l.b16 %v2158
    %v2288 = vunpack.c.l.b16 %v2159
    %v2289 = vunpack.c.l.b16 %v2160
    %v2290 = vunpack.c.l.b16 %v2161
    %v2291 = vunpack.c.l.b16 %v2162
    %v2292 = vunpack.c.l.b16 %v2163
    %v2293 = vunpack.c.l.b16 %v2164
    %v2294 = vunpack.c.l.b16 %v2165
    %v2295 = vpack.c.b16 %v2288, %v2287
    %v2296 = vpack.c.b16 %v2290, %v2289
    %v2297 = vpack.c.b16 %v2292, %v2291
    %v2298 = vpack.c.b16 %v2294, %v2293
    %2303 = vrot.lane.b32.xlu0 %v2166, 65
    %v2304 = vpop.permute.xlu0 %2303
    %2305 = vrot.lane.b32.xlu0 %v2167, 65
    %v2306 = vpop.permute.xlu0 %2305
    %2307 = vrot.lane.b32.xlu0 %v2168, 65
    %v2308 = vpop.permute.xlu0 %2307
    %2309 = vrot.lane.b32.xlu0 %v2169, 65
    %v2310 = vpop.permute.xlu0 %2309
    %v2316 = vsel %vm624, %v2295, 0
    %v2319 = vsel %vm624, %v2296, 0
    %v2322 = vsel %vm624, %v2297, 0
    %v2325 = vsel %vm624, %v2298, 0
    %2327 = vmatprep.subr.bf16.mxu0 0
    %2328 = vmatpush1.bf16.msra.mxu0 %v2304
    %2329 = vmatprep.subr.bf16.mxu0 0
    %2330 = vmatpush1.bf16.msra.mxu0 %v2306
    %2331 = vmatprep.subr.bf16.mxu0 0
    %2332 = vmatpush1.bf16.msra.mxu0 %v2308
    %2333 = vmatprep.subr.bf16.mxu0 0
    %2334 = vmatpush1.bf16.msra.mxu0 %v2310
    %2335 = vmatprep.subr.bf16.mxu0 0
    %2336 = vmatpush1.bf16.msra.mxu0 0
    %2337 = vmatprep.subr.bf16.mxu0 0
    %2338 = vmatpush1.bf16.msra.mxu0 0
    %2339 = vmatprep.subr.bf16.mxu0 0
    %2340 = vmatpush1.bf16.msra.mxu0 0
    %2341 = vmatprep.subr.bf16.mxu0 0
    %2342 = vmatpush1.bf16.msra.mxu0 0
    %2343 = vmatprep.subr.bf16.mxu0 0
    %2344 = vmatpush1.bf16.msra.mxu0 0
    %2345 = vmatprep.subr.bf16.mxu0 0
    %2346 = vmatpush1.bf16.msra.mxu0 0
    %2347 = vmatprep.subr.bf16.mxu0 0
    %2348 = vmatpush1.bf16.msra.mxu0 0
    %2349 = vmatprep.subr.bf16.mxu0 0
    %2350 = vmatpush1.bf16.msra.mxu0 0
    %2351 = vmatprep.subr.bf16.mxu0 0
    %2352 = vmatpush1.bf16.msra.mxu0 0
    %2353 = vmatprep.subr.bf16.mxu0 0
    %2354 = vmatpush1.bf16.msra.mxu0 0
    %2355 = vmatprep.subr.bf16.mxu0 0
    %2356 = vmatpush1.bf16.msra.mxu0 0
    %2357 = vmatprep.subr.bf16.mxu0 0
    %2358 = vmatpush1.bf16.msra.mxu0 0
    %2359 = vmatprep.mubr.bf16.mxu0 0
    %2360 = vmatmul.mubr.bf16.gmra.mrb[0].mxu0 %v2316
    %v2361 = vpop.f32.mrb[0].mxu0
    %v2362 = vadd.f32 %v2249, %v2361
    %v2363 = vpop.f32.mrb[0].mxu0
    %v2364 = vpop.f32.mrb[0].mxu0
    %v2365 = vadd.f32 %v2252, %v2364
    %v2366 = vpop.f32.mrb[0].mxu0
    %2367 = vmatprep.mubr.bf16.mxu0 0
    %2368 = vmatmul.mubr.bf16.gmra.mrb[0].mxu0 %v2319
    %v2369 = vpop.f32.mrb[0].mxu0
    %v2370 = vadd.f32 %v2257, %v2369
    %v2371 = vpop.f32.mrb[0].mxu0
    %v2372 = vpop.f32.mrb[0].mxu0
    %v2373 = vadd.f32 %v2260, %v2372
    %v2374 = vpop.f32.mrb[0].mxu0
    %2375 = vmatprep.mubr.bf16.mxu0 0
    %2376 = vmatmul.mubr.bf16.gmra.mrb[0].mxu0 %v2322
    %v2377 = vpop.f32.mrb[0].mxu0
    %v2378 = vadd.f32 %v2265, %v2377
    %v2379 = vpop.f32.mrb[0].mxu0
    %v2380 = vpop.f32.mrb[0].mxu0
    %v2381 = vadd.f32 %v2268, %v2380
    %v2382 = vpop.f32.mrb[0].mxu0
    %2383 = vmatprep.mubr.bf16.mxu0 0
    %2384 = vmatmul.mubr.bf16.gmra.mrb[0].mxu0 %v2325
    %v2385 = vpop.f32.mrb[0].mxu0
    %v2386 = vadd.f32 %v2273, %v2385
    %v2387 = vpop.f32.mrb[0].mxu0
    %v2388 = vpop.f32.mrb[0].mxu0
    %v2389 = vadd.f32 %v2276, %v2388
    %v2390 = vpop.f32.mrb[0].mxu0
    %2391 = vdwg.mxu0
    %v2392 = vld [vmem:[%s47] sm:$0xf]
    %v2393 = vld [vmem:[%s47 + $0x4] sm:$0xf]
    %v2394 = vld [vmem:[%s47 + $0x8] sm:$0xf]
    %v2395 = vld [vmem:[%s47 + $0xc] sm:$0xf]
    %v2396 = vld [vmem:[%s47 + $0x10] sm:$0xf]
    %v2397 = vld [vmem:[%s47 + $0x14] sm:$0xf]
    %v2398 = vld [vmem:[%s47 + $0x18] sm:$0xf]
    %v2399 = vld [vmem:[%s47 + $0x1c] sm:$0xf]
    %v2400 = vpack.c.bf16 %v2151, %v2150
    %v2401 = vpack.c.bf16 %v2153, %v2152
    %v2402 = vpack.c.bf16 %v2155, %v2154
    %v2403 = vpack.c.bf16 %v2157, %v2156
    %v2412 = vunpack.c.l.b16 %v2392
    %v2413 = vunpack.c.l.b16 %v2393
    %v2414 = vunpack.c.l.b16 %v2394
    %v2415 = vunpack.c.l.b16 %v2395
    %v2416 = vunpack.c.l.b16 %v2396
    %v2417 = vunpack.c.l.b16 %v2397
    %v2418 = vunpack.c.l.b16 %v2398
    %v2419 = vunpack.c.l.b16 %v2399
    %v2420 = vpack.c.b16 %v2413, %v2412
    %v2421 = vpack.c.b16 %v2415, %v2414
    %v2422 = vpack.c.b16 %v2417, %v2416
    %v2423 = vpack.c.b16 %v2419, %v2418
    %2428 = vrot.lane.b32.xlu0 %v2400, 127
    %v2429 = vpop.permute.xlu0 %2428
    %2430 = vrot.lane.b32.xlu0 %v2401, 127
    %v2431 = vpop.permute.xlu0 %2430
    %2432 = vrot.lane.b32.xlu0 %v2402, 127
    %v2433 = vpop.permute.xlu0 %2432
    %2434 = vrot.lane.b32.xlu0 %v2403, 127
    %v2435 = vpop.permute.xlu0 %2434
    %v2441 = vsel %vm624, %v2420, 0
    %v2444 = vsel %vm624, %v2421, 0
    %v2447 = vsel %vm624, %v2422, 0
    %v2450 = vsel %vm624, %v2423, 0
    %2452 = vmatprep.subr.bf16.mxu0 0
    %2453 = vmatpush1.bf16.msra.mxu0 %v2429
    %2454 = vmatprep.subr.bf16.mxu0 0
    %2455 = vmatpush1.bf16.msra.mxu0 %v2431
    %2456 = vmatprep.subr.bf16.mxu0 0
    %2457 = vmatpush1.bf16.msra.mxu0 %v2433
    %2458 = vmatprep.subr.bf16.mxu0 0
    %2459 = vmatpush1.bf16.msra.mxu0 %v2435
    %2460 = vmatprep.subr.bf16.mxu0 0
    %2461 = vmatpush1.bf16.msra.mxu0 0
    %2462 = vmatprep.subr.bf16.mxu0 0
    %2463 = vmatpush1.bf16.msra.mxu0 0
    %2464 = vmatprep.subr.bf16.mxu0 0
    %2465 = vmatpush1.bf16.msra.mxu0 0
    %2466 = vmatprep.subr.bf16.mxu0 0
    %2467 = vmatpush1.bf16.msra.mxu0 0
    %2468 = vmatprep.subr.bf16.mxu0 0
    %2469 = vmatpush1.bf16.msra.mxu0 0
    %2470 = vmatprep.subr.bf16.mxu0 0
    %2471 = vmatpush1.bf16.msra.mxu0 0
    %2472 = vmatprep.subr.bf16.mxu0 0
    %2473 = vmatpush1.bf16.msra.mxu0 0
    %2474 = vmatprep.subr.bf16.mxu0 0
    %2475 = vmatpush1.bf16.msra.mxu0 0
    %2476 = vmatprep.subr.bf16.mxu0 0
    %2477 = vmatpush1.bf16.msra.mxu0 0
    %2478 = vmatprep.subr.bf16.mxu0 0
    %2479 = vmatpush1.bf16.msra.mxu0 0
    %2480 = vmatprep.subr.bf16.mxu0 0
    %2481 = vmatpush1.bf16.msra.mxu0 0
    %2482 = vmatprep.subr.bf16.mxu0 0
    %2483 = vmatpush1.bf16.msra.mxu0 0
    %2484 = vmatprep.mubr.bf16.mxu0 0
    %2485 = vmatmul.mubr.bf16.gmra.mrb[0].mxu0 %v2441
    %v2486 = vpop.f32.mrb[0].mxu0
    %v2487 = vadd.f32 0.0, %v2486
    %v2488 = vpop.f32.mrb[0].mxu0
    %v2489 = vpop.f32.mrb[0].mxu0
    %v2490 = vadd.f32 0.0, %v2489
    %v2491 = vpop.f32.mrb[0].mxu0
    %2492 = vmatprep.mubr.bf16.mxu0 0
    %2493 = vmatmul.mubr.bf16.gmra.mrb[0].mxu0 %v2444
    %v2494 = vpop.f32.mrb[0].mxu0
    %v2495 = vadd.f32 0.0, %v2494
    %v2496 = vpop.f32.mrb[0].mxu0
    %v2497 = vpop.f32.mrb[0].mxu0
    %v2498 = vadd.f32 0.0, %v2497
    %v2499 = vpop.f32.mrb[0].mxu0
    %2500 = vmatprep.mubr.bf16.mxu0 0
    %2501 = vmatmul.mubr.bf16.gmra.mrb[0].mxu0 %v2447
    %v2502 = vpop.f32.mrb[0].mxu0
    %v2503 = vadd.f32 0.0, %v2502
    %v2504 = vpop.f32.mrb[0].mxu0
    %v2505 = vpop.f32.mrb[0].mxu0
    %v2506 = vadd.f32 0.0, %v2505
    %v2507 = vpop.f32.mrb[0].mxu0
    %2508 = vmatprep.mubr.bf16.mxu0 0
    %2509 = vmatmul.mubr.bf16.gmra.mrb[0].mxu0 %v2450
    %v2510 = vpop.f32.mrb[0].mxu0
    %v2511 = vadd.f32 0.0, %v2510
    %v2512 = vpop.f32.mrb[0].mxu0
    %v2513 = vpop.f32.mrb[0].mxu0
    %v2514 = vadd.f32 0.0, %v2513
    %v2515 = vpop.f32.mrb[0].mxu0
    %2516 = vdwg.mxu0
    %v2517 = vadd.f32 %v2362, %v2487
    %v2518 = vadd.f32 %v2365, %v2490
    %v2519 = vadd.f32 %v2370, %v2495
    %v2520 = vadd.f32 %v2373, %v2498
    %v2521 = vadd.f32 %v2378, %v2503
    %v2522 = vadd.f32 %v2381, %v2506
    %v2523 = vadd.f32 %v2386, %v2511
    %v2524 = vadd.f32 %v2389, %v2514
    %v2525 = vld [vmem:[%s49] sm:$0xff]
    %v2526 = vld [vmem:[%s49 + $0x8] sm:$0xff]
    %v2527 = vld [vmem:[%s49 + $0x10] sm:$0xff]
    %v2528 = vld [vmem:[%s49 + $0x18] sm:$0xff]
    %v2529 = vld [vmem:[%s49 + $0x20] sm:$0xff]
    %v2530 = vld [vmem:[%s49 + $0x28] sm:$0xff]
    %v2531 = vld [vmem:[%s49 + $0x30] sm:$0xff]
    %v2532 = vld [vmem:[%s49 + $0x38] sm:$0xff]
    %2534 = vset.pattern.permute.xlu0 0
    %2535 = vperm.xlu0 %2534, %v2525
    %v2536 = vpop.permute.xlu0 %2535
    %2539 = vset.pattern.permute.xlu0 0
    %2540 = vperm.xlu0 %2539, %v2526
    %v2541 = vpop.permute.xlu0 %2540
    %2544 = vset.pattern.permute.xlu0 0
    %2545 = vperm.xlu0 %2544, %v2527
    %v2546 = vpop.permute.xlu0 %2545
    %2549 = vset.pattern.permute.xlu0 0
    %2550 = vperm.xlu0 %2549, %v2528
    %v2551 = vpop.permute.xlu0 %2550
    %2554 = vset.pattern.permute.xlu0 0
    %2555 = vperm.xlu0 %2554, %v2529
    %v2556 = vpop.permute.xlu0 %2555
    %2559 = vset.pattern.permute.xlu0 0
    %2560 = vperm.xlu0 %2559, %v2530
    %v2561 = vpop.permute.xlu0 %2560
    %2564 = vset.pattern.permute.xlu0 0
    %2565 = vperm.xlu0 %2564, %v2531
    %v2566 = vpop.permute.xlu0 %2565
    %2569 = vset.pattern.permute.xlu0 0
    %2570 = vperm.xlu0 %2569, %v2532
    %v2571 = vpop.permute.xlu0 %2570
    %v2573 = vadd.f32 %v2517, %v2536
    %v2574 = vadd.f32 %v2518, %v2541
    %v2575 = vadd.f32 %v2519, %v2546
    %v2576 = vadd.f32 %v2520, %v2551
    %v2577 = vadd.f32 %v2521, %v2556
    %v2578 = vadd.f32 %v2522, %v2561
    %v2579 = vadd.f32 %v2523, %v2566
    %v2580 = vadd.f32 %v2524, %v2571
    %v2581 = vxor.u32 %v2573, 2147483648
    %v2582 = vxor.u32 %v2574, 2147483648
    %v2583 = vxor.u32 %v2575, 2147483648
    %v2584 = vxor.u32 %v2576, 2147483648
    %v2585 = vxor.u32 %v2577, 2147483648
    %v2586 = vxor.u32 %v2578, 2147483648
    %v2587 = vxor.u32 %v2579, 2147483648
    %v2588 = vxor.u32 %v2580, 2147483648
    %v2589 = vmul.f32 %v2581, 1.442695
    %v2590 = vpow.pop %v2589
    %v2591 = vmul.f32 %v2582, 1.442695
    %v2592 = vpow.pop %v2591
    %v2593 = vmul.f32 %v2583, 1.442695
    %v2594 = vpow.pop %v2593
    %v2595 = vmul.f32 %v2584, 1.442695
    %v2596 = vpow.pop %v2595
    %v2597 = vmul.f32 %v2585, 1.442695
    %v2598 = vpow.pop %v2597
    %v2599 = vmul.f32 %v2586, 1.442695
    %v2600 = vpow.pop %v2599
    %v2601 = vmul.f32 %v2587, 1.442695
    %v2602 = vpow.pop %v2601
    %v2603 = vmul.f32 %v2588, 1.442695
    %v2604 = vpow.pop %v2603
    %v2605 = vadd.f32 %v2590, 1.0
    %v2606 = vadd.f32 %v2592, 1.0
    %v2607 = vadd.f32 %v2594, 1.0
    %v2608 = vadd.f32 %v2596, 1.0
    %v2609 = vadd.f32 %v2598, 1.0
    %v2610 = vadd.f32 %v2600, 1.0
    %v2611 = vadd.f32 %v2602, 1.0
    %v2612 = vadd.f32 %v2604, 1.0
    %v2613 = vrcp.pop %v2605
    %v2614 = vmul.f32 1.0, %v2613
    %v2615 = vrcp.pop %v2606
    %v2616 = vmul.f32 1.0, %v2615
    %v2617 = vrcp.pop %v2607
    %v2618 = vmul.f32 1.0, %v2617
    %v2619 = vrcp.pop %v2608
    %v2620 = vmul.f32 1.0, %v2619
    %v2621 = vrcp.pop %v2609
    %v2622 = vmul.f32 1.0, %v2621
    %v2623 = vrcp.pop %v2610
    %v2624 = vmul.f32 1.0, %v2623
    %v2625 = vrcp.pop %v2611
    %v2626 = vmul.f32 1.0, %v2625
    %v2627 = vrcp.pop %v2612
    %v2628 = vmul.f32 1.0, %v2627
    %v2629 = vmul.f32 %v2573, %v2614
    %v2630 = vmul.f32 %v2574, %v2616
    %v2631 = vmul.f32 %v2575, %v2618
    %v2632 = vmul.f32 %v2576, %v2620
    %v2633 = vmul.f32 %v2577, %v2622
    %v2634 = vmul.f32 %v2578, %v2624
    %v2635 = vmul.f32 %v2579, %v2626
    %v2636 = vmul.f32 %v2580, %v2628
    %v2637 = vpack.c.bf16 %v2630, %v2629
    %v2638 = vpack.c.bf16 %v2632, %v2631
    %v2639 = vpack.c.bf16 %v2634, %v2633
    %v2640 = vpack.c.bf16 %v2636, %v2635
    %v2641 = vld [vmem:[%s51] sm:$0xf]
    %v2642 = vld [vmem:[%s51 + $0x4] sm:$0xf]
    %v2643 = vld [vmem:[%s51 + $0x8] sm:$0xf]
    %v2644 = vld [vmem:[%s51 + $0xc] sm:$0xf]
    %v2645 = vld [vmem:[%s51 + $0x10] sm:$0xf]
    %v2646 = vld [vmem:[%s51 + $0x14] sm:$0xf]
    %v2647 = vld [vmem:[%s51 + $0x18] sm:$0xf]
    %v2648 = vld [vmem:[%s51 + $0x1c] sm:$0xf]
    %v2649 = vld [vmem:[%s53] sm:$0x1]
    %v2651 = vlaneseq
    %v2652 = vshrl.u32 %v2651, 7
    %v2653 = vsub.s32 0, %v2652
    %v2654 = vrot.slane %v2649, %v2653
    %v2664 = vunpack.c.l.b16 %v2641
    %v2665 = vunpack.c.l.b16 %v2642
    %v2666 = vunpack.c.l.b16 %v2643
    %v2667 = vunpack.c.l.b16 %v2644
    %v2668 = vunpack.c.l.b16 %v2645
    %v2669 = vunpack.c.l.b16 %v2646
    %v2670 = vunpack.c.l.b16 %v2647
    %v2671 = vunpack.c.l.b16 %v2648
    %v2672 = vpack.c.b16 %v2665, %v2664
    %v2673 = vpack.c.b16 %v2667, %v2666
    %v2674 = vpack.c.b16 %v2669, %v2668
    %v2675 = vpack.c.b16 %v2671, %v2670
    %v2681 = vsel %vm624, %v2637, 0
    %v2684 = vsel %vm624, %v2638, 0
    %v2687 = vsel %vm624, %v2639, 0
    %v2690 = vsel %vm624, %v2640, 0
    %2692 = vmatprep.subr.bf16.mxu0 0
    %2693 = vmatpush1.bf16.msra.mxu0 %v2672
    %2694 = vmatprep.subr.bf16.mxu0 0
    %2695 = vmatpush1.bf16.msra.mxu0 %v2673
    %2696 = vmatprep.subr.bf16.mxu0 0
    %2697 = vmatpush1.bf16.msra.mxu0 %v2674
    %2698 = vmatprep.subr.bf16.mxu0 0
    %2699 = vmatpush1.bf16.msra.mxu0 %v2675
    %2700 = vmatprep.subr.bf16.mxu0 0
    %2701 = vmatpush1.bf16.msra.mxu0 0
    %2702 = vmatprep.subr.bf16.mxu0 0
    %2703 = vmatpush1.bf16.msra.mxu0 0
    %2704 = vmatprep.subr.bf16.mxu0 0
    %2705 = vmatpush1.bf16.msra.mxu0 0
    %2706 = vmatprep.subr.bf16.mxu0 0
    %2707 = vmatpush1.bf16.msra.mxu0 0
    %2708 = vmatprep.subr.bf16.mxu0 0
    %2709 = vmatpush1.bf16.msra.mxu0 0
    %2710 = vmatprep.subr.bf16.mxu0 0
    %2711 = vmatpush1.bf16.msra.mxu0 0
    %2712 = vmatprep.subr.bf16.mxu0 0
    %2713 = vmatpush1.bf16.msra.mxu0 0
    %2714 = vmatprep.subr.bf16.mxu0 0
    %2715 = vmatpush1.bf16.msra.mxu0 0
    %2716 = vmatprep.subr.bf16.mxu0 0
    %2717 = vmatpush1.bf16.msra.mxu0 0
    %2718 = vmatprep.subr.bf16.mxu0 0
    %2719 = vmatpush1.bf16.msra.mxu0 0
    %2720 = vmatprep.subr.bf16.mxu0 0
    %2721 = vmatpush1.bf16.msra.mxu0 0
    %2722 = vmatprep.subr.bf16.mxu0 0
    %2723 = vmatpush1.bf16.msra.mxu0 0
    %2724 = vmatprep.mubr.bf16.mxu0 0
    %2725 = vmatmul.mubr.bf16.gmra.mrb[0].mxu0 %v2681
    %v2726 = vpop.f32.mrb[0].mxu0
    %v2727 = vadd.f32 %v2654, %v2726
    %v2728 = vpop.f32.mrb[0].mxu0
    %v2729 = vpop.f32.mrb[0].mxu0
    %v2730 = vadd.f32 %v2654, %v2729
    %v2731 = vpop.f32.mrb[0].mxu0
    %2732 = vmatprep.mubr.bf16.mxu0 0
    %2733 = vmatmul.mubr.bf16.gmra.mrb[0].mxu0 %v2684
    %v2734 = vpop.f32.mrb[0].mxu0
    %v2735 = vadd.f32 %v2654, %v2734
    %v2736 = vpop.f32.mrb[0].mxu0
    %v2737 = vpop.f32.mrb[0].mxu0
    %v2738 = vadd.f32 %v2654, %v2737
    %v2739 = vpop.f32.mrb[0].mxu0
    %2740 = vmatprep.mubr.bf16.mxu0 0
    %2741 = vmatmul.mubr.bf16.gmra.mrb[0].mxu0 %v2687
    %v2742 = vpop.f32.mrb[0].mxu0
    %v2743 = vadd.f32 %v2654, %v2742
    %v2744 = vpop.f32.mrb[0].mxu0
    %v2745 = vpop.f32.mrb[0].mxu0
    %v2746 = vadd.f32 %v2654, %v2745
    %v2747 = vpop.f32.mrb[0].mxu0
    %2748 = vmatprep.mubr.bf16.mxu0 0
    %2749 = vmatmul.mubr.bf16.gmra.mrb[0].mxu0 %v2690
    %v2750 = vpop.f32.mrb[0].mxu0
    %v2751 = vadd.f32 %v2654, %v2750
    %v2752 = vpop.f32.mrb[0].mxu0
    %v2753 = vpop.f32.mrb[0].mxu0
    %v2754 = vadd.f32 %v2654, %v2753
    %v2755 = vpop.f32.mrb[0].mxu0
    %2756 = vdwg.mxu0
    %v2757 = vpack.c.bf16 %v2730, %v2727
    %v2758 = vpack.c.bf16 %v2738, %v2735
    %v2759 = vpack.c.bf16 %v2746, %v2743
    %v2760 = vpack.c.bf16 %v2754, %v2751
    %v2761 = vld [vmem:[%s55] sm:$0xff]
    %v2762 = vld [vmem:[%s55 + $0x8] sm:$0xf]
    %v2763 = vld [vmem:[%s55 + $0xc] sm:$0xff]
    %v2764 = vld [vmem:[%s55 + $0x14] sm:$0xf]
    %v2765 = vld [vmem:[%s55 + $0x18] sm:$0xff]
    %v2766 = vld [vmem:[%s55 + $0x20] sm:$0xf]
    %v2767 = vld [vmem:[%s55 + $0x24] sm:$0xff]
    %v2768 = vld [vmem:[%s55 + $0x2c] sm:$0xf]
    %v2769 = vld [vmem:[%s55 + $0x30] sm:$0xff]
    %v2770 = vld [vmem:[%s55 + $0x38] sm:$0xf]
    %v2771 = vld [vmem:[%s55 + $0x3c] sm:$0xff]
    %v2772 = vld [vmem:[%s55 + $0x44] sm:$0xf]
    %v2773 = vld [vmem:[%s55 + $0x48] sm:$0xff]
    %v2774 = vld [vmem:[%s55 + $0x50] sm:$0xf]
    %v2775 = vld [vmem:[%s55 + $0x54] sm:$0xff]
    %v2776 = vld [vmem:[%s55 + $0x5c] sm:$0xf]
    %v2777 = vld [vmem:[%s57] sm:$0x7]
    %v2779 = vlaneseq
    %v2780 = vshrl.u32 %v2779, 7
    %v2781 = vsub.s32 0, %v2780
    %v2782 = vrot.slane %v2777, %v2781
    %v2783 = vlaneseq
    %v2784 = vshrl.u32 %v2783, 7
    %v2785 = vsub.s32 1, %v2784
    %v2786 = vrot.slane %v2777, %v2785
    %v2787 = vlaneseq
    %v2788 = vshrl.u32 %v2787, 7
    %v2789 = vsub.s32 2, %v2788
    %v2790 = vrot.slane %v2777, %v2789
    %v2810 = vunpack.c.l.b16 %v2761
    %v2811 = vunpack.c.h.b16 %v2761
    %v2812 = vunpack.c.l.b16 %v2762
    %v2813 = vunpack.c.l.b16 %v2763
    %v2814 = vunpack.c.h.b16 %v2763
    %v2815 = vunpack.c.l.b16 %v2764
    %v2816 = vunpack.c.l.b16 %v2765
    %v2817 = vunpack.c.h.b16 %v2765
    %v2818 = vunpack.c.l.b16 %v2766
    %v2819 = vunpack.c.l.b16 %v2767
    %v2820 = vunpack.c.h.b16 %v2767
    %v2821 = vunpack.c.l.b16 %v2768
    %v2822 = vunpack.c.l.b16 %v2769
    %v2823 = vunpack.c.h.b16 %v2769
    %v2824 = vunpack.c.l.b16 %v2770
    %v2825 = vunpack.c.l.b16 %v2771
    %v2826 = vunpack.c.h.b16 %v2771
    %v2827 = vunpack.c.l.b16 %v2772
    %v2828 = vunpack.c.l.b16 %v2773
    %v2829 = vunpack.c.h.b16 %v2773
    %v2830 = vunpack.c.l.b16 %v2774
    %v2831 = vunpack.c.l.b16 %v2775
    %v2832 = vunpack.c.h.b16 %v2775
    %v2833 = vunpack.c.l.b16 %v2776
    %v2834 = vpack.c.b16 %v2813, %v2810
    %v2835 = vpack.c.b16 %v2814, %v2811
    %v2836 = vpack.c.b16 %v2815, %v2812
    %v2837 = vpack.c.b16 %v2819, %v2816
    %v2838 = vpack.c.b16 %v2820, %v2817
    %v2839 = vpack.c.b16 %v2821, %v2818
    %v2840 = vpack.c.b16 %v2825, %v2822
    %v2841 = vpack.c.b16 %v2826, %v2823
    %v2842 = vpack.c.b16 %v2827, %v2824
    %v2843 = vpack.c.b16 %v2831, %v2828
    %v2844 = vpack.c.b16 %v2832, %v2829
    %v2845 = vpack.c.b16 %v2833, %v2830
    %v2859 = vsel %vm624, %v2757, 0
    %v2862 = vsel %vm624, %v2758, 0
    %v2865 = vsel %vm624, %v2759, 0
    %v2868 = vsel %vm624, %v2760, 0
    %2870 = vmatprep.subr.bf16.mxu0 %v2835
    %2871 = vmatpush1.bf16.msra.mxu0 %v2834
    %2872 = vmatprep.subr.bf16.mxu0 %v2838
    %2873 = vmatpush1.bf16.msra.mxu0 %v2837
    %2874 = vmatprep.subr.bf16.mxu0 %v2841
    %2875 = vmatpush1.bf16.msra.mxu0 %v2840
    %2876 = vmatprep.subr.bf16.mxu0 %v2844
    %2877 = vmatpush1.bf16.msra.mxu0 %v2843
    %2878 = vmatprep.subr.bf16.mxu0 0
    %2879 = vmatpush1.bf16.msra.mxu0 0
    %2880 = vmatprep.subr.bf16.mxu0 0
    %2881 = vmatpush1.bf16.msra.mxu0 0
    %2882 = vmatprep.subr.bf16.mxu0 0
    %2883 = vmatpush1.bf16.msra.mxu0 0
    %2884 = vmatprep.subr.bf16.mxu0 0
    %2885 = vmatpush1.bf16.msra.mxu0 0
    %2886 = vmatprep.subr.bf16.mxu0 0
    %2887 = vmatpush1.bf16.msra.mxu0 0
    %2888 = vmatprep.subr.bf16.mxu0 0
    %2889 = vmatpush1.bf16.msra.mxu0 0
    %2890 = vmatprep.subr.bf16.mxu0 0
    %2891 = vmatpush1.bf16.msra.mxu0 0
    %2892 = vmatprep.subr.bf16.mxu0 0
    %2893 = vmatpush1.bf16.msra.mxu0 0
    %2894 = vmatprep.subr.bf16.mxu0 0
    %2895 = vmatpush1.bf16.msra.mxu0 0
    %2896 = vmatprep.subr.bf16.mxu0 0
    %2897 = vmatpush1.bf16.msra.mxu0 0
    %2898 = vmatprep.subr.bf16.mxu0 0
    %2899 = vmatpush1.bf16.msra.mxu0 0
    %2900 = vmatprep.subr.bf16.mxu0 0
    %2901 = vmatpush1.bf16.msra.mxu0 0
    %2902 = vmatprep.mubr.bf16.mxu0 0
    %2903 = vmatmul.mubr.bf16.gmra.mrb[0].mxu0 %v2859
    %v2904 = vpop.f32.mrb[0].mxu0
    %v2905 = vadd.f32 %v2782, %v2904
    %v2906 = vpop.f32.mrb[0].mxu0
    %v2907 = vadd.f32 %v2786, %v2906
    %v2908 = vpop.f32.mrb[0].mxu0
    %v2909 = vadd.f32 %v2782, %v2908
    %v2910 = vpop.f32.mrb[0].mxu0
    %v2911 = vadd.f32 %v2786, %v2910
    %2912 = vmatprep.mubr.bf16.mxu0 0
    %2913 = vmatmul.mubr.bf16.gmra.mrb[0].mxu0 %v2862
    %v2914 = vpop.f32.mrb[0].mxu0
    %v2915 = vadd.f32 %v2782, %v2914
    %v2916 = vpop.f32.mrb[0].mxu0
    %v2917 = vadd.f32 %v2786, %v2916
    %v2918 = vpop.f32.mrb[0].mxu0
    %v2919 = vadd.f32 %v2782, %v2918
    %v2920 = vpop.f32.mrb[0].mxu0
    %v2921 = vadd.f32 %v2786, %v2920
    %2922 = vmatprep.mubr.bf16.mxu0 0
    %2923 = vmatmul.mubr.bf16.gmra.mrb[0].mxu0 %v2865
    %v2924 = vpop.f32.mrb[0].mxu0
    %v2925 = vadd.f32 %v2782, %v2924
    %v2926 = vpop.f32.mrb[0].mxu0
    %v2927 = vadd.f32 %v2786, %v2926
    %v2928 = vpop.f32.mrb[0].mxu0
    %v2929 = vadd.f32 %v2782, %v2928
    %v2930 = vpop.f32.mrb[0].mxu0
    %v2931 = vadd.f32 %v2786, %v2930
    %2932 = vmatprep.mubr.bf16.mxu0 0
    %2933 = vmatmul.mubr.bf16.gmra.mrb[0].mxu0 %v2868
    %v2934 = vpop.f32.mrb[0].mxu0
    %v2935 = vadd.f32 %v2782, %v2934
    %v2936 = vpop.f32.mrb[0].mxu0
    %v2937 = vadd.f32 %v2786, %v2936
    %v2938 = vpop.f32.mrb[0].mxu0
    %v2939 = vadd.f32 %v2782, %v2938
    %v2940 = vpop.f32.mrb[0].mxu0
    %v2941 = vadd.f32 %v2786, %v2940
    %2942 = vdwg.mxu0
    %2943 = vmatprep.subr.bf16.mxu0 0
    %2944 = vmatpush1.bf16.msra.mxu0 %v2836
    %2945 = vmatprep.subr.bf16.mxu0 0
    %2946 = vmatpush1.bf16.msra.mxu0 %v2839
    %2947 = vmatprep.subr.bf16.mxu0 0
    %2948 = vmatpush1.bf16.msra.mxu0 %v2842
    %2949 = vmatprep.subr.bf16.mxu0 0
    %2950 = vmatpush1.bf16.msra.mxu0 %v2845
    %2951 = vmatprep.subr.bf16.mxu0 0
    %2952 = vmatpush1.bf16.msra.mxu0 0
    %2953 = vmatprep.subr.bf16.mxu0 0
    %2954 = vmatpush1.bf16.msra.mxu0 0
    %2955 = vmatprep.subr.bf16.mxu0 0
    %2956 = vmatpush1.bf16.msra.mxu0 0
    %2957 = vmatprep.subr.bf16.mxu0 0
    %2958 = vmatpush1.bf16.msra.mxu0 0
    %2959 = vmatprep.subr.bf16.mxu0 0
    %2960 = vmatpush1.bf16.msra.mxu0 0
    %2961 = vmatprep.subr.bf16.mxu0 0
    %2962 = vmatpush1.bf16.msra.mxu0 0
    %2963 = vmatprep.subr.bf16.mxu0 0
    %2964 = vmatpush1.bf16.msra.mxu0 0
    %2965 = vmatprep.subr.bf16.mxu0 0
    %2966 = vmatpush1.bf16.msra.mxu0 0
    %2967 = vmatprep.subr.bf16.mxu0 0
    %2968 = vmatpush1.bf16.msra.mxu0 0
    %2969 = vmatprep.subr.bf16.mxu0 0
    %2970 = vmatpush1.bf16.msra.mxu0 0
    %2971 = vmatprep.subr.bf16.mxu0 0
    %2972 = vmatpush1.bf16.msra.mxu0 0
    %2973 = vmatprep.subr.bf16.mxu0 0
    %2974 = vmatpush1.bf16.msra.mxu0 0
    %2975 = vmatprep.mubr.bf16.mxu0 0
    %2976 = vmatmul.mubr.bf16.gmra.mrb[0].mxu0 %v2859
    %v2977 = vpop.f32.mrb[0].mxu0
    %v2978 = vadd.f32 %v2790, %v2977
    %v2979 = vpop.f32.mrb[0].mxu0
    %v2980 = vpop.f32.mrb[0].mxu0
    %v2981 = vadd.f32 %v2790, %v2980
    %v2982 = vpop.f32.mrb[0].mxu0
    %2983 = vmatprep.mubr.bf16.mxu0 0
    %2984 = vmatmul.mubr.bf16.gmra.mrb[0].mxu0 %v2862
    %v2985 = vpop.f32.mrb[0].mxu0
    %v2986 = vadd.f32 %v2790, %v2985
    %v2987 = vpop.f32.mrb[0].mxu0
    %v2988 = vpop.f32.mrb[0].mxu0
    %v2989 = vadd.f32 %v2790, %v2988
    %v2990 = vpop.f32.mrb[0].mxu0
    %2991 = vmatprep.mubr.bf16.mxu0 0
    %2992 = vmatmul.mubr.bf16.gmra.mrb[0].mxu0 %v2865
    %v2993 = vpop.f32.mrb[0].mxu0
    %v2994 = vadd.f32 %v2790, %v2993
    %v2995 = vpop.f32.mrb[0].mxu0
    %v2996 = vpop.f32.mrb[0].mxu0
    %v2997 = vadd.f32 %v2790, %v2996
    %v2998 = vpop.f32.mrb[0].mxu0
    %2999 = vmatprep.mubr.bf16.mxu0 0
    %3000 = vmatmul.mubr.bf16.gmra.mrb[0].mxu0 %v2868
    %v3001 = vpop.f32.mrb[0].mxu0
    %v3002 = vadd.f32 %v2790, %v3001
    %v3003 = vpop.f32.mrb[0].mxu0
    %v3004 = vpop.f32.mrb[0].mxu0
    %v3005 = vadd.f32 %v2790, %v3004
    %v3006 = vpop.f32.mrb[0].mxu0
    %3007 = vdwg.mxu0
    %vm3008 = vcmp.gt.f32.partialorder %v2978, 20.0
    %vm3009 = vcmp.gt.f32.partialorder %v2981, 20.0
    %vm3010 = vcmp.gt.f32.partialorder %v2986, 20.0
    %vm3011 = vcmp.gt.f32.partialorder %v2989, 20.0
    %vm3012 = vcmp.gt.f32.partialorder %v2994, 20.0
    %vm3013 = vcmp.gt.f32.partialorder %v2997, 20.0
    %vm3014 = vcmp.gt.f32.partialorder %v3002, 20.0
    %vm3015 = vcmp.gt.f32.partialorder %v3005, 20.0
    %v3016 = vmin.f32 %v2978, 20.0
    %v3017 = vmin.f32 %v2981, 20.0
    %v3018 = vmin.f32 %v2986, 20.0
    %v3019 = vmin.f32 %v2989, 20.0
    %v3020 = vmin.f32 %v2994, 20.0
    %v3021 = vmin.f32 %v2997, 20.0
    %v3022 = vmin.f32 %v3002, 20.0
    %v3023 = vmin.f32 %v3005, 20.0
    %v3024 = vmul.f32 %v3016, 1.442695
    %v3025 = vpow.pop %v3024
    %v3026 = vmul.f32 %v3017, 1.442695
    %v3027 = vpow.pop %v3026
    %v3028 = vmul.f32 %v3018, 1.442695
    %v3029 = vpow.pop %v3028
    %v3030 = vmul.f32 %v3019, 1.442695
    %v3031 = vpow.pop %v3030
    %v3032 = vmul.f32 %v3020, 1.442695
    %v3033 = vpow.pop %v3032
    %v3034 = vmul.f32 %v3021, 1.442695
    %v3035 = vpow.pop %v3034
    %v3036 = vmul.f32 %v3022, 1.442695
    %v3037 = vpow.pop %v3036
    %v3038 = vmul.f32 %v3023, 1.442695
    %v3039 = vpow.pop %v3038
    %v3040 = vadd.f32 %v3025, 1.0
    %v3041 = vlog2.pop %v3040
    %v3042 = vmul.f32 %v3041, 0.6931472
    %v3043 = vmul.f32 -0.5, %v3025
    %v3044 = vadd.f32 %v3043, 1.0
    %v3045 = vmul.f32 %v3044, %v3025
    %v3046 = vand.u32 2147483647, %v3025
    %vm3047 = vcmp.lt.f32.partialorder %v3046, 0.0004427343
    %v3048 = vsel %vm3047, %v3045, %v3042
    %v3049 = vadd.f32 %v3027, 1.0
    %v3050 = vlog2.pop %v3049
    %v3051 = vmul.f32 %v3050, 0.6931472
    %v3052 = vmul.f32 -0.5, %v3027
    %v3053 = vadd.f32 %v3052, 1.0
    %v3054 = vmul.f32 %v3053, %v3027
    %v3055 = vand.u32 2147483647, %v3027
    %vm3056 = vcmp.lt.f32.partialorder %v3055, 0.0004427343
    %v3057 = vsel %vm3056, %v3054, %v3051
    %v3058 = vadd.f32 %v3029, 1.0
    %v3059 = vlog2.pop %v3058
    %v3060 = vmul.f32 %v3059, 0.6931472
    %v3061 = vmul.f32 -0.5, %v3029
    %v3062 = vadd.f32 %v3061, 1.0
    %v3063 = vmul.f32 %v3062, %v3029
    %v3064 = vand.u32 2147483647, %v3029
    %vm3065 = vcmp.lt.f32.partialorder %v3064, 0.0004427343
    %v3066 = vsel %vm3065, %v3063, %v3060
    %v3067 = vadd.f32 %v3031, 1.0
    %v3068 = vlog2.pop %v3067
    %v3069 = vmul.f32 %v3068, 0.6931472
    %v3070 = vmul.f32 -0.5, %v3031
    %v3071 = vadd.f32 %v3070, 1.0
    %v3072 = vmul.f32 %v3071, %v3031
    %v3073 = vand.u32 2147483647, %v3031
    %vm3074 = vcmp.lt.f32.partialorder %v3073, 0.0004427343
    %v3075 = vsel %vm3074, %v3072, %v3069
    %v3076 = vadd.f32 %v3033, 1.0
    %v3077 = vlog2.pop %v3076
    %v3078 = vmul.f32 %v3077, 0.6931472
    %v3079 = vmul.f32 -0.5, %v3033
    %v3080 = vadd.f32 %v3079, 1.0
    %v3081 = vmul.f32 %v3080, %v3033
    %v3082 = vand.u32 2147483647, %v3033
    %vm3083 = vcmp.lt.f32.partialorder %v3082, 0.0004427343
    %v3084 = vsel %vm3083, %v3081, %v3078
    %v3085 = vadd.f32 %v3035, 1.0
    %v3086 = vlog2.pop %v3085
    %v3087 = vmul.f32 %v3086, 0.6931472
    %v3088 = vmul.f32 -0.5, %v3035
    %v3089 = vadd.f32 %v3088, 1.0
    %v3090 = vmul.f32 %v3089, %v3035
    %v3091 = vand.u32 2147483647, %v3035
    %vm3092 = vcmp.lt.f32.partialorder %v3091, 0.0004427343
    %v3093 = vsel %vm3092, %v3090, %v3087
    %v3094 = vadd.f32 %v3037, 1.0
    %v3095 = vlog2.pop %v3094
    %v3096 = vmul.f32 %v3095, 0.6931472
    %v3097 = vmul.f32 -0.5, %v3037
    %v3098 = vadd.f32 %v3097, 1.0
    %v3099 = vmul.f32 %v3098, %v3037
    %v3100 = vand.u32 2147483647, %v3037
    %vm3101 = vcmp.lt.f32.partialorder %v3100, 0.0004427343
    %v3102 = vsel %vm3101, %v3099, %v3096
    %v3103 = vadd.f32 %v3039, 1.0
    %v3104 = vlog2.pop %v3103
    %v3105 = vmul.f32 %v3104, 0.6931472
    %v3106 = vmul.f32 -0.5, %v3039
    %v3107 = vadd.f32 %v3106, 1.0
    %v3108 = vmul.f32 %v3107, %v3039
    %v3109 = vand.u32 2147483647, %v3039
    %vm3110 = vcmp.lt.f32.partialorder %v3109, 0.0004427343
    %v3111 = vsel %vm3110, %v3108, %v3105
    %v3112 = vsel %vm3008, %v2978, %v3048
    %v3113 = vsel %vm3009, %v2981, %v3057
    %v3114 = vsel %vm3010, %v2986, %v3066
    %v3115 = vsel %vm3011, %v2989, %v3075
    %v3116 = vsel %vm3012, %v2994, %v3084
    %v3117 = vsel %vm3013, %v2997, %v3093
    %v3118 = vsel %vm3014, %v3002, %v3102
    %v3119 = vsel %vm3015, %v3005, %v3111
    %v3120 = vmul.f32 %v2905, %v2907
    %v3121 = vmul.f32 %v2909, %v2911
    %v3122 = vmul.f32 %v2915, %v2917
    %v3123 = vmul.f32 %v2919, %v2921
    %v3124 = vmul.f32 %v2925, %v2927
    %v3125 = vmul.f32 %v2929, %v2931
    %v3126 = vmul.f32 %v2935, %v2937
    %v3127 = vmul.f32 %v2939, %v2941
    %3128 = vadd.xlane.f32.xlu0 %v3120
    %v3129 = vpop.xlane.xlu0 %3128
    %3130 = vadd.xlane.f32.xlu0 %v3121
    %v3131 = vpop.xlane.xlu0 %3130
    %3132 = vadd.xlane.f32.xlu0 %v3122
    %v3133 = vpop.xlane.xlu0 %3132
    %3134 = vadd.xlane.f32.xlu0 %v3123
    %v3135 = vpop.xlane.xlu0 %3134
    %3136 = vadd.xlane.f32.xlu0 %v3124
    %v3137 = vpop.xlane.xlu0 %3136
    %3138 = vadd.xlane.f32.xlu0 %v3125
    %v3139 = vpop.xlane.xlu0 %3138
    %3140 = vadd.xlane.f32.xlu0 %v3126
    %v3141 = vpop.xlane.xlu0 %3140
    %3142 = vadd.xlane.f32.xlu0 %v3127
    %v3143 = vpop.xlane.xlu0 %3142
    %v3144 = vmul.f32 %v2727, %v3112
    %v3145 = vmul.f32 %v2730, %v3113
    %v3146 = vmul.f32 %v2735, %v3114
    %v3147 = vmul.f32 %v2738, %v3115
    %v3148 = vmul.f32 %v2743, %v3116
    %v3149 = vmul.f32 %v2746, %v3117
    %v3150 = vmul.f32 %v2751, %v3118
    %v3151 = vmul.f32 %v2754, %v3119
    %v3152 = vmul.f32 %v3144, %v3129
    %v3153 = vmul.f32 %v3145, %v3131
    %v3154 = vmul.f32 %v3146, %v3133
    %v3155 = vmul.f32 %v3147, %v3135
    %v3156 = vmul.f32 %v3148, %v3137
    %v3157 = vmul.f32 %v3149, %v3139
    %v3158 = vmul.f32 %v3150, %v3141
    %v3159 = vmul.f32 %v3151, %v3143
    %v3160 = vxor.u32 %v3152, 2147483648
    %v3161 = vxor.u32 %v3153, 2147483648
    %v3162 = vxor.u32 %v3154, 2147483648
    %v3163 = vxor.u32 %v3155, 2147483648
    %v3164 = vxor.u32 %v3156, 2147483648
    %v3165 = vxor.u32 %v3157, 2147483648
    %v3166 = vxor.u32 %v3158, 2147483648
    %v3167 = vxor.u32 %v3159, 2147483648
    %v3168 = vmul.f32 %v3160, 1.442695
    %v3169 = vpow.pop %v3168
    %v3170 = vmul.f32 %v3161, 1.442695
    %v3171 = vpow.pop %v3170
    %v3172 = vmul.f32 %v3162, 1.442695
    %v3173 = vpow.pop %v3172
    %v3174 = vmul.f32 %v3163, 1.442695
    %v3175 = vpow.pop %v3174
    %v3176 = vmul.f32 %v3164, 1.442695
    %v3177 = vpow.pop %v3176
    %v3178 = vmul.f32 %v3165, 1.442695
    %v3179 = vpow.pop %v3178
    %v3180 = vmul.f32 %v3166, 1.442695
    %v3181 = vpow.pop %v3180
    %v3182 = vmul.f32 %v3167, 1.442695
    %v3183 = vpow.pop %v3182
    %v3184 = vadd.f32 %v3169, 1.0
    %v3185 = vadd.f32 %v3171, 1.0
    %v3186 = vadd.f32 %v3173, 1.0
    %v3187 = vadd.f32 %v3175, 1.0
    %v3188 = vadd.f32 %v3177, 1.0
    %v3189 = vadd.f32 %v3179, 1.0
    %v3190 = vadd.f32 %v3181, 1.0
    %v3191 = vadd.f32 %v3183, 1.0
    %v3192 = vrcp.pop %v3184
    %v3193 = vmul.f32 1.0, %v3192
    %v3194 = vrcp.pop %v3185
    %v3195 = vmul.f32 1.0, %v3194
    %v3196 = vrcp.pop %v3186
    %v3197 = vmul.f32 1.0, %v3196
    %v3198 = vrcp.pop %v3187
    %v3199 = vmul.f32 1.0, %v3198
    %v3200 = vrcp.pop %v3188
    %v3201 = vmul.f32 1.0, %v3200
    %v3202 = vrcp.pop %v3189
    %v3203 = vmul.f32 1.0, %v3202
    %v3204 = vrcp.pop %v3190
    %v3205 = vmul.f32 1.0, %v3204
    %v3206 = vrcp.pop %v3191
    %v3207 = vmul.f32 1.0, %v3206
    %v3208 = vmul.f32 %v3152, %v3193
    %v3209 = vmul.f32 %v3153, %v3195
    %v3210 = vmul.f32 %v3154, %v3197
    %v3211 = vmul.f32 %v3155, %v3199
    %v3212 = vmul.f32 %v3156, %v3201
    %v3213 = vmul.f32 %v3157, %v3203
    %v3214 = vmul.f32 %v3158, %v3205
    %v3215 = vmul.f32 %v3159, %v3207
    %v3216 = vmul.f32 %v3208, %v2086
    %v3217 = vmul.f32 %v3209, %v2087
    %v3218 = vmul.f32 %v3210, %v2088
    %v3219 = vmul.f32 %v3211, %v2089
    %v3220 = vmul.f32 %v3212, %v2090
    %v3221 = vmul.f32 %v3213, %v2091
    %v3222 = vmul.f32 %v3214, %v2092
    %v3223 = vmul.f32 %v3215, %v2093
    %v3224 = vpack.c.bf16 %v3217, %v3216
    %v3225 = vpack.c.bf16 %v3219, %v3218
    %v3226 = vpack.c.bf16 %v3221, %v3220
    %v3227 = vpack.c.bf16 %v3223, %v3222
    %v3228 = vld [vmem:[%s59] sm:$0xf]
    %v3229 = vld [vmem:[%s59 + $0x4] sm:$0xf]
    %v3230 = vld [vmem:[%s59 + $0x8] sm:$0xf]
    %v3231 = vld [vmem:[%s59 + $0xc] sm:$0xf]
    %v3232 = vld [vmem:[%s59 + $0x10] sm:$0xf]
    %v3233 = vld [vmem:[%s59 + $0x14] sm:$0xf]
    %v3234 = vld [vmem:[%s59 + $0x18] sm:$0xf]
    %v3235 = vld [vmem:[%s59 + $0x1c] sm:$0xf]
    %v3236 = vld [vmem:[%s61] sm:$0x1]
    %v3238 = vlaneseq
    %v3239 = vshrl.u32 %v3238, 7
    %v3240 = vsub.s32 0, %v3239
    %v3241 = vrot.slane %v3236, %v3240
    %v3251 = vunpack.c.l.b16 %v3228
    %v3252 = vunpack.c.l.b16 %v3229
    %v3253 = vunpack.c.l.b16 %v3230
    %v3254 = vunpack.c.l.b16 %v3231
    %v3255 = vunpack.c.l.b16 %v3232
    %v3256 = vunpack.c.l.b16 %v3233
    %v3257 = vunpack.c.l.b16 %v3234
    %v3258 = vunpack.c.l.b16 %v3235
    %v3259 = vpack.c.b16 %v3252, %v3251
    %v3260 = vpack.c.b16 %v3254, %v3253
    %v3261 = vpack.c.b16 %v3256, %v3255
    %v3262 = vpack.c.b16 %v3258, %v3257
    %v3268 = vsel %vm624, %v3224, 0
    %v3271 = vsel %vm624, %v3225, 0
    %v3274 = vsel %vm624, %v3226, 0
    %v3277 = vsel %vm624, %v3227, 0
    %3279 = vmatprep.subr.bf16.mxu0 0
    %3280 = vmatpush1.bf16.msra.mxu0 %v3259
    %3281 = vmatprep.subr.bf16.mxu0 0
    %3282 = vmatpush1.bf16.msra.mxu0 %v3260
    %3283 = vmatprep.subr.bf16.mxu0 0
    %3284 = vmatpush1.bf16.msra.mxu0 %v3261
    %3285 = vmatprep.subr.bf16.mxu0 0
    %3286 = vmatpush1.bf16.msra.mxu0 %v3262
    %3287 = vmatprep.subr.bf16.mxu0 0
    %3288 = vmatpush1.bf16.msra.mxu0 0
    %3289 = vmatprep.subr.bf16.mxu0 0
    %3290 = vmatpush1.bf16.msra.mxu0 0
    %3291 = vmatprep.subr.bf16.mxu0 0
    %3292 = vmatpush1.bf16.msra.mxu0 0
    %3293 = vmatprep.subr.bf16.mxu0 0
    %3294 = vmatpush1.bf16.msra.mxu0 0
    %3295 = vmatprep.subr.bf16.mxu0 0
    %3296 = vmatpush1.bf16.msra.mxu0 0
    %3297 = vmatprep.subr.bf16.mxu0 0
    %3298 = vmatpush1.bf16.msra.mxu0 0
    %3299 = vmatprep.subr.bf16.mxu0 0
    %3300 = vmatpush1.bf16.msra.mxu0 0
    %3301 = vmatprep.subr.bf16.mxu0 0
    %3302 = vmatpush1.bf16.msra.mxu0 0
    %3303 = vmatprep.subr.bf16.mxu0 0
    %3304 = vmatpush1.bf16.msra.mxu0 0
    %3305 = vmatprep.subr.bf16.mxu0 0
    %3306 = vmatpush1.bf16.msra.mxu0 0
    %3307 = vmatprep.subr.bf16.mxu0 0
    %3308 = vmatpush1.bf16.msra.mxu0 0
    %3309 = vmatprep.subr.bf16.mxu0 0
    %3310 = vmatpush1.bf16.msra.mxu0 0
    %3311 = vmatprep.mubr.bf16.mxu0 0
    %3312 = vmatmul.mubr.bf16.gmra.mrb[0].mxu0 %v3268
    %v3313 = vpop.f32.mrb[0].mxu0
    %v3314 = vadd.f32 %v3241, %v3313
    %v3315 = vpop.f32.mrb[0].mxu0
    %v3316 = vpop.f32.mrb[0].mxu0
    %v3317 = vadd.f32 %v3241, %v3316
    %v3318 = vpop.f32.mrb[0].mxu0
    %3319 = vmatprep.mubr.bf16.mxu0 0
    %3320 = vmatmul.mubr.bf16.gmra.mrb[0].mxu0 %v3271
    %v3321 = vpop.f32.mrb[0].mxu0
    %v3322 = vadd.f32 %v3241, %v3321
    %v3323 = vpop.f32.mrb[0].mxu0
    %v3324 = vpop.f32.mrb[0].mxu0
    %v3325 = vadd.f32 %v3241, %v3324
    %v3326 = vpop.f32.mrb[0].mxu0
    %3327 = vmatprep.mubr.bf16.mxu0 0
    %3328 = vmatmul.mubr.bf16.gmra.mrb[0].mxu0 %v3274
    %v3329 = vpop.f32.mrb[0].mxu0
    %v3330 = vadd.f32 %v3241, %v3329
    %v3331 = vpop.f32.mrb[0].mxu0
    %v3332 = vpop.f32.mrb[0].mxu0
    %v3333 = vadd.f32 %v3241, %v3332
    %v3334 = vpop.f32.mrb[0].mxu0
    %3335 = vmatprep.mubr.bf16.mxu0 0
    %3336 = vmatmul.mubr.bf16.gmra.mrb[0].mxu0 %v3277
    %v3337 = vpop.f32.mrb[0].mxu0
    %v3338 = vadd.f32 %v3241, %v3337
    %v3339 = vpop.f32.mrb[0].mxu0
    %v3340 = vpop.f32.mrb[0].mxu0
    %v3341 = vadd.f32 %v3241, %v3340
    %v3342 = vpop.f32.mrb[0].mxu0
    %3343 = vdwg.mxu0
    %v3344 = vpack.c.bf16 %v3317, %v3314
    %v3345 = vpack.c.bf16 %v3325, %v3322
    %v3346 = vpack.c.bf16 %v3333, %v3330
    %v3347 = vpack.c.bf16 %v3341, %v3338
    %v3348 = vld [vmem:[%s67] sm:$0xf]
    %v3349 = vld [vmem:[%s67 + $0x4] sm:$0xf]
    %v3350 = vld [vmem:[%s67 + $0x8] sm:$0xf]
    %v3351 = vld [vmem:[%s67 + $0xc] sm:$0xf]
    %v3356 = vunpack.c.l.b16 %v3348
    %v3357 = vunpack.c.l.b16 %v3349
    %v3358 = vunpack.c.l.b16 %v3350
    %v3359 = vunpack.c.l.b16 %v3351
    %v3360 = vpack.c.b16 %v3357, %v3356
    %v3361 = vpack.c.b16 %v3359, %v3358
    %v3365 = vsel %vm178, %v3344, 0
    %v3368 = vsel %vm178, %v3345, 0
    %v3371 = vsel %vm178, %v3346, 0
    %v3374 = vsel %vm178, %v3347, 0
    %3376 = vmatprep.subr.bf16.mxu0 0
    %3377 = vmatpush1.bf16.msra.mxu0 %v3360
    %3378 = vmatprep.subr.bf16.mxu0 0
    %3379 = vmatpush1.bf16.msra.mxu0 %v3361
    %3380 = vmatprep.subr.bf16.mxu0 0
    %3381 = vmatpush1.bf16.msra.mxu0 0
    %3382 = vmatprep.subr.bf16.mxu0 0
    %3383 = vmatpush1.bf16.msra.mxu0 0
    %3384 = vmatprep.subr.bf16.mxu0 0
    %3385 = vmatpush1.bf16.msra.mxu0 0
    %3386 = vmatprep.subr.bf16.mxu0 0
    %3387 = vmatpush1.bf16.msra.mxu0 0
    %3388 = vmatprep.subr.bf16.mxu0 0
    %3389 = vmatpush1.bf16.msra.mxu0 0
    %3390 = vmatprep.subr.bf16.mxu0 0
    %3391 = vmatpush1.bf16.msra.mxu0 0
    %3392 = vmatprep.subr.bf16.mxu0 0
    %3393 = vmatpush1.bf16.msra.mxu0 0
    %3394 = vmatprep.subr.bf16.mxu0 0
    %3395 = vmatpush1.bf16.msra.mxu0 0
    %3396 = vmatprep.subr.bf16.mxu0 0
    %3397 = vmatpush1.bf16.msra.mxu0 0
    %3398 = vmatprep.subr.bf16.mxu0 0
    %3399 = vmatpush1.bf16.msra.mxu0 0
    %3400 = vmatprep.subr.bf16.mxu0 0
    %3401 = vmatpush1.bf16.msra.mxu0 0
    %3402 = vmatprep.subr.bf16.mxu0 0
    %3403 = vmatpush1.bf16.msra.mxu0 0
    %3404 = vmatprep.subr.bf16.mxu0 0
    %3405 = vmatpush1.bf16.msra.mxu0 0
    %3406 = vmatprep.subr.bf16.mxu0 0
    %3407 = vmatpush1.bf16.msra.mxu0 0
    %3408 = vmatprep.mubr.bf16.mxu0 0
    %3409 = vmatmul.mubr.bf16.gmra.mrb[0].mxu0 %v3365
    %v3410 = vpop.f32.mrb[0].mxu0
    %v3411 = vadd.f32 0.0, %v3410
    %v3412 = vpop.f32.mrb[0].mxu0
    %v3413 = vpop.f32.mrb[0].mxu0
    %v3414 = vadd.f32 0.0, %v3413
    %v3415 = vpop.f32.mrb[0].mxu0
    %3416 = vmatprep.mubr.bf16.mxu0 0
    %3417 = vmatmul.mubr.bf16.gmra.mrb[0].mxu0 %v3368
    %v3418 = vpop.f32.mrb[0].mxu0
    %v3419 = vadd.f32 0.0, %v3418
    %v3420 = vpop.f32.mrb[0].mxu0
    %v3421 = vpop.f32.mrb[0].mxu0
    %v3422 = vadd.f32 0.0, %v3421
    %v3423 = vpop.f32.mrb[0].mxu0
    %3424 = vmatprep.mubr.bf16.mxu0 0
    %3425 = vmatmul.mubr.bf16.gmra.mrb[0].mxu0 %v3371
    %v3426 = vpop.f32.mrb[0].mxu0
    %v3427 = vadd.f32 0.0, %v3426
    %v3428 = vpop.f32.mrb[0].mxu0
    %v3429 = vpop.f32.mrb[0].mxu0
    %v3430 = vadd.f32 0.0, %v3429
    %v3431 = vpop.f32.mrb[0].mxu0
    %3432 = vmatprep.mubr.bf16.mxu0 0
    %3433 = vmatmul.mubr.bf16.gmra.mrb[0].mxu0 %v3374
    %v3434 = vpop.f32.mrb[0].mxu0
    %v3435 = vadd.f32 0.0, %v3434
    %v3436 = vpop.f32.mrb[0].mxu0
    %v3437 = vpop.f32.mrb[0].mxu0
    %v3438 = vadd.f32 0.0, %v3437
    %v3439 = vpop.f32.mrb[0].mxu0
    %3440 = vdwg.mxu0
    %v3441 = vld [vmem:[%s69] sm:$0xff]
    %v3442 = vld [vmem:[%s69 + $0x8] sm:$0xff]
    %v3443 = vld [vmem:[%s69 + $0x10] sm:$0xff]
    %v3444 = vld [vmem:[%s69 + $0x18] sm:$0xff]
    %v3445 = vld [vmem:[%s69 + $0x20] sm:$0xff]
    %v3446 = vld [vmem:[%s69 + $0x28] sm:$0xff]
    %v3447 = vld [vmem:[%s69 + $0x30] sm:$0xff]
    %v3448 = vld [vmem:[%s69 + $0x38] sm:$0xff]
    %v3449 = vmul.f32 %v3411, %v3441
    %v3450 = vmul.f32 %v3414, %v3442
    %v3451 = vmul.f32 %v3419, %v3443
    %v3452 = vmul.f32 %v3422, %v3444
    %v3453 = vmul.f32 %v3427, %v3445
    %v3454 = vmul.f32 %v3430, %v3446
    %v3455 = vmul.f32 %v3435, %v3447
    %v3456 = vmul.f32 %v3438, %v3448
    %v3457 = vld [vmem:[%s71] sm:$0xf]
    %v3458 = vpack.c.bf16 %v3450, %v3449
    %v3459 = vpack.c.bf16 %v3452, %v3451
    %v3460 = vpack.c.bf16 %v3454, %v3453
    %v3461 = vpack.c.bf16 %v3456, %v3455
    %v3463 = vsel %vm624, %v3457, 0
    %3465 = vmatprep.subr.bf16.mxu0 0
    %3466 = vmatpush1.bf16.msra.mxu0 %v3458
    %3467 = vmatprep.subr.bf16.mxu0 0
    %3468 = vmatpush1.bf16.msra.mxu0 %v3459
    %3469 = vmatprep.subr.bf16.mxu0 0
    %3470 = vmatpush1.bf16.msra.mxu0 %v3460
    %3471 = vmatprep.subr.bf16.mxu0 0
    %3472 = vmatpush1.bf16.msra.mxu0 %v3461
    %3473 = vmatprep.subr.bf16.mxu0 0
    %3474 = vmatpush1.bf16.msra.mxu0 0
    %3475 = vmatprep.subr.bf16.mxu0 0
    %3476 = vmatpush1.bf16.msra.mxu0 0
    %3477 = vmatprep.subr.bf16.mxu0 0
    %3478 = vmatpush1.bf16.msra.mxu0 0
    %3479 = vmatprep.subr.bf16.mxu0 0
    %3480 = vmatpush1.bf16.msra.mxu0 0
    %3481 = vmatprep.subr.bf16.mxu0 0
    %3482 = vmatpush1.bf16.msra.mxu0 0
    %3483 = vmatprep.subr.bf16.mxu0 0
    %3484 = vmatpush1.bf16.msra.mxu0 0
    %3485 = vmatprep.subr.bf16.mxu0 0
    %3486 = vmatpush1.bf16.msra.mxu0 0
    %3487 = vmatprep.subr.bf16.mxu0 0
    %3488 = vmatpush1.bf16.msra.mxu0 0
    %3489 = vmatprep.subr.bf16.mxu0 0
    %3490 = vmatpush1.bf16.msra.mxu0 0
    %3491 = vmatprep.subr.bf16.mxu0 0
    %3492 = vmatpush1.bf16.msra.mxu0 0
    %3493 = vmatprep.subr.bf16.mxu0 0
    %3494 = vmatpush1.bf16.msra.mxu0 0
    %3495 = vmatprep.subr.bf16.mxu0 0
    %3496 = vmatpush1.bf16.msra.mxu0 0
    %3497 = vmatprep.mubr.bf16.mxu0 0
    %3498 = vmatmul.mubr.bf16.gmra.mrb[0].mxu0 %v3463
    %v3499 = vpop.f32.mrb[0].mxu0
    %v3500 = vadd.f32 0.0, %v3499
    %v3501 = vpop.f32.mrb[0].mxu0
    %v3502 = vpop.f32.mrb[0].mxu0
    %v3503 = vpop.f32.mrb[0].mxu0
    %3504 = vdwg.mxu0
    %v3505 = vpack.c.bf16 %v3500, %v3500
    %v3506 = vld [vmem:[%s73] sm:$0xf]
    %v3507 = vld [vmem:[%s73 + $0x4] sm:$0xf]
    %v3508 = vld [vmem:[%s73 + $0x8] sm:$0xf]
    %v3509 = vld [vmem:[%s73 + $0xc] sm:$0xf]
    %v3510 = vld [vmem:[%s73 + $0x10] sm:$0xf]
    %v3511 = vld [vmem:[%s73 + $0x14] sm:$0xf]
    %v3512 = vld [vmem:[%s73 + $0x18] sm:$0xf]
    %v3513 = vld [vmem:[%s73 + $0x1c] sm:$0xf]
    %v3514 = vld [vmem:[%s75] sm:$0x1]
    %v3516 = vlaneseq
    %v3517 = vshrl.u32 %v3516, 7
    %v3518 = vsub.s32 0, %v3517
    %v3519 = vrot.slane %v3514, %v3518
    %v3529 = vunpack.c.l.b16 %v3506
    %v3530 = vunpack.c.l.b16 %v3507
    %v3531 = vunpack.c.l.b16 %v3508
    %v3532 = vunpack.c.l.b16 %v3509
    %v3533 = vunpack.c.l.b16 %v3510
    %v3534 = vunpack.c.l.b16 %v3511
    %v3535 = vunpack.c.l.b16 %v3512
    %v3536 = vunpack.c.l.b16 %v3513
    %v3537 = vpack.c.b16 %v3530, %v3529
    %v3538 = vpack.c.b16 %v3532, %v3531
    %v3539 = vpack.c.b16 %v3534, %v3533
    %v3540 = vpack.c.b16 %v3536, %v3535
    %v3546 = vsel %vm624, %v3505, 0
    %3548 = vmatprep.subr.bf16.mxu0 0
    %3549 = vmatpush1.bf16.msra.mxu0 %v3537
    %3550 = vmatprep.subr.bf16.mxu0 0
    %3551 = vmatpush1.bf16.msra.mxu0 %v3538
    %3552 = vmatprep.subr.bf16.mxu0 0
    %3553 = vmatpush1.bf16.msra.mxu0 %v3539
    %3554 = vmatprep.subr.bf16.mxu0 0
    %3555 = vmatpush1.bf16.msra.mxu0 %v3540
    %3556 = vmatprep.subr.bf16.mxu0 0
    %3557 = vmatpush1.bf16.msra.mxu0 0
    %3558 = vmatprep.subr.bf16.mxu0 0
    %3559 = vmatpush1.bf16.msra.mxu0 0
    %3560 = vmatprep.subr.bf16.mxu0 0
    %3561 = vmatpush1.bf16.msra.mxu0 0
    %3562 = vmatprep.subr.bf16.mxu0 0
    %3563 = vmatpush1.bf16.msra.mxu0 0
    %3564 = vmatprep.subr.bf16.mxu0 0
    %3565 = vmatpush1.bf16.msra.mxu0 0
    %3566 = vmatprep.subr.bf16.mxu0 0
    %3567 = vmatpush1.bf16.msra.mxu0 0
    %3568 = vmatprep.subr.bf16.mxu0 0
    %3569 = vmatpush1.bf16.msra.mxu0 0
    %3570 = vmatprep.subr.bf16.mxu0 0
    %3571 = vmatpush1.bf16.msra.mxu0 0
    %3572 = vmatprep.subr.bf16.mxu0 0
    %3573 = vmatpush1.bf16.msra.mxu0 0
    %3574 = vmatprep.subr.bf16.mxu0 0
    %3575 = vmatpush1.bf16.msra.mxu0 0
    %3576 = vmatprep.subr.bf16.mxu0 0
    %3577 = vmatpush1.bf16.msra.mxu0 0
    %3578 = vmatprep.subr.bf16.mxu0 0
    %3579 = vmatpush1.bf16.msra.mxu0 0
    %3580 = vmatprep.mubr.bf16.mxu0 0
    %3581 = vmatmul.mubr.bf16.gmra.mrb[0].mxu0 %v3546
    %v3582 = vpop.f32.mrb[0].mxu0
    %v3583 = vadd.f32 %v3519, %v3582
    %v3584 = vpop.f32.mrb[0].mxu0
    %v3585 = vpop.f32.mrb[0].mxu0
    %v3586 = vpop.f32.mrb[0].mxu0
    %3587 = vdwg.mxu0
    %vm3588 = vcmask 64512
    %3589 = vst.msk [vmem:[#allocation2] sm:$0xff] %vm3588, %v3583
    // Predicated region
    $region154: #{tfmamba_forward.1} parent=1 // pred_check
      _
    $region155: #{tfmamba_forward.1} parent=1 // pred_check_branch
      %3591 = sbr.rel (0) target = $region157
    $region156: #{tfmamba_forward.1} parent=1 // pred_region
      %s3593 = ssub.s32 128, 128
      %3594 = vsyncadd [#allocation3], %s3593
      %s3596 = sshll.u32 [#allocation2], 4
      %s3597 = int_to_ptr.vmem [resolvable:$true] %s3596
      %3599 = dma.vmem_to_hbm [thread:$0]  %s3597, 128, %s77, [#allocation3]
    $region157: #{tfmamba_forward.1} parent=1 // pred_fallthru
      _
    // Predicated region
    $region158: #{tfmamba_forward.1} parent=1 // pred_check
      _
    $region159: #{tfmamba_forward.1} parent=1 // pred_check_branch
      %3601 = sbr.rel (0) target = $region161
    $region160: #{tfmamba_forward.1} parent=1 // pred_region
      %3602 = dma.done [#allocation3], 128
    $region161: #{tfmamba_forward.1} parent=1 // pred_fallthru
      _
    %3603 = vsyncpa [#allocation3], 1

</llo_original>
